<compile_context>
chip_gen: v7x
topology: tpu7x:2x2x1
jax: 0.10.0
libtpu: 0.0.40
codegen_flags: <defaults>
</compile_context>

<pallas_src>
import jax
import jax.numpy as jnp
from jax import lax
from jax.experimental import pallas as pl
from jax.experimental.pallas import tpu as pltpu


# ---------------------------------------------------------------------------
# Fused decoder kernel
# ---------------------------------------------------------------------------
def _decoder_kernel(x_ref, wih1_ref, whh1_ref, b1_ref,
                    wih2_ref, whh2_ref, b2_ref,
                    o_ref, xp_ref):
    """Fused 2-layer LSTM decoder, single invocation (grid=()).

    x_ref   : (T*B, D)   flattened time-major input
    wih1_ref: (D, 4H)    whh1_ref: (H, 4H)   b1_ref: (1, 4H)   (b_ih + b_hh fused)
    wih2_ref: (H, 4O)    whh2_ref: (O, 4O)   b2_ref: (1, 4O)
    o_ref   : (T, B, O)  per-step outputs of layer 2 (the module's return value)
    xp_ref  : VMEM scratch (T, B, 4H) -- hoisted layer-1 input projection
    """
    T, B, O = o_ref.shape
    H = whh1_ref.shape[0]

    # Hoisted, time-parallel input projection for layer 1: one big MXU matmul
    # over the whole sequence instead of T tiny ones inside the recurrence.
    xp = jnp.dot(x_ref[...], wih1_ref[...],
                 preferred_element_type=jnp.float32) + b1_ref[...]
    xp_ref[...] = xp.reshape(T, B, 4 * H)

    def step(t, carry):
        h1, c1, h2, c2 = carry

        # ---- layer 1: only the recurrent matmul is on the critical path.
        gates1 = xp_ref[t] + jnp.dot(h1, whh1_ref[...],
                                     preferred_element_type=jnp.float32)
        # H == 128 -> these slices are whole-vreg, lane-aligned (free).
        i1 = jax.nn.sigmoid(gates1[:, 0 * H:1 * H])
        f1 = jax.nn.sigmoid(gates1[:, 1 * H:2 * H])
        g1 = jnp.tanh(gates1[:, 2 * H:3 * H])
        o1 = jax.nn.sigmoid(gates1[:, 3 * H:4 * H])
        c1n = f1 * c1 + i1 * g1
        h1n = o1 * jnp.tanh(c1n)

        # ---- layer 2 (hidden = O, typically 1): fused at the tail of the step.
        gates2 = jnp.dot(h1n, wih2_ref[...],
                         preferred_element_type=jnp.float32) + b2_ref[...]
        if O == 1:
            # (B,1) * (1,4) broadcast on the VPU -- no degenerate K=1 matmul.
            gates2 = gates2 + h2 * whh2_ref[...]
        else:
            gates2 = gates2 + jnp.dot(h2, whh2_ref[...],
                                      preferred_element_type=jnp.float32)
        sig2 = jax.nn.sigmoid(gates2)   # two full-width EUP passes instead of four
        tan2 = jnp.tanh(gates2)
        i2 = sig2[:, 0 * O:1 * O]
        f2 = sig2[:, 1 * O:2 * O]
        g2 = tan2[:, 2 * O:3 * O]
        o2 = sig2[:, 3 * O:4 * O]
        c2n = f2 * c2 + i2 * g2
        h2n = o2 * jnp.tanh(c2n)

        # VMEM store only; the HBM writeback of o_ref happens once at kernel end.
        o_ref[t] = h2n.astype(o_ref.dtype)
        return (h1n, c1n, h2n, c2n)

    init = (jnp.zeros((B, H), jnp.float32), jnp.zeros((B, H), jnp.float32),
            jnp.zeros((B, O), jnp.float32), jnp.zeros((B, O), jnp.float32))
    lax.fori_loop(0, T, step, init, unroll=True)


# ---------------------------------------------------------------------------
# Wrapper
# ---------------------------------------------------------------------------
def _prep_layer(p):
    w_ih = jnp.asarray(p["w_ih"], jnp.float32)
    w_hh = jnp.asarray(p["w_hh"], jnp.float32)
    b = jnp.asarray(p["b_ih"], jnp.float32) + jnp.asarray(p["b_hh"], jnp.float32)
    return w_ih.T, w_hh.T, b.reshape(1, -1)


@jax.jit
def decoder_forward(params, x):
    """x: (B, T, latent_size) batch_first, like the PyTorch module.
    Returns (B, T, output_size) -- the per-step outputs of the second LSTM."""
    B, T, _ = x.shape
    p1, p2 = params["lstm1"], params["lstm2"]
    H = p1["w_hh"].shape[1]
    O = p2["w_hh"].shape[1]

    wih1_t, whh1_t, b1 = _prep_layer(p1)
    wih2_t, whh2_t, b2 = _prep_layer(p2)

    # Time-major layout; pad batch to a multiple of 8 sublanes.
    Bp = ((B + 7) // 8) * 8
    x_tbd = jnp.transpose(x.astype(jnp.float32), (1, 0, 2))      # (T, B, D)
    if Bp != B:
        x_tbd = jnp.pad(x_tbd, ((0, 0), (0, Bp - B), (0, 0)))
    x_flat = x_tbd.reshape(T * Bp, x_tbd.shape[2])               # (T*Bp, D)

    # TODO(synk): if batch is ever scaled up on v7x, add a parallel batch grid
    # axis (or pl.core_map over the 2 TensorCores); at these sizes one TC is fine.
    out_tbo = pl.pallas_call(
        _decoder_kernel,
        out_shape=jax.ShapeDtypeStruct((T, Bp, O), jnp.float32),
        in_specs=[pl.BlockSpec(memory_space=pltpu.MemorySpace.VMEM)] * 7,
        out_specs=pl.BlockSpec(memory_space=pltpu.MemorySpace.VMEM),
        scratch_shapes=[pltpu.VMEM((T, Bp, 4 * H), jnp.float32)],
        compiler_params=pltpu.CompilerParams(
            vmem_limit_bytes=32 * 1024 * 1024),                  # safe on v5e/v6e/v7x
    )(x_flat, wih1_t, whh1_t, b1, wih2_t, whh2_t, b2)

    return jnp.transpose(out_tbo, (1, 0, 2))[:B]                 # (B, T, O)


# ---------------------------------------------------------------------------
# Parameter init (matches PyTorch nn.LSTM shapes / uniform(-1/sqrt(H), 1/sqrt(H)))
# ---------------------------------------------------------------------------
def init_decoder_params(key, latent_size=16, hidden_size=128, output_size=1):
    def layer(key, in_dim, hid):
        k = 1.0 / jnp.sqrt(jnp.float32(hid))
        ks = jax.random.split(key, 4)
        return dict(
            w_ih=jax.random.uniform(ks[0], (4 * hid, in_dim), jnp.float32, -k, k),
            w_hh=jax.random.uniform(ks[1], (4 * hid, hid), jnp.float32, -k, k),
            b_ih=jax.random.uniform(ks[2], (4 * hid,), jnp.float32, -k, k),
            b_hh=jax.random.uniform(ks[3], (4 * hid,), jnp.float32, -k, k),
        )

    k1, k2 = jax.random.split(key)
    return dict(
        lstm1=layer(k1, latent_size, hidden_size),
        lstm2=layer(k2, hidden_size, output_size),
    )


# ---------------------------------------------------------------------------
# Pure-JAX reference (PyTorch LSTM semantics) for a correctness check
# ---------------------------------------------------------------------------
def _lstm_ref(x_btd, w_ih, w_hh, b_ih, b_hh):
    B, _, _ = x_btd.shape
    H = w_hh.shape[1]

    def step(carry, x_t):
        h, c = carry
        g = x_t @ w_ih.T + h @ w_hh.T + b_ih + b_hh
        i = jax.nn.sigmoid(g[:, 0 * H:1 * H])
        f = jax.nn.sigmoid(g[:, 1 * H:2 * H])
        gg = jnp.tanh(g[:, 2 * H:3 * H])
        o = jax.nn.sigmoid(g[:, 3 * H:4 * H])
        c = f * c + i * gg
        h = o * jnp.tanh(c)
        return (h, c), h

    x_tbd = jnp.transpose(x_btd.astype(jnp.float32), (1, 0, 2))
    init = (jnp.zeros((B, H), jnp.float32), jnp.zeros((B, H), jnp.float32))
    _, ys = lax.scan(step, init, x_tbd)
    return jnp.transpose(ys, (1, 0, 2))


def decoder_reference(params, x):
    p1, p2 = params["lstm1"], params["lstm2"]
    h1 = _lstm_ref(x, p1["w_ih"], p1["w_hh"], p1["b_ih"], p1["b_hh"])
    return _lstm_ref(h1, p2["w_ih"], p2["w_hh"], p2["b_ih"], p2["b_hh"])


if __name__ == "__main__":
    key = jax.random.PRNGKey(0)
    k_param, k_x = jax.random.split(key)

    B, T = 4, 8
    LATENT, HIDDEN, OUT = 16, 128, 1   # module defaults: latent 16, hidden 128, out 1

    params = init_decoder_params(k_param, LATENT, HIDDEN, OUT)
    x = jax.random.normal(k_x, (B, T, LATENT), dtype=jnp.float32)

    y = decoder_forward(params, x)
    jax.block_until_ready(y)
    assert y.shape == (B, T, OUT), y.shape

    y_ref = decoder_reference(params, x)
    err = float(jnp.max(jnp.abs(y - y_ref)))
    assert err < 3e-2, f"mismatch vs pure-JAX reference: {err}"

    print("KERNEL_OK")
</pallas_src>

<mosaic_0001>
module attributes {stable_mosaic.version = 11 : i64} {
  func.func @_decoder_kernel(%arg0: memref<64x16xf32, #tpu.memory_space<vmem>>, %arg1: memref<16x512xf32, #tpu.memory_space<vmem>>, %arg2: memref<128x512xf32, #tpu.memory_space<vmem>>, %arg3: memref<1x512xf32, #tpu.memory_space<vmem>>, %arg4: memref<128x4xf32, #tpu.memory_space<vmem>>, %arg5: memref<1x4xf32, #tpu.memory_space<vmem>>, %arg6: memref<1x4xf32, #tpu.memory_space<vmem>>, %arg7: memref<8x8x1xf32, #tpu.memory_space<vmem>>, %arg8: memref<8x8x512xf32, #tpu.memory_space<vmem>>) attributes {dimension_semantics = [], scalar_prefetch = 0 : i64, scratch_operands = 1 : i64, tpu.core_type = #tpu.core_type<tc>} {
    %c0 = arith.constant 0 : index
    %c0_0 = arith.constant 0 : index
    %0 = vector.load %arg0[%c0, %c0_0] : memref<64x16xf32, #tpu.memory_space<vmem>>, vector<64x16xf32>
    %c0_1 = arith.constant 0 : index
    %c0_2 = arith.constant 0 : index
    %1 = vector.load %arg1[%c0_1, %c0_2] : memref<16x512xf32, #tpu.memory_space<vmem>>, vector<16x512xf32>
    %cst = arith.constant dense<0.000000e+00> : vector<64x512xf32>
    %2 = tpu.matmul %0, %1, %cst {dimension_numbers = #tpu.dot_dimension_numbers<[1], [0], [0], [1], [0, 0, 1, 1], [], []>} : vector<64x16xf32>, vector<16x512xf32>, vector<64x512xf32> -> vector<64x512xf32>
    %c0_3 = arith.constant 0 : index
    %c0_4 = arith.constant 0 : index
    %3 = vector.load %arg3[%c0_3, %c0_4] : memref<1x512xf32, #tpu.memory_space<vmem>>, vector<1x512xf32>
    %4 = vector.broadcast %3 : vector<1x512xf32> to vector<64x512xf32>
    %5 = arith.addf %2, %4 : vector<64x512xf32>
    %6 = vector.shape_cast %5 : vector<64x512xf32> to vector<8x8x512xf32>
    %c0_5 = arith.constant 0 : index
    %c0_6 = arith.constant 0 : index
    %c0_7 = arith.constant 0 : index
    %7 = vector.load %arg8[%c0_5, %c0_6, %c0_7] : memref<8x8x512xf32, #tpu.memory_space<vmem>>, vector<8x8x512xf32>
    tpu.vector_store %arg8[%c0_5, %c0_6, %c0_7], %6 {strides = array<i32>} : memref<8x8x512xf32, #tpu.memory_space<vmem>>, vector<8x8x512xf32>,
    %cst_8 = arith.constant 0.000000e+00 : f32
    %8 = vector.broadcast %cst_8 : f32 to vector<8x128xf32>
    %cst_9 = arith.constant 0.000000e+00 : f32
    %9 = vector.broadcast %cst_9 : f32 to vector<8x128xf32>
    %cst_10 = arith.constant 0.000000e+00 : f32
    %10 = vector.broadcast %cst_10 : f32 to vector<8x1xf32>
    %cst_11 = arith.constant 0.000000e+00 : f32
    %11 = vector.broadcast %cst_11 : f32 to vector<8x1xf32>
    %c0_i32 = arith.constant 0 : i32
    %12 = arith.index_cast %c0_i32 : i32 to index
    %c0_12 = arith.constant 0 : index
    %c0_13 = arith.constant 0 : index
    %13 = vector.load %arg8[%12, %c0_12, %c0_13] : memref<8x8x512xf32, #tpu.memory_space<vmem>>, vector<1x8x512xf32>
    %14 = vector.shape_cast %13 : vector<1x8x512xf32> to vector<8x512xf32>
    %c0_14 = arith.constant 0 : index
    %c0_15 = arith.constant 0 : index
    %15 = vector.load %arg2[%c0_14, %c0_15] : memref<128x512xf32, #tpu.memory_space<vmem>>, vector<128x512xf32>
    %cst_16 = arith.constant dense<0.000000e+00> : vector<8x512xf32>
    %16 = tpu.matmul %8, %15, %cst_16 {dimension_numbers = #tpu.dot_dimension_numbers<[1], [0], [0], [1], [0, 0, 1, 1], [], []>} : vector<8x128xf32>, vector<128x512xf32>, vector<8x512xf32> -> vector<8x512xf32>
    %17 = arith.addf %14, %16 : vector<8x512xf32>
    %18 = vector.extract_strided_slice %17 {offsets = [0, 0], sizes = [8, 128], strides = [1, 1]} : vector<8x512xf32> to vector<8x128xf32>
    %19 = arith.negf %18 : vector<8x128xf32>
    %20 = math.exp %19 : vector<8x128xf32>
    %cst_17 = arith.constant 1.000000e+00 : f32
    %21 = vector.broadcast %cst_17 : f32 to vector<8x128xf32>
    %22 = arith.addf %21, %20 : vector<8x128xf32>
    %23 = arith.divf %21, %22 : vector<8x128xf32>
    %24 = vector.extract_strided_slice %17 {offsets = [0, 128], sizes = [8, 128], strides = [1, 1]} : vector<8x512xf32> to vector<8x128xf32>
    %25 = arith.negf %24 : vector<8x128xf32>
    %26 = math.exp %25 : vector<8x128xf32>
    %cst_18 = arith.constant 1.000000e+00 : f32
    %27 = vector.broadcast %cst_18 : f32 to vector<8x128xf32>
    %28 = arith.addf %27, %26 : vector<8x128xf32>
    %29 = arith.divf %27, %28 : vector<8x128xf32>
    %30 = vector.extract_strided_slice %17 {offsets = [0, 256], sizes = [8, 128], strides = [1, 1]} : vector<8x512xf32> to vector<8x128xf32>
    %31 = math.tanh %30 : vector<8x128xf32>
    %32 = vector.extract_strided_slice %17 {offsets = [0, 384], sizes = [8, 128], strides = [1, 1]} : vector<8x512xf32> to vector<8x128xf32>
    %33 = arith.negf %32 : vector<8x128xf32>
    %34 = math.exp %33 : vector<8x128xf32>
    %cst_19 = arith.constant 1.000000e+00 : f32
    %35 = vector.broadcast %cst_19 : f32 to vector<8x128xf32>
    %36 = arith.addf %35, %34 : vector<8x128xf32>
    %37 = arith.divf %35, %36 : vector<8x128xf32>
    %38 = arith.mulf %29, %9 : vector<8x128xf32>
    %39 = arith.mulf %23, %31 : vector<8x128xf32>
    %40 = arith.addf %38, %39 : vector<8x128xf32>
    %41 = math.tanh %40 : vector<8x128xf32>
    %42 = arith.mulf %37, %41 : vector<8x128xf32>
    %c0_20 = arith.constant 0 : index
    %c0_21 = arith.constant 0 : index
    %43 = vector.load %arg4[%c0_20, %c0_21] : memref<128x4xf32, #tpu.memory_space<vmem>>, vector<128x4xf32>
    %cst_22 = arith.constant dense<0.000000e+00> : vector<8x4xf32>
    %44 = tpu.matmul %42, %43, %cst_22 {dimension_numbers = #tpu.dot_dimension_numbers<[1], [0], [0], [1], [0, 0, 1, 1], [], []>} : vector<8x128xf32>, vector<128x4xf32>, vector<8x4xf32> -> vector<8x4xf32>
    %c0_23 = arith.constant 0 : index
    %c0_24 = arith.constant 0 : index
    %45 = vector.load %arg6[%c0_23, %c0_24] : memref<1x4xf32, #tpu.memory_space<vmem>>, vector<1x4xf32>
    %46 = vector.broadcast %45 : vector<1x4xf32> to vector<8x4xf32>
    %47 = arith.addf %44, %46 : vector<8x4xf32>
    %c0_25 = arith.constant 0 : index
    %c0_26 = arith.constant 0 : index
    %48 = vector.load %arg5[%c0_25, %c0_26] : memref<1x4xf32, #tpu.memory_space<vmem>>, vector<1x4xf32>
    %49 = vector.broadcast %10 : vector<8x1xf32> to vector<8x4xf32>
    %50 = vector.broadcast %48 : vector<1x4xf32> to vector<8x4xf32>
    %51 = arith.mulf %49, %50 : vector<8x4xf32>
    %52 = arith.addf %47, %51 : vector<8x4xf32>
    %53 = arith.negf %52 : vector<8x4xf32>
    %54 = math.exp %53 : vector<8x4xf32>
    %cst_27 = arith.constant 1.000000e+00 : f32
    %55 = vector.broadcast %cst_27 : f32 to vector<8x4xf32>
    %56 = arith.addf %55, %54 : vector<8x4xf32>
    %57 = arith.divf %55, %56 : vector<8x4xf32>
    %58 = math.tanh %52 : vector<8x4xf32>
    %59 = vector.extract_strided_slice %57 {offsets = [0, 0], sizes = [8, 1], strides = [1, 1]} : vector<8x4xf32> to vector<8x1xf32>
    %60 = vector.extract_strided_slice %57 {offsets = [0, 1], sizes = [8, 1], strides = [1, 1]} : vector<8x4xf32> to vector<8x1xf32>
    %61 = vector.extract_strided_slice %58 {offsets = [0, 2], sizes = [8, 1], strides = [1, 1]} : vector<8x4xf32> to vector<8x1xf32>
    %62 = vector.extract_strided_slice %57 {offsets = [0, 3], sizes = [8, 1], strides = [1, 1]} : vector<8x4xf32> to vector<8x1xf32>
    %63 = arith.mulf %60, %11 : vector<8x1xf32>
    %64 = arith.mulf %59, %61 : vector<8x1xf32>
    %65 = arith.addf %63, %64 : vector<8x1xf32>
    %66 = math.tanh %65 : vector<8x1xf32>
    %67 = arith.mulf %62, %66 : vector<8x1xf32>
    %68 = arith.index_cast %c0_i32 : i32 to index
    %c0_28 = arith.constant 0 : index
    %c0_29 = arith.constant 0 : index
    %69 = vector.load %arg7[%68, %c0_28, %c0_29] : memref<8x8x1xf32, #tpu.memory_space<vmem>>, vector<1x8x1xf32>
    %70 = vector.shape_cast %69 : vector<1x8x1xf32> to vector<8x1xf32>
    %71 = vector.shape_cast %67 : vector<8x1xf32> to vector<1x8x1xf32>
    tpu.vector_store %arg7[%68, %c0_28, %c0_29], %71 {strides = array<i32>} : memref<8x8x1xf32, #tpu.memory_space<vmem>>, vector<1x8x1xf32>,
    %c1_i32 = arith.constant 1 : i32
    %72 = arith.index_cast %c1_i32 : i32 to index
    %c0_30 = arith.constant 0 : index
    %c0_31 = arith.constant 0 : index
    %73 = vector.load %arg8[%72, %c0_30, %c0_31] : memref<8x8x512xf32, #tpu.memory_space<vmem>>, vector<1x8x512xf32>
    %74 = vector.shape_cast %73 : vector<1x8x512xf32> to vector<8x512xf32>
    %c0_32 = arith.constant 0 : index
    %c0_33 = arith.constant 0 : index
    %75 = vector.load %arg2[%c0_32, %c0_33] : memref<128x512xf32, #tpu.memory_space<vmem>>, vector<128x512xf32>
    %cst_34 = arith.constant dense<0.000000e+00> : vector<8x512xf32>
    %76 = tpu.matmul %42, %75, %cst_34 {dimension_numbers = #tpu.dot_dimension_numbers<[1], [0], [0], [1], [0, 0, 1, 1], [], []>} : vector<8x128xf32>, vector<128x512xf32>, vector<8x512xf32> -> vector<8x512xf32>
    %77 = arith.addf %74, %76 : vector<8x512xf32>
    %78 = vector.extract_strided_slice %77 {offsets = [0, 0], sizes = [8, 128], strides = [1, 1]} : vector<8x512xf32> to vector<8x128xf32>
    %79 = arith.negf %78 : vector<8x128xf32>
    %80 = math.exp %79 : vector<8x128xf32>
    %cst_35 = arith.constant 1.000000e+00 : f32
    %81 = vector.broadcast %cst_35 : f32 to vector<8x128xf32>
    %82 = arith.addf %81, %80 : vector<8x128xf32>
    %83 = arith.divf %81, %82 : vector<8x128xf32>
    %84 = vector.extract_strided_slice %77 {offsets = [0, 128], sizes = [8, 128], strides = [1, 1]} : vector<8x512xf32> to vector<8x128xf32>
    %85 = arith.negf %84 : vector<8x128xf32>
    %86 = math.exp %85 : vector<8x128xf32>
    %cst_36 = arith.constant 1.000000e+00 : f32
    %87 = vector.broadcast %cst_36 : f32 to vector<8x128xf32>
    %88 = arith.addf %87, %86 : vector<8x128xf32>
    %89 = arith.divf %87, %88 : vector<8x128xf32>
    %90 = vector.extract_strided_slice %77 {offsets = [0, 256], sizes = [8, 128], strides = [1, 1]} : vector<8x512xf32> to vector<8x128xf32>
    %91 = math.tanh %90 : vector<8x128xf32>
    %92 = vector.extract_strided_slice %77 {offsets = [0, 384], sizes = [8, 128], strides = [1, 1]} : vector<8x512xf32> to vector<8x128xf32>
    %93 = arith.negf %92 : vector<8x128xf32>
    %94 = math.exp %93 : vector<8x128xf32>
    %cst_37 = arith.constant 1.000000e+00 : f32
    %95 = vector.broadcast %cst_37 : f32 to vector<8x128xf32>
    %96 = arith.addf %95, %94 : vector<8x128xf32>
    %97 = arith.divf %95, %96 : vector<8x128xf32>
    %98 = arith.mulf %89, %40 : vector<8x128xf32>
    %99 = arith.mulf %83, %91 : vector<8x128xf32>
    %100 = arith.addf %98, %99 : vector<8x128xf32>
    %101 = math.tanh %100 : vector<8x128xf32>
    %102 = arith.mulf %97, %101 : vector<8x128xf32>
    %c0_38 = arith.constant 0 : index
    %c0_39 = arith.constant 0 : index
    %103 = vector.load %arg4[%c0_38, %c0_39] : memref<128x4xf32, #tpu.memory_space<vmem>>, vector<128x4xf32>
    %cst_40 = arith.constant dense<0.000000e+00> : vector<8x4xf32>
    %104 = tpu.matmul %102, %103, %cst_40 {dimension_numbers = #tpu.dot_dimension_numbers<[1], [0], [0], [1], [0, 0, 1, 1], [], []>} : vector<8x128xf32>, vector<128x4xf32>, vector<8x4xf32> -> vector<8x4xf32>
    %c0_41 = arith.constant 0 : index
    %c0_42 = arith.constant 0 : index
    %105 = vector.load %arg6[%c0_41, %c0_42] : memref<1x4xf32, #tpu.memory_space<vmem>>, vector<1x4xf32>
    %106 = vector.broadcast %105 : vector<1x4xf32> to vector<8x4xf32>
    %107 = arith.addf %104, %106 : vector<8x4xf32>
    %c0_43 = arith.constant 0 : index
    %c0_44 = arith.constant 0 : index
    %108 = vector.load %arg5[%c0_43, %c0_44] : memref<1x4xf32, #tpu.memory_space<vmem>>, vector<1x4xf32>
    %109 = vector.broadcast %67 : vector<8x1xf32> to vector<8x4xf32>
    %110 = vector.broadcast %108 : vector<1x4xf32> to vector<8x4xf32>
    %111 = arith.mulf %109, %110 : vector<8x4xf32>
    %112 = arith.addf %107, %111 : vector<8x4xf32>
    %113 = arith.negf %112 : vector<8x4xf32>
    %114 = math.exp %113 : vector<8x4xf32>
    %cst_45 = arith.constant 1.000000e+00 : f32
    %115 = vector.broadcast %cst_45 : f32 to vector<8x4xf32>
    %116 = arith.addf %115, %114 : vector<8x4xf32>
    %117 = arith.divf %115, %116 : vector<8x4xf32>
    %118 = math.tanh %112 : vector<8x4xf32>
    %119 = vector.extract_strided_slice %117 {offsets = [0, 0], sizes = [8, 1], strides = [1, 1]} : vector<8x4xf32> to vector<8x1xf32>
    %120 = vector.extract_strided_slice %117 {offsets = [0, 1], sizes = [8, 1], strides = [1, 1]} : vector<8x4xf32> to vector<8x1xf32>
    %121 = vector.extract_strided_slice %118 {offsets = [0, 2], sizes = [8, 1], strides = [1, 1]} : vector<8x4xf32> to vector<8x1xf32>
    %122 = vector.extract_strided_slice %117 {offsets = [0, 3], sizes = [8, 1], strides = [1, 1]} : vector<8x4xf32> to vector<8x1xf32>
    %123 = arith.mulf %120, %65 : vector<8x1xf32>
    %124 = arith.mulf %119, %121 : vector<8x1xf32>
    %125 = arith.addf %123, %124 : vector<8x1xf32>
    %126 = math.tanh %125 : vector<8x1xf32>
    %127 = arith.mulf %122, %126 : vector<8x1xf32>
    %128 = arith.index_cast %c1_i32 : i32 to index
    %c0_46 = arith.constant 0 : index
    %c0_47 = arith.constant 0 : index
    %129 = vector.load %arg7[%128, %c0_46, %c0_47] : memref<8x8x1xf32, #tpu.memory_space<vmem>>, vector<1x8x1xf32>
    %130 = vector.shape_cast %129 : vector<1x8x1xf32> to vector<8x1xf32>
    %131 = vector.shape_cast %127 : vector<8x1xf32> to vector<1x8x1xf32>
    tpu.vector_store %arg7[%128, %c0_46, %c0_47], %131 {strides = array<i32>} : memref<8x8x1xf32, #tpu.memory_space<vmem>>, vector<1x8x1xf32>,
    %c2_i32 = arith.constant 2 : i32
    %132 = arith.index_cast %c2_i32 : i32 to index
    %c0_48 = arith.constant 0 : index
    %c0_49 = arith.constant 0 : index
    %133 = vector.load %arg8[%132, %c0_48, %c0_49] : memref<8x8x512xf32, #tpu.memory_space<vmem>>, vector<1x8x512xf32>
    %134 = vector.shape_cast %133 : vector<1x8x512xf32> to vector<8x512xf32>
    %c0_50 = arith.constant 0 : index
    %c0_51 = arith.constant 0 : index
    %135 = vector.load %arg2[%c0_50, %c0_51] : memref<128x512xf32, #tpu.memory_space<vmem>>, vector<128x512xf32>
    %cst_52 = arith.constant dense<0.000000e+00> : vector<8x512xf32>
    %136 = tpu.matmul %102, %135, %cst_52 {dimension_numbers = #tpu.dot_dimension_numbers<[1], [0], [0], [1], [0, 0, 1, 1], [], []>} : vector<8x128xf32>, vector<128x512xf32>, vector<8x512xf32> -> vector<8x512xf32>
    %137 = arith.addf %134, %136 : vector<8x512xf32>
    %138 = vector.extract_strided_slice %137 {offsets = [0, 0], sizes = [8, 128], strides = [1, 1]} : vector<8x512xf32> to vector<8x128xf32>
    %139 = arith.negf %138 : vector<8x128xf32>
    %140 = math.exp %139 : vector<8x128xf32>
    %cst_53 = arith.constant 1.000000e+00 : f32
    %141 = vector.broadcast %cst_53 : f32 to vector<8x128xf32>
    %142 = arith.addf %141, %140 : vector<8x128xf32>
    %143 = arith.divf %141, %142 : vector<8x128xf32>
    %144 = vector.extract_strided_slice %137 {offsets = [0, 128], sizes = [8, 128], strides = [1, 1]} : vector<8x512xf32> to vector<8x128xf32>
    %145 = arith.negf %144 : vector<8x128xf32>
    %146 = math.exp %145 : vector<8x128xf32>
    %cst_54 = arith.constant 1.000000e+00 : f32
    %147 = vector.broadcast %cst_54 : f32 to vector<8x128xf32>
    %148 = arith.addf %147, %146 : vector<8x128xf32>
    %149 = arith.divf %147, %148 : vector<8x128xf32>
    %150 = vector.extract_strided_slice %137 {offsets = [0, 256], sizes = [8, 128], strides = [1, 1]} : vector<8x512xf32> to vector<8x128xf32>
    %151 = math.tanh %150 : vector<8x128xf32>
    %152 = vector.extract_strided_slice %137 {offsets = [0, 384], sizes = [8, 128], strides = [1, 1]} : vector<8x512xf32> to vector<8x128xf32>
    %153 = arith.negf %152 : vector<8x128xf32>
    %154 = math.exp %153 : vector<8x128xf32>
    %cst_55 = arith.constant 1.000000e+00 : f32
    %155 = vector.broadcast %cst_55 : f32 to vector<8x128xf32>
    %156 = arith.addf %155, %154 : vector<8x128xf32>
    %157 = arith.divf %155, %156 : vector<8x128xf32>
    %158 = arith.mulf %149, %100 : vector<8x128xf32>
    %159 = arith.mulf %143, %151 : vector<8x128xf32>
    %160 = arith.addf %158, %159 : vector<8x128xf32>
    %161 = math.tanh %160 : vector<8x128xf32>
    %162 = arith.mulf %157, %161 : vector<8x128xf32>
    %c0_56 = arith.constant 0 : index
    %c0_57 = arith.constant 0 : index
    %163 = vector.load %arg4[%c0_56, %c0_57] : memref<128x4xf32, #tpu.memory_space<vmem>>, vector<128x4xf32>
    %cst_58 = arith.constant dense<0.000000e+00> : vector<8x4xf32>
    %164 = tpu.matmul %162, %163, %cst_58 {dimension_numbers = #tpu.dot_dimension_numbers<[1], [0], [0], [1], [0, 0, 1, 1], [], []>} : vector<8x128xf32>, vector<128x4xf32>, vector<8x4xf32> -> vector<8x4xf32>
    %c0_59 = arith.constant 0 : index
    %c0_60 = arith.constant 0 : index
    %165 = vector.load %arg6[%c0_59, %c0_60] : memref<1x4xf32, #tpu.memory_space<vmem>>, vector<1x4xf32>
    %166 = vector.broadcast %165 : vector<1x4xf32> to vector<8x4xf32>
    %167 = arith.addf %164, %166 : vector<8x4xf32>
    %c0_61 = arith.constant 0 : index
    %c0_62 = arith.constant 0 : index
    %168 = vector.load %arg5[%c0_61, %c0_62] : memref<1x4xf32, #tpu.memory_space<vmem>>, vector<1x4xf32>
    %169 = vector.broadcast %127 : vector<8x1xf32> to vector<8x4xf32>
    %170 = vector.broadcast %168 : vector<1x4xf32> to vector<8x4xf32>
    %171 = arith.mulf %169, %170 : vector<8x4xf32>
    %172 = arith.addf %167, %171 : vector<8x4xf32>
    %173 = arith.negf %172 : vector<8x4xf32>
    %174 = math.exp %173 : vector<8x4xf32>
    %cst_63 = arith.constant 1.000000e+00 : f32
    %175 = vector.broadcast %cst_63 : f32 to vector<8x4xf32>
    %176 = arith.addf %175, %174 : vector<8x4xf32>
    %177 = arith.divf %175, %176 : vector<8x4xf32>
    %178 = math.tanh %172 : vector<8x4xf32>
    %179 = vector.extract_strided_slice %177 {offsets = [0, 0], sizes = [8, 1], strides = [1, 1]} : vector<8x4xf32> to vector<8x1xf32>
    %180 = vector.extract_strided_slice %177 {offsets = [0, 1], sizes = [8, 1], strides = [1, 1]} : vector<8x4xf32> to vector<8x1xf32>
    %181 = vector.extract_strided_slice %178 {offsets = [0, 2], sizes = [8, 1], strides = [1, 1]} : vector<8x4xf32> to vector<8x1xf32>
    %182 = vector.extract_strided_slice %177 {offsets = [0, 3], sizes = [8, 1], strides = [1, 1]} : vector<8x4xf32> to vector<8x1xf32>
    %183 = arith.mulf %180, %125 : vector<8x1xf32>
    %184 = arith.mulf %179, %181 : vector<8x1xf32>
    %185 = arith.addf %183, %184 : vector<8x1xf32>
    %186 = math.tanh %185 : vector<8x1xf32>
    %187 = arith.mulf %182, %186 : vector<8x1xf32>
    %188 = arith.index_cast %c2_i32 : i32 to index
    %c0_64 = arith.constant 0 : index
    %c0_65 = arith.constant 0 : index
    %189 = vector.load %arg7[%188, %c0_64, %c0_65] : memref<8x8x1xf32, #tpu.memory_space<vmem>>, vector<1x8x1xf32>
    %190 = vector.shape_cast %189 : vector<1x8x1xf32> to vector<8x1xf32>
    %191 = vector.shape_cast %187 : vector<8x1xf32> to vector<1x8x1xf32>
    tpu.vector_store %arg7[%188, %c0_64, %c0_65], %191 {strides = array<i32>} : memref<8x8x1xf32, #tpu.memory_space<vmem>>, vector<1x8x1xf32>,
    %c3_i32 = arith.constant 3 : i32
    %192 = arith.index_cast %c3_i32 : i32 to index
    %c0_66 = arith.constant 0 : index
    %c0_67 = arith.constant 0 : index
    %193 = vector.load %arg8[%192, %c0_66, %c0_67] : memref<8x8x512xf32, #tpu.memory_space<vmem>>, vector<1x8x512xf32>
    %194 = vector.shape_cast %193 : vector<1x8x512xf32> to vector<8x512xf32>
    %c0_68 = arith.constant 0 : index
    %c0_69 = arith.constant 0 : index
    %195 = vector.load %arg2[%c0_68, %c0_69] : memref<128x512xf32, #tpu.memory_space<vmem>>, vector<128x512xf32>
    %cst_70 = arith.constant dense<0.000000e+00> : vector<8x512xf32>
    %196 = tpu.matmul %162, %195, %cst_70 {dimension_numbers = #tpu.dot_dimension_numbers<[1], [0], [0], [1], [0, 0, 1, 1], [], []>} : vector<8x128xf32>, vector<128x512xf32>, vector<8x512xf32> -> vector<8x512xf32>
    %197 = arith.addf %194, %196 : vector<8x512xf32>
    %198 = vector.extract_strided_slice %197 {offsets = [0, 0], sizes = [8, 128], strides = [1, 1]} : vector<8x512xf32> to vector<8x128xf32>
    %199 = arith.negf %198 : vector<8x128xf32>
    %200 = math.exp %199 : vector<8x128xf32>
    %cst_71 = arith.constant 1.000000e+00 : f32
    %201 = vector.broadcast %cst_71 : f32 to vector<8x128xf32>
    %202 = arith.addf %201, %200 : vector<8x128xf32>
    %203 = arith.divf %201, %202 : vector<8x128xf32>
    %204 = vector.extract_strided_slice %197 {offsets = [0, 128], sizes = [8, 128], strides = [1, 1]} : vector<8x512xf32> to vector<8x128xf32>
    %205 = arith.negf %204 : vector<8x128xf32>
    %206 = math.exp %205 : vector<8x128xf32>
    %cst_72 = arith.constant 1.000000e+00 : f32
    %207 = vector.broadcast %cst_72 : f32 to vector<8x128xf32>
    %208 = arith.addf %207, %206 : vector<8x128xf32>
    %209 = arith.divf %207, %208 : vector<8x128xf32>
    %210 = vector.extract_strided_slice %197 {offsets = [0, 256], sizes = [8, 128], strides = [1, 1]} : vector<8x512xf32> to vector<8x128xf32>
    %211 = math.tanh %210 : vector<8x128xf32>
    %212 = vector.extract_strided_slice %197 {offsets = [0, 384], sizes = [8, 128], strides = [1, 1]} : vector<8x512xf32> to vector<8x128xf32>
    %213 = arith.negf %212 : vector<8x128xf32>
    %214 = math.exp %213 : vector<8x128xf32>
    %cst_73 = arith.constant 1.000000e+00 : f32
    %215 = vector.broadcast %cst_73 : f32 to vector<8x128xf32>
    %216 = arith.addf %215, %214 : vector<8x128xf32>
    %217 = arith.divf %215, %216 : vector<8x128xf32>
    %218 = arith.mulf %209, %160 : vector<8x128xf32>
    %219 = arith.mulf %203, %211 : vector<8x128xf32>
    %220 = arith.addf %218, %219 : vector<8x128xf32>
    %221 = math.tanh %220 : vector<8x128xf32>
    %222 = arith.mulf %217, %221 : vector<8x128xf32>
    %c0_74 = arith.constant 0 : index
    %c0_75 = arith.constant 0 : index
    %223 = vector.load %arg4[%c0_74, %c0_75] : memref<128x4xf32, #tpu.memory_space<vmem>>, vector<128x4xf32>
    %cst_76 = arith.constant dense<0.000000e+00> : vector<8x4xf32>
    %224 = tpu.matmul %222, %223, %cst_76 {dimension_numbers = #tpu.dot_dimension_numbers<[1], [0], [0], [1], [0, 0, 1, 1], [], []>} : vector<8x128xf32>, vector<128x4xf32>, vector<8x4xf32> -> vector<8x4xf32>
    %c0_77 = arith.constant 0 : index
    %c0_78 = arith.constant 0 : index
    %225 = vector.load %arg6[%c0_77, %c0_78] : memref<1x4xf32, #tpu.memory_space<vmem>>, vector<1x4xf32>
    %226 = vector.broadcast %225 : vector<1x4xf32> to vector<8x4xf32>
    %227 = arith.addf %224, %226 : vector<8x4xf32>
    %c0_79 = arith.constant 0 : index
    %c0_80 = arith.constant 0 : index
    %228 = vector.load %arg5[%c0_79, %c0_80] : memref<1x4xf32, #tpu.memory_space<vmem>>, vector<1x4xf32>
    %229 = vector.broadcast %187 : vector<8x1xf32> to vector<8x4xf32>
    %230 = vector.broadcast %228 : vector<1x4xf32> to vector<8x4xf32>
    %231 = arith.mulf %229, %230 : vector<8x4xf32>
    %232 = arith.addf %227, %231 : vector<8x4xf32>
    %233 = arith.negf %232 : vector<8x4xf32>
    %234 = math.exp %233 : vector<8x4xf32>
    %cst_81 = arith.constant 1.000000e+00 : f32
    %235 = vector.broadcast %cst_81 : f32 to vector<8x4xf32>
    %236 = arith.addf %235, %234 : vector<8x4xf32>
    %237 = arith.divf %235, %236 : vector<8x4xf32>
    %238 = math.tanh %232 : vector<8x4xf32>
    %239 = vector.extract_strided_slice %237 {offsets = [0, 0], sizes = [8, 1], strides = [1, 1]} : vector<8x4xf32> to vector<8x1xf32>
    %240 = vector.extract_strided_slice %237 {offsets = [0, 1], sizes = [8, 1], strides = [1, 1]} : vector<8x4xf32> to vector<8x1xf32>
    %241 = vector.extract_strided_slice %238 {offsets = [0, 2], sizes = [8, 1], strides = [1, 1]} : vector<8x4xf32> to vector<8x1xf32>
    %242 = vector.extract_strided_slice %237 {offsets = [0, 3], sizes = [8, 1], strides = [1, 1]} : vector<8x4xf32> to vector<8x1xf32>
    %243 = arith.mulf %240, %185 : vector<8x1xf32>
    %244 = arith.mulf %239, %241 : vector<8x1xf32>
    %245 = arith.addf %243, %244 : vector<8x1xf32>
    %246 = math.tanh %245 : vector<8x1xf32>
    %247 = arith.mulf %242, %246 : vector<8x1xf32>
    %248 = arith.index_cast %c3_i32 : i32 to index
    %c0_82 = arith.constant 0 : index
    %c0_83 = arith.constant 0 : index
    %249 = vector.load %arg7[%248, %c0_82, %c0_83] : memref<8x8x1xf32, #tpu.memory_space<vmem>>, vector<1x8x1xf32>
    %250 = vector.shape_cast %249 : vector<1x8x1xf32> to vector<8x1xf32>
    %251 = vector.shape_cast %247 : vector<8x1xf32> to vector<1x8x1xf32>
    tpu.vector_store %arg7[%248, %c0_82, %c0_83], %251 {strides = array<i32>} : memref<8x8x1xf32, #tpu.memory_space<vmem>>, vector<1x8x1xf32>,
    %c4_i32 = arith.constant 4 : i32
    %252 = arith.index_cast %c4_i32 : i32 to index
    %c0_84 = arith.constant 0 : index
    %c0_85 = arith.constant 0 : index
    %253 = vector.load %arg8[%252, %c0_84, %c0_85] : memref<8x8x512xf32, #tpu.memory_space<vmem>>, vector<1x8x512xf32>
    %254 = vector.shape_cast %253 : vector<1x8x512xf32> to vector<8x512xf32>
    %c0_86 = arith.constant 0 : index
    %c0_87 = arith.constant 0 : index
    %255 = vector.load %arg2[%c0_86, %c0_87] : memref<128x512xf32, #tpu.memory_space<vmem>>, vector<128x512xf32>
    %cst_88 = arith.constant dense<0.000000e+00> : vector<8x512xf32>
    %256 = tpu.matmul %222, %255, %cst_88 {dimension_numbers = #tpu.dot_dimension_numbers<[1], [0], [0], [1], [0, 0, 1, 1], [], []>} : vector<8x128xf32>, vector<128x512xf32>, vector<8x512xf32> -> vector<8x512xf32>
    %257 = arith.addf %254, %256 : vector<8x512xf32>
    %258 = vector.extract_strided_slice %257 {offsets = [0, 0], sizes = [8, 128], strides = [1, 1]} : vector<8x512xf32> to vector<8x128xf32>
    %259 = arith.negf %258 : vector<8x128xf32>
    %260 = math.exp %259 : vector<8x128xf32>
    %cst_89 = arith.constant 1.000000e+00 : f32
    %261 = vector.broadcast %cst_89 : f32 to vector<8x128xf32>
    %262 = arith.addf %261, %260 : vector<8x128xf32>
    %263 = arith.divf %261, %262 : vector<8x128xf32>
    %264 = vector.extract_strided_slice %257 {offsets = [0, 128], sizes = [8, 128], strides = [1, 1]} : vector<8x512xf32> to vector<8x128xf32>
    %265 = arith.negf %264 : vector<8x128xf32>
    %266 = math.exp %265 : vector<8x128xf32>
    %cst_90 = arith.constant 1.000000e+00 : f32
    %267 = vector.broadcast %cst_90 : f32 to vector<8x128xf32>
    %268 = arith.addf %267, %266 : vector<8x128xf32>
    %269 = arith.divf %267, %268 : vector<8x128xf32>
    %270 = vector.extract_strided_slice %257 {offsets = [0, 256], sizes = [8, 128], strides = [1, 1]} : vector<8x512xf32> to vector<8x128xf32>
    %271 = math.tanh %270 : vector<8x128xf32>
    %272 = vector.extract_strided_slice %257 {offsets = [0, 384], sizes = [8, 128], strides = [1, 1]} : vector<8x512xf32> to vector<8x128xf32>
    %273 = arith.negf %272 : vector<8x128xf32>
    %274 = math.exp %273 : vector<8x128xf32>
    %cst_91 = arith.constant 1.000000e+00 : f32
    %275 = vector.broadcast %cst_91 : f32 to vector<8x128xf32>
    %276 = arith.addf %275, %274 : vector<8x128xf32>
    %277 = arith.divf %275, %276 : vector<8x128xf32>
    %278 = arith.mulf %269, %220 : vector<8x128xf32>
    %279 = arith.mulf %263, %271 : vector<8x128xf32>
    %280 = arith.addf %278, %279 : vector<8x128xf32>
    %281 = math.tanh %280 : vector<8x128xf32>
    %282 = arith.mulf %277, %281 : vector<8x128xf32>
    %c0_92 = arith.constant 0 : index
    %c0_93 = arith.constant 0 : index
    %283 = vector.load %arg4[%c0_92, %c0_93] : memref<128x4xf32, #tpu.memory_space<vmem>>, vector<128x4xf32>
    %cst_94 = arith.constant dense<0.000000e+00> : vector<8x4xf32>
    %284 = tpu.matmul %282, %283, %cst_94 {dimension_numbers = #tpu.dot_dimension_numbers<[1], [0], [0], [1], [0, 0, 1, 1], [], []>} : vector<8x128xf32>, vector<128x4xf32>, vector<8x4xf32> -> vector<8x4xf32>
    %c0_95 = arith.constant 0 : index
    %c0_96 = arith.constant 0 : index
    %285 = vector.load %arg6[%c0_95, %c0_96] : memref<1x4xf32, #tpu.memory_space<vmem>>, vector<1x4xf32>
    %286 = vector.broadcast %285 : vector<1x4xf32> to vector<8x4xf32>
    %287 = arith.addf %284, %286 : vector<8x4xf32>
    %c0_97 = arith.constant 0 : index
    %c0_98 = arith.constant 0 : index
    %288 = vector.load %arg5[%c0_97, %c0_98] : memref<1x4xf32, #tpu.memory_space<vmem>>, vector<1x4xf32>
    %289 = vector.broadcast %247 : vector<8x1xf32> to vector<8x4xf32>
    %290 = vector.broadcast %288 : vector<1x4xf32> to vector<8x4xf32>
    %291 = arith.mulf %289, %290 : vector<8x4xf32>
    %292 = arith.addf %287, %291 : vector<8x4xf32>
    %293 = arith.negf %292 : vector<8x4xf32>
    %294 = math.exp %293 : vector<8x4xf32>
    %cst_99 = arith.constant 1.000000e+00 : f32
    %295 = vector.broadcast %cst_99 : f32 to vector<8x4xf32>
    %296 = arith.addf %295, %294 : vector<8x4xf32>
    %297 = arith.divf %295, %296 : vector<8x4xf32>
    %298 = math.tanh %292 : vector<8x4xf32>
    %299 = vector.extract_strided_slice %297 {offsets = [0, 0], sizes = [8, 1], strides = [1, 1]} : vector<8x4xf32> to vector<8x1xf32>
    %300 = vector.extract_strided_slice %297 {offsets = [0, 1], sizes = [8, 1], strides = [1, 1]} : vector<8x4xf32> to vector<8x1xf32>
    %301 = vector.extract_strided_slice %298 {offsets = [0, 2], sizes = [8, 1], strides = [1, 1]} : vector<8x4xf32> to vector<8x1xf32>
    %302 = vector.extract_strided_slice %297 {offsets = [0, 3], sizes = [8, 1], strides = [1, 1]} : vector<8x4xf32> to vector<8x1xf32>
    %303 = arith.mulf %300, %245 : vector<8x1xf32>
    %304 = arith.mulf %299, %301 : vector<8x1xf32>
    %305 = arith.addf %303, %304 : vector<8x1xf32>
    %306 = math.tanh %305 : vector<8x1xf32>
    %307 = arith.mulf %302, %306 : vector<8x1xf32>
    %308 = arith.index_cast %c4_i32 : i32 to index
    %c0_100 = arith.constant 0 : index
    %c0_101 = arith.constant 0 : index
    %309 = vector.load %arg7[%308, %c0_100, %c0_101] : memref<8x8x1xf32, #tpu.memory_space<vmem>>, vector<1x8x1xf32>
    %310 = vector.shape_cast %309 : vector<1x8x1xf32> to vector<8x1xf32>
    %311 = vector.shape_cast %307 : vector<8x1xf32> to vector<1x8x1xf32>
    tpu.vector_store %arg7[%308, %c0_100, %c0_101], %311 {strides = array<i32>} : memref<8x8x1xf32, #tpu.memory_space<vmem>>, vector<1x8x1xf32>,
    %c5_i32 = arith.constant 5 : i32
    %312 = arith.index_cast %c5_i32 : i32 to index
    %c0_102 = arith.constant 0 : index
    %c0_103 = arith.constant 0 : index
    %313 = vector.load %arg8[%312, %c0_102, %c0_103] : memref<8x8x512xf32, #tpu.memory_space<vmem>>, vector<1x8x512xf32>
    %314 = vector.shape_cast %313 : vector<1x8x512xf32> to vector<8x512xf32>
    %c0_104 = arith.constant 0 : index
    %c0_105 = arith.constant 0 : index
    %315 = vector.load %arg2[%c0_104, %c0_105] : memref<128x512xf32, #tpu.memory_space<vmem>>, vector<128x512xf32>
    %cst_106 = arith.constant dense<0.000000e+00> : vector<8x512xf32>
    %316 = tpu.matmul %282, %315, %cst_106 {dimension_numbers = #tpu.dot_dimension_numbers<[1], [0], [0], [1], [0, 0, 1, 1], [], []>} : vector<8x128xf32>, vector<128x512xf32>, vector<8x512xf32> -> vector<8x512xf32>
    %317 = arith.addf %314, %316 : vector<8x512xf32>
    %318 = vector.extract_strided_slice %317 {offsets = [0, 0], sizes = [8, 128], strides = [1, 1]} : vector<8x512xf32> to vector<8x128xf32>
    %319 = arith.negf %318 : vector<8x128xf32>
    %320 = math.exp %319 : vector<8x128xf32>
    %cst_107 = arith.constant 1.000000e+00 : f32
    %321 = vector.broadcast %cst_107 : f32 to vector<8x128xf32>
    %322 = arith.addf %321, %320 : vector<8x128xf32>
    %323 = arith.divf %321, %322 : vector<8x128xf32>
    %324 = vector.extract_strided_slice %317 {offsets = [0, 128], sizes = [8, 128], strides = [1, 1]} : vector<8x512xf32> to vector<8x128xf32>
    %325 = arith.negf %324 : vector<8x128xf32>
    %326 = math.exp %325 : vector<8x128xf32>
    %cst_108 = arith.constant 1.000000e+00 : f32
    %327 = vector.broadcast %cst_108 : f32 to vector<8x128xf32>
    %328 = arith.addf %327, %326 : vector<8x128xf32>
    %329 = arith.divf %327, %328 : vector<8x128xf32>
    %330 = vector.extract_strided_slice %317 {offsets = [0, 256], sizes = [8, 128], strides = [1, 1]} : vector<8x512xf32> to vector<8x128xf32>
    %331 = math.tanh %330 : vector<8x128xf32>
    %332 = vector.extract_strided_slice %317 {offsets = [0, 384], sizes = [8, 128], strides = [1, 1]} : vector<8x512xf32> to vector<8x128xf32>
    %333 = arith.negf %332 : vector<8x128xf32>
    %334 = math.exp %333 : vector<8x128xf32>
    %cst_109 = arith.constant 1.000000e+00 : f32
    %335 = vector.broadcast %cst_109 : f32 to vector<8x128xf32>
    %336 = arith.addf %335, %334 : vector<8x128xf32>
    %337 = arith.divf %335, %336 : vector<8x128xf32>
    %338 = arith.mulf %329, %280 : vector<8x128xf32>
    %339 = arith.mulf %323, %331 : vector<8x128xf32>
    %340 = arith.addf %338, %339 : vector<8x128xf32>
    %341 = math.tanh %340 : vector<8x128xf32>
    %342 = arith.mulf %337, %341 : vector<8x128xf32>
    %c0_110 = arith.constant 0 : index
    %c0_111 = arith.constant 0 : index
    %343 = vector.load %arg4[%c0_110, %c0_111] : memref<128x4xf32, #tpu.memory_space<vmem>>, vector<128x4xf32>
    %cst_112 = arith.constant dense<0.000000e+00> : vector<8x4xf32>
    %344 = tpu.matmul %342, %343, %cst_112 {dimension_numbers = #tpu.dot_dimension_numbers<[1], [0], [0], [1], [0, 0, 1, 1], [], []>} : vector<8x128xf32>, vector<128x4xf32>, vector<8x4xf32> -> vector<8x4xf32>
    %c0_113 = arith.constant 0 : index
    %c0_114 = arith.constant 0 : index
    %345 = vector.load %arg6[%c0_113, %c0_114] : memref<1x4xf32, #tpu.memory_space<vmem>>, vector<1x4xf32>
    %346 = vector.broadcast %345 : vector<1x4xf32> to vector<8x4xf32>
    %347 = arith.addf %344, %346 : vector<8x4xf32>
    %c0_115 = arith.constant 0 : index
    %c0_116 = arith.constant 0 : index
    %348 = vector.load %arg5[%c0_115, %c0_116] : memref<1x4xf32, #tpu.memory_space<vmem>>, vector<1x4xf32>
    %349 = vector.broadcast %307 : vector<8x1xf32> to vector<8x4xf32>
    %350 = vector.broadcast %348 : vector<1x4xf32> to vector<8x4xf32>
    %351 = arith.mulf %349, %350 : vector<8x4xf32>
    %352 = arith.addf %347, %351 : vector<8x4xf32>
    %353 = arith.negf %352 : vector<8x4xf32>
    %354 = math.exp %353 : vector<8x4xf32>
    %cst_117 = arith.constant 1.000000e+00 : f32
    %355 = vector.broadcast %cst_117 : f32 to vector<8x4xf32>
    %356 = arith.addf %355, %354 : vector<8x4xf32>
    %357 = arith.divf %355, %356 : vector<8x4xf32>
    %358 = math.tanh %352 : vector<8x4xf32>
    %359 = vector.extract_strided_slice %357 {offsets = [0, 0], sizes = [8, 1], strides = [1, 1]} : vector<8x4xf32> to vector<8x1xf32>
    %360 = vector.extract_strided_slice %357 {offsets = [0, 1], sizes = [8, 1], strides = [1, 1]} : vector<8x4xf32> to vector<8x1xf32>
    %361 = vector.extract_strided_slice %358 {offsets = [0, 2], sizes = [8, 1], strides = [1, 1]} : vector<8x4xf32> to vector<8x1xf32>
    %362 = vector.extract_strided_slice %357 {offsets = [0, 3], sizes = [8, 1], strides = [1, 1]} : vector<8x4xf32> to vector<8x1xf32>
    %363 = arith.mulf %360, %305 : vector<8x1xf32>
    %364 = arith.mulf %359, %361 : vector<8x1xf32>
    %365 = arith.addf %363, %364 : vector<8x1xf32>
    %366 = math.tanh %365 : vector<8x1xf32>
    %367 = arith.mulf %362, %366 : vector<8x1xf32>
    %368 = arith.index_cast %c5_i32 : i32 to index
    %c0_118 = arith.constant 0 : index
    %c0_119 = arith.constant 0 : index
    %369 = vector.load %arg7[%368, %c0_118, %c0_119] : memref<8x8x1xf32, #tpu.memory_space<vmem>>, vector<1x8x1xf32>
    %370 = vector.shape_cast %369 : vector<1x8x1xf32> to vector<8x1xf32>
    %371 = vector.shape_cast %367 : vector<8x1xf32> to vector<1x8x1xf32>
    tpu.vector_store %arg7[%368, %c0_118, %c0_119], %371 {strides = array<i32>} : memref<8x8x1xf32, #tpu.memory_space<vmem>>, vector<1x8x1xf32>,
    %c6_i32 = arith.constant 6 : i32
    %372 = arith.index_cast %c6_i32 : i32 to index
    %c0_120 = arith.constant 0 : index
    %c0_121 = arith.constant 0 : index
    %373 = vector.load %arg8[%372, %c0_120, %c0_121] : memref<8x8x512xf32, #tpu.memory_space<vmem>>, vector<1x8x512xf32>
    %374 = vector.shape_cast %373 : vector<1x8x512xf32> to vector<8x512xf32>
    %c0_122 = arith.constant 0 : index
    %c0_123 = arith.constant 0 : index
    %375 = vector.load %arg2[%c0_122, %c0_123] : memref<128x512xf32, #tpu.memory_space<vmem>>, vector<128x512xf32>
    %cst_124 = arith.constant dense<0.000000e+00> : vector<8x512xf32>
    %376 = tpu.matmul %342, %375, %cst_124 {dimension_numbers = #tpu.dot_dimension_numbers<[1], [0], [0], [1], [0, 0, 1, 1], [], []>} : vector<8x128xf32>, vector<128x512xf32>, vector<8x512xf32> -> vector<8x512xf32>
    %377 = arith.addf %374, %376 : vector<8x512xf32>
    %378 = vector.extract_strided_slice %377 {offsets = [0, 0], sizes = [8, 128], strides = [1, 1]} : vector<8x512xf32> to vector<8x128xf32>
    %379 = arith.negf %378 : vector<8x128xf32>
    %380 = math.exp %379 : vector<8x128xf32>
    %cst_125 = arith.constant 1.000000e+00 : f32
    %381 = vector.broadcast %cst_125 : f32 to vector<8x128xf32>
    %382 = arith.addf %381, %380 : vector<8x128xf32>
    %383 = arith.divf %381, %382 : vector<8x128xf32>
    %384 = vector.extract_strided_slice %377 {offsets = [0, 128], sizes = [8, 128], strides = [1, 1]} : vector<8x512xf32> to vector<8x128xf32>
    %385 = arith.negf %384 : vector<8x128xf32>
    %386 = math.exp %385 : vector<8x128xf32>
    %cst_126 = arith.constant 1.000000e+00 : f32
    %387 = vector.broadcast %cst_126 : f32 to vector<8x128xf32>
    %388 = arith.addf %387, %386 : vector<8x128xf32>
    %389 = arith.divf %387, %388 : vector<8x128xf32>
    %390 = vector.extract_strided_slice %377 {offsets = [0, 256], sizes = [8, 128], strides = [1, 1]} : vector<8x512xf32> to vector<8x128xf32>
    %391 = math.tanh %390 : vector<8x128xf32>
    %392 = vector.extract_strided_slice %377 {offsets = [0, 384], sizes = [8, 128], strides = [1, 1]} : vector<8x512xf32> to vector<8x128xf32>
    %393 = arith.negf %392 : vector<8x128xf32>
    %394 = math.exp %393 : vector<8x128xf32>
    %cst_127 = arith.constant 1.000000e+00 : f32
    %395 = vector.broadcast %cst_127 : f32 to vector<8x128xf32>
    %396 = arith.addf %395, %394 : vector<8x128xf32>
    %397 = arith.divf %395, %396 : vector<8x128xf32>
    %398 = arith.mulf %389, %340 : vector<8x128xf32>
    %399 = arith.mulf %383, %391 : vector<8x128xf32>
    %400 = arith.addf %398, %399 : vector<8x128xf32>
    %401 = math.tanh %400 : vector<8x128xf32>
    %402 = arith.mulf %397, %401 : vector<8x128xf32>
    %c0_128 = arith.constant 0 : index
    %c0_129 = arith.constant 0 : index
    %403 = vector.load %arg4[%c0_128, %c0_129] : memref<128x4xf32, #tpu.memory_space<vmem>>, vector<128x4xf32>
    %cst_130 = arith.constant dense<0.000000e+00> : vector<8x4xf32>
    %404 = tpu.matmul %402, %403, %cst_130 {dimension_numbers = #tpu.dot_dimension_numbers<[1], [0], [0], [1], [0, 0, 1, 1], [], []>} : vector<8x128xf32>, vector<128x4xf32>, vector<8x4xf32> -> vector<8x4xf32>
    %c0_131 = arith.constant 0 : index
    %c0_132 = arith.constant 0 : index
    %405 = vector.load %arg6[%c0_131, %c0_132] : memref<1x4xf32, #tpu.memory_space<vmem>>, vector<1x4xf32>
    %406 = vector.broadcast %405 : vector<1x4xf32> to vector<8x4xf32>
    %407 = arith.addf %404, %406 : vector<8x4xf32>
    %c0_133 = arith.constant 0 : index
    %c0_134 = arith.constant 0 : index
    %408 = vector.load %arg5[%c0_133, %c0_134] : memref<1x4xf32, #tpu.memory_space<vmem>>, vector<1x4xf32>
    %409 = vector.broadcast %367 : vector<8x1xf32> to vector<8x4xf32>
    %410 = vector.broadcast %408 : vector<1x4xf32> to vector<8x4xf32>
    %411 = arith.mulf %409, %410 : vector<8x4xf32>
    %412 = arith.addf %407, %411 : vector<8x4xf32>
    %413 = arith.negf %412 : vector<8x4xf32>
    %414 = math.exp %413 : vector<8x4xf32>
    %cst_135 = arith.constant 1.000000e+00 : f32
    %415 = vector.broadcast %cst_135 : f32 to vector<8x4xf32>
    %416 = arith.addf %415, %414 : vector<8x4xf32>
    %417 = arith.divf %415, %416 : vector<8x4xf32>
    %418 = math.tanh %412 : vector<8x4xf32>
    %419 = vector.extract_strided_slice %417 {offsets = [0, 0], sizes = [8, 1], strides = [1, 1]} : vector<8x4xf32> to vector<8x1xf32>
    %420 = vector.extract_strided_slice %417 {offsets = [0, 1], sizes = [8, 1], strides = [1, 1]} : vector<8x4xf32> to vector<8x1xf32>
    %421 = vector.extract_strided_slice %418 {offsets = [0, 2], sizes = [8, 1], strides = [1, 1]} : vector<8x4xf32> to vector<8x1xf32>
    %422 = vector.extract_strided_slice %417 {offsets = [0, 3], sizes = [8, 1], strides = [1, 1]} : vector<8x4xf32> to vector<8x1xf32>
    %423 = arith.mulf %420, %365 : vector<8x1xf32>
    %424 = arith.mulf %419, %421 : vector<8x1xf32>
    %425 = arith.addf %423, %424 : vector<8x1xf32>
    %426 = math.tanh %425 : vector<8x1xf32>
    %427 = arith.mulf %422, %426 : vector<8x1xf32>
    %428 = arith.index_cast %c6_i32 : i32 to index
    %c0_136 = arith.constant 0 : index
    %c0_137 = arith.constant 0 : index
    %429 = vector.load %arg7[%428, %c0_136, %c0_137] : memref<8x8x1xf32, #tpu.memory_space<vmem>>, vector<1x8x1xf32>
    %430 = vector.shape_cast %429 : vector<1x8x1xf32> to vector<8x1xf32>
    %431 = vector.shape_cast %427 : vector<8x1xf32> to vector<1x8x1xf32>
    tpu.vector_store %arg7[%428, %c0_136, %c0_137], %431 {strides = array<i32>} : memref<8x8x1xf32, #tpu.memory_space<vmem>>, vector<1x8x1xf32>,
    %c7_i32 = arith.constant 7 : i32
    %432 = arith.index_cast %c7_i32 : i32 to index
    %c0_138 = arith.constant 0 : index
    %c0_139 = arith.constant 0 : index
    %433 = vector.load %arg8[%432, %c0_138, %c0_139] : memref<8x8x512xf32, #tpu.memory_space<vmem>>, vector<1x8x512xf32>
    %434 = vector.shape_cast %433 : vector<1x8x512xf32> to vector<8x512xf32>
    %c0_140 = arith.constant 0 : index
    %c0_141 = arith.constant 0 : index
    %435 = vector.load %arg2[%c0_140, %c0_141] : memref<128x512xf32, #tpu.memory_space<vmem>>, vector<128x512xf32>
    %cst_142 = arith.constant dense<0.000000e+00> : vector<8x512xf32>
    %436 = tpu.matmul %402, %435, %cst_142 {dimension_numbers = #tpu.dot_dimension_numbers<[1], [0], [0], [1], [0, 0, 1, 1], [], []>} : vector<8x128xf32>, vector<128x512xf32>, vector<8x512xf32> -> vector<8x512xf32>
    %437 = arith.addf %434, %436 : vector<8x512xf32>
    %438 = vector.extract_strided_slice %437 {offsets = [0, 0], sizes = [8, 128], strides = [1, 1]} : vector<8x512xf32> to vector<8x128xf32>
    %439 = arith.negf %438 : vector<8x128xf32>
    %440 = math.exp %439 : vector<8x128xf32>
    %cst_143 = arith.constant 1.000000e+00 : f32
    %441 = vector.broadcast %cst_143 : f32 to vector<8x128xf32>
    %442 = arith.addf %441, %440 : vector<8x128xf32>
    %443 = arith.divf %441, %442 : vector<8x128xf32>
    %444 = vector.extract_strided_slice %437 {offsets = [0, 128], sizes = [8, 128], strides = [1, 1]} : vector<8x512xf32> to vector<8x128xf32>
    %445 = arith.negf %444 : vector<8x128xf32>
    %446 = math.exp %445 : vector<8x128xf32>
    %cst_144 = arith.constant 1.000000e+00 : f32
    %447 = vector.broadcast %cst_144 : f32 to vector<8x128xf32>
    %448 = arith.addf %447, %446 : vector<8x128xf32>
    %449 = arith.divf %447, %448 : vector<8x128xf32>
    %450 = vector.extract_strided_slice %437 {offsets = [0, 256], sizes = [8, 128], strides = [1, 1]} : vector<8x512xf32> to vector<8x128xf32>
    %451 = math.tanh %450 : vector<8x128xf32>
    %452 = vector.extract_strided_slice %437 {offsets = [0, 384], sizes = [8, 128], strides = [1, 1]} : vector<8x512xf32> to vector<8x128xf32>
    %453 = arith.negf %452 : vector<8x128xf32>
    %454 = math.exp %453 : vector<8x128xf32>
    %cst_145 = arith.constant 1.000000e+00 : f32
    %455 = vector.broadcast %cst_145 : f32 to vector<8x128xf32>
    %456 = arith.addf %455, %454 : vector<8x128xf32>
    %457 = arith.divf %455, %456 : vector<8x128xf32>
    %458 = arith.mulf %449, %400 : vector<8x128xf32>
    %459 = arith.mulf %443, %451 : vector<8x128xf32>
    %460 = arith.addf %458, %459 : vector<8x128xf32>
    %461 = math.tanh %460 : vector<8x128xf32>
    %462 = arith.mulf %457, %461 : vector<8x128xf32>
    %c0_146 = arith.constant 0 : index
    %c0_147 = arith.constant 0 : index
    %463 = vector.load %arg4[%c0_146, %c0_147] : memref<128x4xf32, #tpu.memory_space<vmem>>, vector<128x4xf32>
    %cst_148 = arith.constant dense<0.000000e+00> : vector<8x4xf32>
    %464 = tpu.matmul %462, %463, %cst_148 {dimension_numbers = #tpu.dot_dimension_numbers<[1], [0], [0], [1], [0, 0, 1, 1], [], []>} : vector<8x128xf32>, vector<128x4xf32>, vector<8x4xf32> -> vector<8x4xf32>
    %c0_149 = arith.constant 0 : index
    %c0_150 = arith.constant 0 : index
    %465 = vector.load %arg6[%c0_149, %c0_150] : memref<1x4xf32, #tpu.memory_space<vmem>>, vector<1x4xf32>
    %466 = vector.broadcast %465 : vector<1x4xf32> to vector<8x4xf32>
    %467 = arith.addf %464, %466 : vector<8x4xf32>
    %c0_151 = arith.constant 0 : index
    %c0_152 = arith.constant 0 : index
    %468 = vector.load %arg5[%c0_151, %c0_152] : memref<1x4xf32, #tpu.memory_space<vmem>>, vector<1x4xf32>
    %469 = vector.broadcast %427 : vector<8x1xf32> to vector<8x4xf32>
    %470 = vector.broadcast %468 : vector<1x4xf32> to vector<8x4xf32>
    %471 = arith.mulf %469, %470 : vector<8x4xf32>
    %472 = arith.addf %467, %471 : vector<8x4xf32>
    %473 = arith.negf %472 : vector<8x4xf32>
    %474 = math.exp %473 : vector<8x4xf32>
    %cst_153 = arith.constant 1.000000e+00 : f32
    %475 = vector.broadcast %cst_153 : f32 to vector<8x4xf32>
    %476 = arith.addf %475, %474 : vector<8x4xf32>
    %477 = arith.divf %475, %476 : vector<8x4xf32>
    %478 = math.tanh %472 : vector<8x4xf32>
    %479 = vector.extract_strided_slice %477 {offsets = [0, 0], sizes = [8, 1], strides = [1, 1]} : vector<8x4xf32> to vector<8x1xf32>
    %480 = vector.extract_strided_slice %477 {offsets = [0, 1], sizes = [8, 1], strides = [1, 1]} : vector<8x4xf32> to vector<8x1xf32>
    %481 = vector.extract_strided_slice %478 {offsets = [0, 2], sizes = [8, 1], strides = [1, 1]} : vector<8x4xf32> to vector<8x1xf32>
    %482 = vector.extract_strided_slice %477 {offsets = [0, 3], sizes = [8, 1], strides = [1, 1]} : vector<8x4xf32> to vector<8x1xf32>
    %483 = arith.mulf %480, %425 : vector<8x1xf32>
    %484 = arith.mulf %479, %481 : vector<8x1xf32>
    %485 = arith.addf %483, %484 : vector<8x1xf32>
    %486 = math.tanh %485 : vector<8x1xf32>
    %487 = arith.mulf %482, %486 : vector<8x1xf32>
    %488 = arith.index_cast %c7_i32 : i32 to index
    %c0_154 = arith.constant 0 : index
    %c0_155 = arith.constant 0 : index
    %489 = vector.load %arg7[%488, %c0_154, %c0_155] : memref<8x8x1xf32, #tpu.memory_space<vmem>>, vector<1x8x1xf32>
    %490 = vector.shape_cast %489 : vector<1x8x1xf32> to vector<8x1xf32>
    %491 = vector.shape_cast %487 : vector<8x1xf32> to vector<1x8x1xf32>
    tpu.vector_store %arg7[%488, %c0_154, %c0_155], %491 {strides = array<i32>} : memref<8x8x1xf32, #tpu.memory_space<vmem>>, vector<1x8x1xf32>,
    %c8_i32 = arith.constant 8 : i32
    return
  }
}

</mosaic_0001>

<llo_original>
// kernel: decoder_forward.1
$region0: #{decoder_forward.1}
  #allocation0 [shape = 'u32[]', space=smem, size = 0x4, offset = 0x4, fixed_abs, tag = 'smem constant byte address 0x4 - core index']
  #allocation1 [shape = 'u32[144,128]{1,0:T(1,128)}', space=vmem, size = 0x12000, scoped, tag = 'internal scratch']
  #allocation2 [shape = 'f32[8,8,512]{2,1,0:T(8,128)}', space=vmem, size = 0x20000, scoped, tag = 'scratch operand']
  %s0 = inlined_call_operand.vmem [shape: f32[64,16], index: 0, kind: input, shape index: {}]
  %s1 = inlined_call_operand.vmem [shape: f32[16,512], index: 1, kind: input, shape index: {}]
  %s2 = inlined_call_operand.vmem [shape: f32[128,512], index: 2, kind: input, shape index: {}]
  %s3 = inlined_call_operand.vmem [shape: f32[1,512], index: 3, kind: input, shape index: {}]
  %s4 = inlined_call_operand.vmem [shape: f32[128,4], index: 4, kind: input, shape index: {}]
  %s5 = inlined_call_operand.vmem [shape: f32[1,4], index: 5, kind: input, shape index: {}]
  %s6 = inlined_call_operand.vmem [shape: f32[1,4], index: 6, kind: input, shape index: {}]
  %s7 = inlined_call_operand.vmem [shape: f32[8,8,1], index: 7, kind: output, shape index: {}]
  %s8 = sld [smem:[#allocation0]]
  $region38: #{decoder_forward.1} parent=0
    _
  %s10 = ssub.s32 1, %s8
  %s11 = scalar_select 0, %s10, %s8
  // Predicated region
  $region2: #{decoder_forward.1} parent=0 // pred_check
    _
  $region3: #{decoder_forward.1} parent=0 // pred_check_branch
    %13 = sbr.rel (0) target = $region5
  $region4: #{decoder_forward.1} parent=0 // pred_region
    _
  $region5: #{decoder_forward.1} parent=0 // pred_fallthru
    _
  // Predicated region
  $region6: #{decoder_forward.1} parent=0 // pred_check
    _
  $region7: #{decoder_forward.1} parent=0 // pred_check_branch
    %15 = sbr.rel (0) target = $region9
  $region8: #{decoder_forward.1} parent=0 // pred_region
    _
  $region9: #{decoder_forward.1} parent=0 // pred_fallthru
    _
  // Predicated region
  $region10: #{decoder_forward.1} parent=0 // pred_check
    _
  $region11: #{decoder_forward.1} parent=0 // pred_check_branch
    %17 = sbr.rel (0) target = $region13
  $region12: #{decoder_forward.1} parent=0 // pred_region
    _
  $region13: #{decoder_forward.1} parent=0 // pred_fallthru
    _
  // Predicated region
  $region14: #{decoder_forward.1} parent=0 // pred_check
    _
  $region15: #{decoder_forward.1} parent=0 // pred_check_branch
    %19 = sbr.rel (0) target = $region17
  $region16: #{decoder_forward.1} parent=0 // pred_region
    _
  $region17: #{decoder_forward.1} parent=0 // pred_fallthru
    _
  // Predicated region
  $region18: #{decoder_forward.1} parent=0 // pred_check
    _
  $region19: #{decoder_forward.1} parent=0 // pred_check_branch
    %21 = sbr.rel (0) target = $region21
  $region20: #{decoder_forward.1} parent=0 // pred_region
    _
  $region21: #{decoder_forward.1} parent=0 // pred_fallthru
    _
  // Predicated region
  $region22: #{decoder_forward.1} parent=0 // pred_check
    _
  $region23: #{decoder_forward.1} parent=0 // pred_check_branch
    %23 = sbr.rel (0) target = $region25
  $region24: #{decoder_forward.1} parent=0 // pred_region
    _
  $region25: #{decoder_forward.1} parent=0 // pred_fallthru
    _
  // Predicated region
  $region26: #{decoder_forward.1} parent=0 // pred_check
    _
  $region27: #{decoder_forward.1} parent=0 // pred_check_branch
    %25 = sbr.rel (0) target = $region29
  $region28: #{decoder_forward.1} parent=0 // pred_region
    _
  $region29: #{decoder_forward.1} parent=0 // pred_fallthru
    _
  %v26 = vld [vmem:[%s0] sm:$0xff]
  %v27 = vld [vmem:[%s0 + $0x8] sm:$0xff]
  %v28 = vld [vmem:[%s0 + $0x10] sm:$0xff]
  %v29 = vld [vmem:[%s0 + $0x18] sm:$0xff]
  %v30 = vld [vmem:[%s0 + $0x20] sm:$0xff]
  %v31 = vld [vmem:[%s0 + $0x28] sm:$0xff]
  %v32 = vld [vmem:[%s0 + $0x30] sm:$0xff]
  %v33 = vld [vmem:[%s0 + $0x38] sm:$0xff]
  %v34 = vld [vmem:[%s1] sm:$0xff]
  %v35 = vld [vmem:[%s1 + $0x8] sm:$0xff]
  %v36 = vld [vmem:[%s1 + $0x10] sm:$0xff]
  %v37 = vld [vmem:[%s1 + $0x18] sm:$0xff]
  %v38 = vld [vmem:[%s1 + $0x20] sm:$0xff]
  %v39 = vld [vmem:[%s1 + $0x28] sm:$0xff]
  %v40 = vld [vmem:[%s1 + $0x30] sm:$0xff]
  %v41 = vld [vmem:[%s1 + $0x38] sm:$0xff]
  %v42 = vld [vmem:[%s3] sm:$0xf]
  %v44 = vlaneseq
  %v45 = vshrl.u32 %v44, 7
  %v46 = vsub.s32 0, %v45
  %v47 = vrot.slane %v42, %v46
  %v48 = vlaneseq
  %v49 = vshrl.u32 %v48, 7
  %v50 = vsub.s32 1, %v49
  %v51 = vrot.slane %v42, %v50
  %v52 = vlaneseq
  %v53 = vshrl.u32 %v52, 7
  %v54 = vsub.s32 2, %v53
  %v55 = vrot.slane %v42, %v54
  %v56 = vlaneseq
  %v57 = vshrl.u32 %v56, 7
  %v58 = vsub.s32 3, %v57
  %v59 = vrot.slane %v42, %v58
  %vm64 = vcmask 130048
  %v66 = vsel %vm64, %v26, 0
  %v69 = vsel %vm64, %v27, 0
  %v72 = vsel %vm64, %v28, 0
  %v75 = vsel %vm64, %v29, 0
  %v78 = vsel %vm64, %v30, 0
  %v81 = vsel %vm64, %v31, 0
  %v84 = vsel %vm64, %v32, 0
  %v87 = vsel %vm64, %v33, 0
  %89 = vmatprep.subr.mxu0 %v35
  %90 = vmatpush1.msra.mxu0 %v34
  %91 = vmatprep.subr.mxu0 %v39
  %92 = vmatpush1.msra.mxu0 %v38
  %93 = vmatprep.subr.mxu0 0.0
  %94 = vmatpush1.msra.mxu0 0.0
  %95 = vmatprep.subr.mxu0 0.0
  %96 = vmatpush1.msra.mxu0 0.0
  %97 = vmatprep.subr.mxu0 0.0
  %98 = vmatpush1.msra.mxu0 0.0
  %99 = vmatprep.subr.mxu0 0.0
  %100 = vmatpush1.msra.mxu0 0.0
  %101 = vmatprep.subr.mxu0 0.0
  %102 = vmatpush1.msra.mxu0 0.0
  %103 = vmatprep.subr.mxu0 0.0
  %104 = vmatpush1.msra.mxu0 0.0
  %105 = vmatprep.subr.mxu0 0.0
  %106 = vmatpush1.msra.mxu0 0.0
  %107 = vmatprep.subr.mxu0 0.0
  %108 = vmatpush1.msra.mxu0 0.0
  %109 = vmatprep.subr.mxu0 0.0
  %110 = vmatpush1.msra.mxu0 0.0
  %111 = vmatprep.subr.mxu0 0.0
  %112 = vmatpush1.msra.mxu0 0.0
  %113 = vmatprep.subr.mxu0 0.0
  %114 = vmatpush1.msra.mxu0 0.0
  %115 = vmatprep.subr.mxu0 0.0
  %116 = vmatpush1.msra.mxu0 0.0
  %117 = vmatprep.subr.mxu0 0.0
  %118 = vmatpush1.msra.mxu0 0.0
  %119 = vmatprep.subr.mxu0 0.0
  %120 = vmatpush1.msra.mxu0 0.0
  %121 = vmatprep.subr.mxu0 0.0
  %122 = vmatpush1.msra.mxu0 0.0
  %123 = vmatprep.subr.mxu0 0.0
  %124 = vmatpush1.msra.mxu0 0.0
  %125 = vmatprep.subr.mxu0 0.0
  %126 = vmatpush1.msra.mxu0 0.0
  %127 = vmatprep.subr.mxu0 0.0
  %128 = vmatpush1.msra.mxu0 0.0
  %129 = vmatprep.subr.mxu0 0.0
  %130 = vmatpush1.msra.mxu0 0.0
  %131 = vmatprep.subr.mxu0 0.0
  %132 = vmatpush1.msra.mxu0 0.0
  %133 = vmatprep.subr.mxu0 0.0
  %134 = vmatpush1.msra.mxu0 0.0
  %135 = vmatprep.subr.mxu0 0.0
  %136 = vmatpush1.msra.mxu0 0.0
  %137 = vmatprep.subr.mxu0 0.0
  %138 = vmatpush1.msra.mxu0 0.0
  %139 = vmatprep.subr.mxu0 0.0
  %140 = vmatpush1.msra.mxu0 0.0
  %141 = vmatprep.subr.mxu0 0.0
  %142 = vmatpush1.msra.mxu0 0.0
  %143 = vmatprep.subr.mxu0 0.0
  %144 = vmatpush1.msra.mxu0 0.0
  %145 = vmatprep.subr.mxu0 0.0
  %146 = vmatpush1.msra.mxu0 0.0
  %147 = vmatprep.subr.mxu0 0.0
  %148 = vmatpush1.msra.mxu0 0.0
  %149 = vmatprep.subr.mxu0 0.0
  %150 = vmatpush1.msra.mxu0 0.0
  %151 = vmatprep.subr.mxu0 0.0
  %152 = vmatpush1.msra.mxu0 0.0
  %153 = vmatprep.mubr.f32.mxu0 0.0
  %154 = vmatmul.mubr.f32.gmra.mrb[0].mxu0 %v66
  %v155 = vpop.f32.mrb[0].mxu0
  %v156 = vadd.f32 %v47, %v155
  %v157 = vpop.f32.mrb[0].mxu0
  %v158 = vadd.f32 %v51, %v157
  %159 = vmatprep.mubr.f32.mxu0 0.0
  %160 = vmatmul.mubr.f32.gmra.mrb[0].mxu0 %v69
  %v161 = vpop.f32.mrb[0].mxu0
  %v162 = vadd.f32 %v47, %v161
  %v163 = vpop.f32.mrb[0].mxu0
  %v164 = vadd.f32 %v51, %v163
  %165 = vmatprep.mubr.f32.mxu0 0.0
  %166 = vmatmul.mubr.f32.gmra.mrb[0].mxu0 %v72
  %v167 = vpop.f32.mrb[0].mxu0
  %v168 = vadd.f32 %v47, %v167
  %v169 = vpop.f32.mrb[0].mxu0
  %v170 = vadd.f32 %v51, %v169
  %171 = vmatprep.mubr.f32.mxu0 0.0
  %172 = vmatmul.mubr.f32.gmra.mrb[0].mxu0 %v75
  %v173 = vpop.f32.mrb[0].mxu0
  %v174 = vadd.f32 %v47, %v173
  %v175 = vpop.f32.mrb[0].mxu0
  %v176 = vadd.f32 %v51, %v175
  %177 = vmatprep.mubr.f32.mxu0 0.0
  %178 = vmatmul.mubr.f32.gmra.mrb[0].mxu0 %v78
  %v179 = vpop.f32.mrb[0].mxu0
  %v180 = vadd.f32 %v47, %v179
  %v181 = vpop.f32.mrb[0].mxu0
  %v182 = vadd.f32 %v51, %v181
  %183 = vmatprep.mubr.f32.mxu0 0.0
  %184 = vmatmul.mubr.f32.gmra.mrb[0].mxu0 %v81
  %v185 = vpop.f32.mrb[0].mxu0
  %v186 = vadd.f32 %v47, %v185
  %v187 = vpop.f32.mrb[0].mxu0
  %v188 = vadd.f32 %v51, %v187
  %189 = vmatprep.mubr.f32.mxu0 0.0
  %190 = vmatmul.mubr.f32.gmra.mrb[0].mxu0 %v84
  %v191 = vpop.f32.mrb[0].mxu0
  %v192 = vadd.f32 %v47, %v191
  %v193 = vpop.f32.mrb[0].mxu0
  %v194 = vadd.f32 %v51, %v193
  %195 = vmatprep.mubr.f32.mxu0 0.0
  %196 = vmatmul.mubr.f32.gmra.mrb[0].mxu0 %v87
  %v197 = vpop.f32.mrb[0].mxu0
  %v198 = vadd.f32 %v47, %v197
  %v199 = vpop.f32.mrb[0].mxu0
  %v200 = vadd.f32 %v51, %v199
  %201 = vdwg.mxu0
  %202 = vmatprep.subr.mxu0 %v37
  %203 = vmatpush1.msra.mxu0 %v36
  %204 = vmatprep.subr.mxu0 %v41
  %205 = vmatpush1.msra.mxu0 %v40
  %206 = vmatprep.subr.mxu0 0.0
  %207 = vmatpush1.msra.mxu0 0.0
  %208 = vmatprep.subr.mxu0 0.0
  %209 = vmatpush1.msra.mxu0 0.0
  %210 = vmatprep.subr.mxu0 0.0
  %211 = vmatpush1.msra.mxu0 0.0
  %212 = vmatprep.subr.mxu0 0.0
  %213 = vmatpush1.msra.mxu0 0.0
  %214 = vmatprep.subr.mxu0 0.0
  %215 = vmatpush1.msra.mxu0 0.0
  %216 = vmatprep.subr.mxu0 0.0
  %217 = vmatpush1.msra.mxu0 0.0
  %218 = vmatprep.subr.mxu0 0.0
  %219 = vmatpush1.msra.mxu0 0.0
  %220 = vmatprep.subr.mxu0 0.0
  %221 = vmatpush1.msra.mxu0 0.0
  %222 = vmatprep.subr.mxu0 0.0
  %223 = vmatpush1.msra.mxu0 0.0
  %224 = vmatprep.subr.mxu0 0.0
  %225 = vmatpush1.msra.mxu0 0.0
  %226 = vmatprep.subr.mxu0 0.0
  %227 = vmatpush1.msra.mxu0 0.0
  %228 = vmatprep.subr.mxu0 0.0
  %229 = vmatpush1.msra.mxu0 0.0
  %230 = vmatprep.subr.mxu0 0.0
  %231 = vmatpush1.msra.mxu0 0.0
  %232 = vmatprep.subr.mxu0 0.0
  %233 = vmatpush1.msra.mxu0 0.0
  %234 = vmatprep.subr.mxu0 0.0
  %235 = vmatpush1.msra.mxu0 0.0
  %236 = vmatprep.subr.mxu0 0.0
  %237 = vmatpush1.msra.mxu0 0.0
  %238 = vmatprep.subr.mxu0 0.0
  %239 = vmatpush1.msra.mxu0 0.0
  %240 = vmatprep.subr.mxu0 0.0
  %241 = vmatpush1.msra.mxu0 0.0
  %242 = vmatprep.subr.mxu0 0.0
  %243 = vmatpush1.msra.mxu0 0.0
  %244 = vmatprep.subr.mxu0 0.0
  %245 = vmatpush1.msra.mxu0 0.0
  %246 = vmatprep.subr.mxu0 0.0
  %247 = vmatpush1.msra.mxu0 0.0
  %248 = vmatprep.subr.mxu0 0.0
  %249 = vmatpush1.msra.mxu0 0.0
  %250 = vmatprep.subr.mxu0 0.0
  %251 = vmatpush1.msra.mxu0 0.0
  %252 = vmatprep.subr.mxu0 0.0
  %253 = vmatpush1.msra.mxu0 0.0
  %254 = vmatprep.subr.mxu0 0.0
  %255 = vmatpush1.msra.mxu0 0.0
  %256 = vmatprep.subr.mxu0 0.0
  %257 = vmatpush1.msra.mxu0 0.0
  %258 = vmatprep.subr.mxu0 0.0
  %259 = vmatpush1.msra.mxu0 0.0
  %260 = vmatprep.subr.mxu0 0.0
  %261 = vmatpush1.msra.mxu0 0.0
  %262 = vmatprep.subr.mxu0 0.0
  %263 = vmatpush1.msra.mxu0 0.0
  %264 = vmatprep.subr.mxu0 0.0
  %265 = vmatpush1.msra.mxu0 0.0
  %266 = vmatprep.mubr.f32.mxu0 0.0
  %267 = vmatmul.mubr.f32.gmra.mrb[0].mxu0 %v66
  %v268 = vpop.f32.mrb[0].mxu0
  %v269 = vadd.f32 %v55, %v268
  %v270 = vpop.f32.mrb[0].mxu0
  %v271 = vadd.f32 %v59, %v270
  %272 = vmatprep.mubr.f32.mxu0 0.0
  %273 = vmatmul.mubr.f32.gmra.mrb[0].mxu0 %v69
  %v274 = vpop.f32.mrb[0].mxu0
  %v275 = vadd.f32 %v55, %v274
  %v276 = vpop.f32.mrb[0].mxu0
  %v277 = vadd.f32 %v59, %v276
  %278 = vmatprep.mubr.f32.mxu0 0.0
  %279 = vmatmul.mubr.f32.gmra.mrb[0].mxu0 %v72
  %v280 = vpop.f32.mrb[0].mxu0
  %v281 = vadd.f32 %v55, %v280
  %v282 = vpop.f32.mrb[0].mxu0
  %v283 = vadd.f32 %v59, %v282
  %284 = vmatprep.mubr.f32.mxu0 0.0
  %285 = vmatmul.mubr.f32.gmra.mrb[0].mxu0 %v75
  %v286 = vpop.f32.mrb[0].mxu0
  %v287 = vadd.f32 %v55, %v286
  %v288 = vpop.f32.mrb[0].mxu0
  %v289 = vadd.f32 %v59, %v288
  %290 = vmatprep.mubr.f32.mxu0 0.0
  %291 = vmatmul.mubr.f32.gmra.mrb[0].mxu0 %v78
  %v292 = vpop.f32.mrb[0].mxu0
  %v293 = vadd.f32 %v55, %v292
  %v294 = vpop.f32.mrb[0].mxu0
  %v295 = vadd.f32 %v59, %v294
  %296 = vmatprep.mubr.f32.mxu0 0.0
  %297 = vmatmul.mubr.f32.gmra.mrb[0].mxu0 %v81
  %v298 = vpop.f32.mrb[0].mxu0
  %v299 = vadd.f32 %v55, %v298
  %v300 = vpop.f32.mrb[0].mxu0
  %v301 = vadd.f32 %v59, %v300
  %302 = vmatprep.mubr.f32.mxu0 0.0
  %303 = vmatmul.mubr.f32.gmra.mrb[0].mxu0 %v84
  %v304 = vpop.f32.mrb[0].mxu0
  %v305 = vadd.f32 %v55, %v304
  %v306 = vpop.f32.mrb[0].mxu0
  %v307 = vadd.f32 %v59, %v306
  %308 = vmatprep.mubr.f32.mxu0 0.0
  %309 = vmatmul.mubr.f32.gmra.mrb[0].mxu0 %v87
  %v310 = vpop.f32.mrb[0].mxu0
  %v311 = vadd.f32 %v55, %v310
  %v312 = vpop.f32.mrb[0].mxu0
  %v313 = vadd.f32 %v59, %v312
  %314 = vdwg.mxu0
  %315 = vst [vmem:[#allocation2] sm:$0xff] %v156
  %316 = vst [vmem:[#allocation2 + $0x8] sm:$0xff] %v158
  %317 = vst [vmem:[#allocation2 + $0x10] sm:$0xff] %v269
  %318 = vst [vmem:[#allocation2 + $0x18] sm:$0xff] %v271
  %319 = vst [vmem:[#allocation2 + $0x20] sm:$0xff] %v162
  %320 = vst [vmem:[#allocation2 + $0x28] sm:$0xff] %v164
  %321 = vst [vmem:[#allocation2 + $0x30] sm:$0xff] %v275
  %322 = vst [vmem:[#allocation2 + $0x38] sm:$0xff] %v277
  %323 = vst [vmem:[#allocation2 + $0x40] sm:$0xff] %v168
  %324 = vst [vmem:[#allocation2 + $0x48] sm:$0xff] %v170
  %325 = vst [vmem:[#allocation2 + $0x50] sm:$0xff] %v281
  %326 = vst [vmem:[#allocation2 + $0x58] sm:$0xff] %v283
  %327 = vst [vmem:[#allocation2 + $0x60] sm:$0xff] %v174
  %328 = vst [vmem:[#allocation2 + $0x68] sm:$0xff] %v176
  %329 = vst [vmem:[#allocation2 + $0x70] sm:$0xff] %v287
  %330 = vst [vmem:[#allocation2 + $0x78] sm:$0xff] %v289
  %331 = vst [vmem:[#allocation2 + $0x80] sm:$0xff] %v180
  %332 = vst [vmem:[#allocation2 + $0x88] sm:$0xff] %v182
  %333 = vst [vmem:[#allocation2 + $0x90] sm:$0xff] %v293
  %334 = vst [vmem:[#allocation2 + $0x98] sm:$0xff] %v295
  %335 = vst [vmem:[#allocation2 + $0xa0] sm:$0xff] %v186
  %336 = vst [vmem:[#allocation2 + $0xa8] sm:$0xff] %v188
  %337 = vst [vmem:[#allocation2 + $0xb0] sm:$0xff] %v299
  %338 = vst [vmem:[#allocation2 + $0xb8] sm:$0xff] %v301
  %339 = vst [vmem:[#allocation2 + $0xc0] sm:$0xff] %v192
  %340 = vst [vmem:[#allocation2 + $0xc8] sm:$0xff] %v194
  %341 = vst [vmem:[#allocation2 + $0xd0] sm:$0xff] %v305
  %342 = vst [vmem:[#allocation2 + $0xd8] sm:$0xff] %v307
  %343 = vst [vmem:[#allocation2 + $0xe0] sm:$0xff] %v198
  %344 = vst [vmem:[#allocation2 + $0xe8] sm:$0xff] %v200
  %345 = vst [vmem:[#allocation2 + $0xf0] sm:$0xff] %v311
  %346 = vst [vmem:[#allocation2 + $0xf8] sm:$0xff] %v313
  %v347 = vld [vmem:[#allocation2] sm:$0xff]
  %v348 = vld [vmem:[#allocation2 + $0x8] sm:$0xff]
  %v349 = vld [vmem:[#allocation2 + $0x10] sm:$0xff]
  %v350 = vld [vmem:[#allocation2 + $0x18] sm:$0xff]
  %v351 = vld [vmem:[%s2] sm:$0xff]
  %v352 = vld [vmem:[%s2 + $0x8] sm:$0xff]
  %v353 = vld [vmem:[%s2 + $0x10] sm:$0xff]
  %v354 = vld [vmem:[%s2 + $0x18] sm:$0xff]
  %v355 = vld [vmem:[%s2 + $0x20] sm:$0xff]
  %v356 = vld [vmem:[%s2 + $0x28] sm:$0xff]
  %v357 = vld [vmem:[%s2 + $0x30] sm:$0xff]
  %v358 = vld [vmem:[%s2 + $0x38] sm:$0xff]
  %v359 = vld [vmem:[%s2 + $0x40] sm:$0xff]
  %v360 = vld [vmem:[%s2 + $0x48] sm:$0xff]
  %v361 = vld [vmem:[%s2 + $0x50] sm:$0xff]
  %v362 = vld [vmem:[%s2 + $0x58] sm:$0xff]
  %v363 = vld [vmem:[%s2 + $0x60] sm:$0xff]
  %v364 = vld [vmem:[%s2 + $0x68] sm:$0xff]
  %v365 = vld [vmem:[%s2 + $0x70] sm:$0xff]
  %v366 = vld [vmem:[%s2 + $0x78] sm:$0xff]
  %v367 = vld [vmem:[%s2 + $0x80] sm:$0xff]
  %v368 = vld [vmem:[%s2 + $0x88] sm:$0xff]
  %v369 = vld [vmem:[%s2 + $0x90] sm:$0xff]
  %v370 = vld [vmem:[%s2 + $0x98] sm:$0xff]
  %v371 = vld [vmem:[%s2 + $0xa0] sm:$0xff]
  %v372 = vld [vmem:[%s2 + $0xa8] sm:$0xff]
  %v373 = vld [vmem:[%s2 + $0xb0] sm:$0xff]
  %v374 = vld [vmem:[%s2 + $0xb8] sm:$0xff]
  %v375 = vld [vmem:[%s2 + $0xc0] sm:$0xff]
  %v376 = vld [vmem:[%s2 + $0xc8] sm:$0xff]
  %v377 = vld [vmem:[%s2 + $0xd0] sm:$0xff]
  %v378 = vld [vmem:[%s2 + $0xd8] sm:$0xff]
  %v379 = vld [vmem:[%s2 + $0xe0] sm:$0xff]
  %v380 = vld [vmem:[%s2 + $0xe8] sm:$0xff]
  %v381 = vld [vmem:[%s2 + $0xf0] sm:$0xff]
  %v382 = vld [vmem:[%s2 + $0xf8] sm:$0xff]
  %v383 = vld [vmem:[%s2 + $0x100] sm:$0xff]
  %v384 = vld [vmem:[%s2 + $0x108] sm:$0xff]
  %v385 = vld [vmem:[%s2 + $0x110] sm:$0xff]
  %v386 = vld [vmem:[%s2 + $0x118] sm:$0xff]
  %v387 = vld [vmem:[%s2 + $0x120] sm:$0xff]
  %v388 = vld [vmem:[%s2 + $0x128] sm:$0xff]
  %v389 = vld [vmem:[%s2 + $0x130] sm:$0xff]
  %v390 = vld [vmem:[%s2 + $0x138] sm:$0xff]
  %v391 = vld [vmem:[%s2 + $0x140] sm:$0xff]
  %v392 = vld [vmem:[%s2 + $0x148] sm:$0xff]
  %v393 = vld [vmem:[%s2 + $0x150] sm:$0xff]
  %v394 = vld [vmem:[%s2 + $0x158] sm:$0xff]
  %v395 = vld [vmem:[%s2 + $0x160] sm:$0xff]
  %v396 = vld [vmem:[%s2 + $0x168] sm:$0xff]
  %v397 = vld [vmem:[%s2 + $0x170] sm:$0xff]
  %v398 = vld [vmem:[%s2 + $0x178] sm:$0xff]
  %v399 = vld [vmem:[%s2 + $0x180] sm:$0xff]
  %v400 = vld [vmem:[%s2 + $0x188] sm:$0xff]
  %v401 = vld [vmem:[%s2 + $0x190] sm:$0xff]
  %v402 = vld [vmem:[%s2 + $0x198] sm:$0xff]
  %v403 = vld [vmem:[%s2 + $0x1a0] sm:$0xff]
  %v404 = vld [vmem:[%s2 + $0x1a8] sm:$0xff]
  %v405 = vld [vmem:[%s2 + $0x1b0] sm:$0xff]
  %v406 = vld [vmem:[%s2 + $0x1b8] sm:$0xff]
  %v407 = vld [vmem:[%s2 + $0x1c0] sm:$0xff]
  %v408 = vld [vmem:[%s2 + $0x1c8] sm:$0xff]
  %v409 = vld [vmem:[%s2 + $0x1d0] sm:$0xff]
  %v410 = vld [vmem:[%s2 + $0x1d8] sm:$0xff]
  %v411 = vld [vmem:[%s2 + $0x1e0] sm:$0xff]
  %v412 = vld [vmem:[%s2 + $0x1e8] sm:$0xff]
  %v413 = vld [vmem:[%s2 + $0x1f0] sm:$0xff]
  %v414 = vld [vmem:[%s2 + $0x1f8] sm:$0xff]
  %415 = vmatprep.subr.mxu0 %v352
  %416 = vmatpush1.msra.mxu0 %v351
  %417 = vmatprep.subr.mxu0 %v356
  %418 = vmatpush1.msra.mxu0 %v355
  %419 = vmatprep.subr.mxu0 %v360
  %420 = vmatpush1.msra.mxu0 %v359
  %421 = vmatprep.subr.mxu0 %v364
  %422 = vmatpush1.msra.mxu0 %v363
  %423 = vmatprep.subr.mxu0 %v368
  %424 = vmatpush1.msra.mxu0 %v367
  %425 = vmatprep.subr.mxu0 %v372
  %426 = vmatpush1.msra.mxu0 %v371
  %427 = vmatprep.subr.mxu0 %v376
  %428 = vmatpush1.msra.mxu0 %v375
  %429 = vmatprep.subr.mxu0 %v380
  %430 = vmatpush1.msra.mxu0 %v379
  %431 = vmatprep.subr.mxu0 %v384
  %432 = vmatpush1.msra.mxu0 %v383
  %433 = vmatprep.subr.mxu0 %v388
  %434 = vmatpush1.msra.mxu0 %v387
  %435 = vmatprep.subr.mxu0 %v392
  %436 = vmatpush1.msra.mxu0 %v391
  %437 = vmatprep.subr.mxu0 %v396
  %438 = vmatpush1.msra.mxu0 %v395
  %439 = vmatprep.subr.mxu0 %v400
  %440 = vmatpush1.msra.mxu0 %v399
  %441 = vmatprep.subr.mxu0 %v404
  %442 = vmatpush1.msra.mxu0 %v403
  %443 = vmatprep.subr.mxu0 %v408
  %444 = vmatpush1.msra.mxu0 %v407
  %445 = vmatprep.subr.mxu0 %v412
  %446 = vmatpush1.msra.mxu0 %v411
  %447 = vmatprep.subr.mxu0 0.0
  %448 = vmatpush1.msra.mxu0 0.0
  %449 = vmatprep.subr.mxu0 0.0
  %450 = vmatpush1.msra.mxu0 0.0
  %451 = vmatprep.subr.mxu0 0.0
  %452 = vmatpush1.msra.mxu0 0.0
  %453 = vmatprep.subr.mxu0 0.0
  %454 = vmatpush1.msra.mxu0 0.0
  %455 = vmatprep.subr.mxu0 0.0
  %456 = vmatpush1.msra.mxu0 0.0
  %457 = vmatprep.subr.mxu0 0.0
  %458 = vmatpush1.msra.mxu0 0.0
  %459 = vmatprep.subr.mxu0 0.0
  %460 = vmatpush1.msra.mxu0 0.0
  %461 = vmatprep.subr.mxu0 0.0
  %462 = vmatpush1.msra.mxu0 0.0
  %463 = vmatprep.subr.mxu0 0.0
  %464 = vmatpush1.msra.mxu0 0.0
  %465 = vmatprep.subr.mxu0 0.0
  %466 = vmatpush1.msra.mxu0 0.0
  %467 = vmatprep.subr.mxu0 0.0
  %468 = vmatpush1.msra.mxu0 0.0
  %469 = vmatprep.subr.mxu0 0.0
  %470 = vmatpush1.msra.mxu0 0.0
  %471 = vmatprep.subr.mxu0 0.0
  %472 = vmatpush1.msra.mxu0 0.0
  %473 = vmatprep.subr.mxu0 0.0
  %474 = vmatpush1.msra.mxu0 0.0
  %475 = vmatprep.subr.mxu0 0.0
  %476 = vmatpush1.msra.mxu0 0.0
  %477 = vmatprep.subr.mxu0 0.0
  %478 = vmatpush1.msra.mxu0 0.0
  %479 = vmatprep.mubr.f32.mxu0 0.0
  %480 = vmatmul.mubr.f32.gmra.mrb[0].mxu0 0.0
  %v481 = vpop.f32.mrb[0].mxu0
  %v482 = vadd.f32 0.0, %v481
  %v483 = vpop.f32.mrb[0].mxu0
  %v484 = vadd.f32 0.0, %v483
  %485 = vdwg.mxu0
  %486 = vmatprep.subr.mxu0 %v354
  %487 = vmatpush1.msra.mxu0 %v353
  %488 = vmatprep.subr.mxu0 %v358
  %489 = vmatpush1.msra.mxu0 %v357
  %490 = vmatprep.subr.mxu0 %v362
  %491 = vmatpush1.msra.mxu0 %v361
  %492 = vmatprep.subr.mxu0 %v366
  %493 = vmatpush1.msra.mxu0 %v365
  %494 = vmatprep.subr.mxu0 %v370
  %495 = vmatpush1.msra.mxu0 %v369
  %496 = vmatprep.subr.mxu0 %v374
  %497 = vmatpush1.msra.mxu0 %v373
  %498 = vmatprep.subr.mxu0 %v378
  %499 = vmatpush1.msra.mxu0 %v377
  %500 = vmatprep.subr.mxu0 %v382
  %501 = vmatpush1.msra.mxu0 %v381
  %502 = vmatprep.subr.mxu0 %v386
  %503 = vmatpush1.msra.mxu0 %v385
  %504 = vmatprep.subr.mxu0 %v390
  %505 = vmatpush1.msra.mxu0 %v389
  %506 = vmatprep.subr.mxu0 %v394
  %507 = vmatpush1.msra.mxu0 %v393
  %508 = vmatprep.subr.mxu0 %v398
  %509 = vmatpush1.msra.mxu0 %v397
  %510 = vmatprep.subr.mxu0 %v402
  %511 = vmatpush1.msra.mxu0 %v401
  %512 = vmatprep.subr.mxu0 %v406
  %513 = vmatpush1.msra.mxu0 %v405
  %514 = vmatprep.subr.mxu0 %v410
  %515 = vmatpush1.msra.mxu0 %v409
  %516 = vmatprep.subr.mxu0 %v414
  %517 = vmatpush1.msra.mxu0 %v413
  %518 = vmatprep.subr.mxu0 0.0
  %519 = vmatpush1.msra.mxu0 0.0
  %520 = vmatprep.subr.mxu0 0.0
  %521 = vmatpush1.msra.mxu0 0.0
  %522 = vmatprep.subr.mxu0 0.0
  %523 = vmatpush1.msra.mxu0 0.0
  %524 = vmatprep.subr.mxu0 0.0
  %525 = vmatpush1.msra.mxu0 0.0
  %526 = vmatprep.subr.mxu0 0.0
  %527 = vmatpush1.msra.mxu0 0.0
  %528 = vmatprep.subr.mxu0 0.0
  %529 = vmatpush1.msra.mxu0 0.0
  %530 = vmatprep.subr.mxu0 0.0
  %531 = vmatpush1.msra.mxu0 0.0
  %532 = vmatprep.subr.mxu0 0.0
  %533 = vmatpush1.msra.mxu0 0.0
  %534 = vmatprep.subr.mxu0 0.0
  %535 = vmatpush1.msra.mxu0 0.0
  %536 = vmatprep.subr.mxu0 0.0
  %537 = vmatpush1.msra.mxu0 0.0
  %538 = vmatprep.subr.mxu0 0.0
  %539 = vmatpush1.msra.mxu0 0.0
  %540 = vmatprep.subr.mxu0 0.0
  %541 = vmatpush1.msra.mxu0 0.0
  %542 = vmatprep.subr.mxu0 0.0
  %543 = vmatpush1.msra.mxu0 0.0
  %544 = vmatprep.subr.mxu0 0.0
  %545 = vmatpush1.msra.mxu0 0.0
  %546 = vmatprep.subr.mxu0 0.0
  %547 = vmatpush1.msra.mxu0 0.0
  %548 = vmatprep.subr.mxu0 0.0
  %549 = vmatpush1.msra.mxu0 0.0
  %550 = vmatprep.mubr.f32.mxu0 0.0
  %551 = vmatmul.mubr.f32.gmra.mrb[0].mxu0 0.0
  %v552 = vpop.f32.mrb[0].mxu0
  %v553 = vadd.f32 0.0, %v552
  %v554 = vpop.f32.mrb[0].mxu0
  %v555 = vadd.f32 0.0, %v554
  %556 = vdwg.mxu0
  %v557 = vadd.f32 %v347, %v482
  %v558 = vadd.f32 %v348, %v484
  %v559 = vadd.f32 %v349, %v553
  %v560 = vadd.f32 %v350, %v555
  %v561 = vxor.u32 %v557, 2147483648
  %v562 = vmul.f32 %v561, 1.442695
  %v563 = vpow.pop %v562
  %v564 = vadd.f32 %v563, 1.0
  %v565 = vrcp.pop %v564
  %v566 = vmul.f32 1.0, %v565
  %v567 = vxor.u32 %v558, 2147483648
  %v568 = vmul.f32 %v567, 1.442695
  %v569 = vpow.pop %v568
  %v570 = vadd.f32 %v569, 1.0
  %v571 = vrcp.pop %v570
  %v572 = vmul.f32 1.0, %v571
  %v573 = vtanh.pop %v559
  %v574 = vxor.u32 %v560, 2147483648
  %v575 = vmul.f32 %v574, 1.442695
  %v576 = vpow.pop %v575
  %v577 = vadd.f32 %v576, 1.0
  %v578 = vrcp.pop %v577
  %v579 = vmul.f32 1.0, %v578
  %v580 = vmul.f32 %v572, 0.0
  %v581 = vmul.f32 %v566, %v573
  %v582 = vadd.f32 %v580, %v581
  %v583 = vtanh.pop %v582
  %v584 = vmul.f32 %v579, %v583
  %v585 = vld [vmem:[%s4] sm:$0xff]
  %v586 = vld [vmem:[%s4 + $0x8] sm:$0xff]
  %v587 = vld [vmem:[%s4 + $0x10] sm:$0xff]
  %v588 = vld [vmem:[%s4 + $0x18] sm:$0xff]
  %v589 = vld [vmem:[%s4 + $0x20] sm:$0xff]
  %v590 = vld [vmem:[%s4 + $0x28] sm:$0xff]
  %v591 = vld [vmem:[%s4 + $0x30] sm:$0xff]
  %v592 = vld [vmem:[%s4 + $0x38] sm:$0xff]
  %v593 = vld [vmem:[%s4 + $0x40] sm:$0xff]
  %v594 = vld [vmem:[%s4 + $0x48] sm:$0xff]
  %v595 = vld [vmem:[%s4 + $0x50] sm:$0xff]
  %v596 = vld [vmem:[%s4 + $0x58] sm:$0xff]
  %v597 = vld [vmem:[%s4 + $0x60] sm:$0xff]
  %v598 = vld [vmem:[%s4 + $0x68] sm:$0xff]
  %v599 = vld [vmem:[%s4 + $0x70] sm:$0xff]
  %v600 = vld [vmem:[%s4 + $0x78] sm:$0xff]
  %v601 = vld [vmem:[%s6] sm:$0x1]
  %v603 = vlaneseq
  %v604 = vshrl.u32 %v603, 7
  %v605 = vsub.s32 0, %v604
  %v606 = vrot.slane %v601, %v605
  %608 = vmatprep.subr.mxu0 0.0
  %609 = vmatpush1.msra.mxu0 %v585
  %610 = vmatprep.subr.mxu0 0.0
  %611 = vmatpush1.msra.mxu0 %v586
  %612 = vmatprep.subr.mxu0 0.0
  %613 = vmatpush1.msra.mxu0 %v587
  %614 = vmatprep.subr.mxu0 0.0
  %615 = vmatpush1.msra.mxu0 %v588
  %616 = vmatprep.subr.mxu0 0.0
  %617 = vmatpush1.msra.mxu0 %v589
  %618 = vmatprep.subr.mxu0 0.0
  %619 = vmatpush1.msra.mxu0 %v590
  %620 = vmatprep.subr.mxu0 0.0
  %621 = vmatpush1.msra.mxu0 %v591
  %622 = vmatprep.subr.mxu0 0.0
  %623 = vmatpush1.msra.mxu0 %v592
  %624 = vmatprep.subr.mxu0 0.0
  %625 = vmatpush1.msra.mxu0 %v593
  %626 = vmatprep.subr.mxu0 0.0
  %627 = vmatpush1.msra.mxu0 %v594
  %628 = vmatprep.subr.mxu0 0.0
  %629 = vmatpush1.msra.mxu0 %v595
  %630 = vmatprep.subr.mxu0 0.0
  %631 = vmatpush1.msra.mxu0 %v596
  %632 = vmatprep.subr.mxu0 0.0
  %633 = vmatpush1.msra.mxu0 %v597
  %634 = vmatprep.subr.mxu0 0.0
  %635 = vmatpush1.msra.mxu0 %v598
  %636 = vmatprep.subr.mxu0 0.0
  %637 = vmatpush1.msra.mxu0 %v599
  %638 = vmatprep.subr.mxu0 0.0
  %639 = vmatpush1.msra.mxu0 %v600
  %640 = vmatprep.subr.mxu0 0.0
  %641 = vmatpush1.msra.mxu0 0.0
  %642 = vmatprep.subr.mxu0 0.0
  %643 = vmatpush1.msra.mxu0 0.0
  %644 = vmatprep.subr.mxu0 0.0
  %645 = vmatpush1.msra.mxu0 0.0
  %646 = vmatprep.subr.mxu0 0.0
  %647 = vmatpush1.msra.mxu0 0.0
  %648 = vmatprep.subr.mxu0 0.0
  %649 = vmatpush1.msra.mxu0 0.0
  %650 = vmatprep.subr.mxu0 0.0
  %651 = vmatpush1.msra.mxu0 0.0
  %652 = vmatprep.subr.mxu0 0.0
  %653 = vmatpush1.msra.mxu0 0.0
  %654 = vmatprep.subr.mxu0 0.0
  %655 = vmatpush1.msra.mxu0 0.0
  %656 = vmatprep.subr.mxu0 0.0
  %657 = vmatpush1.msra.mxu0 0.0
  %658 = vmatprep.subr.mxu0 0.0
  %659 = vmatpush1.msra.mxu0 0.0
  %660 = vmatprep.subr.mxu0 0.0
  %661 = vmatpush1.msra.mxu0 0.0
  %662 = vmatprep.subr.mxu0 0.0
  %663 = vmatpush1.msra.mxu0 0.0
  %664 = vmatprep.subr.mxu0 0.0
  %665 = vmatpush1.msra.mxu0 0.0
  %666 = vmatprep.subr.mxu0 0.0
  %667 = vmatpush1.msra.mxu0 0.0
  %668 = vmatprep.subr.mxu0 0.0
  %669 = vmatpush1.msra.mxu0 0.0
  %670 = vmatprep.subr.mxu0 0.0
  %671 = vmatpush1.msra.mxu0 0.0
  %672 = vmatprep.mubr.f32.mxu0 0.0
  %673 = vmatmul.mubr.f32.gmra.mrb[0].mxu0 %v584
  %v674 = vpop.f32.mrb[0].mxu0
  %v675 = vadd.f32 %v606, %v674
  %v676 = vpop.f32.mrb[0].mxu0
  %677 = vdwg.mxu0
  %v678 = vld [vmem:[%s5] sm:$0x1]
  %v680 = vlaneseq
  %v681 = vshrl.u32 %v680, 7
  %v682 = vsub.s32 0, %v681
  %v683 = vrot.slane %v678, %v682
  %v685 = vmul.f32 %v683, 0.0
  %v686 = vadd.f32 %v675, %v685
  %v687 = vxor.u32 %v686, 2147483648
  %v688 = vmul.f32 %v687, 1.442695
  %v689 = vpow.pop %v688
  %v690 = vadd.f32 %v689, 1.0
  %v691 = vrcp.pop %v690
  %v692 = vmul.f32 1.0, %v691
  %v693 = vtanh.pop %v686
  %v694 = vmul.f32 %v692, 0.0
  %696 = vrot.lane.b32.xlu0 %v693, 126
  %v697 = vpop.permute.xlu0 %696
  %v699 = vmul.f32 %v692, %v697
  %701 = vrot.lane.b32.xlu0 %v699, 1
  %v702 = vpop.permute.xlu0 %701
  %v704 = vadd.f32 %v694, %v702
  %v705 = vtanh.pop %v704
  %707 = vrot.lane.b32.xlu0 %v705, 2
  %v708 = vpop.permute.xlu0 %707
  %v710 = vmul.f32 %v692, %v708
  %712 = vrot.lane.b32.xlu0 %v710, 125
  %v713 = vpop.permute.xlu0 %712
  %vm715 = vcmask 7168
  %716 = vst.msk [vmem:[%s7] sm:$0xff] %vm715, %v713
  %s717 = scalar_lea.vmem [#allocation2], 32
  %v718 = vld [vmem:[%s717] sm:$0xff]
  %v719 = vld [vmem:[%s717 + $0x8] sm:$0xff]
  %v720 = vld [vmem:[%s717 + $0x10] sm:$0xff]
  %v721 = vld [vmem:[%s717 + $0x18] sm:$0xff]
  %v722 = vld [vmem:[%s2] sm:$0xff]
  %v723 = vld [vmem:[%s2 + $0x8] sm:$0xff]
  %v724 = vld [vmem:[%s2 + $0x10] sm:$0xff]
  %v725 = vld [vmem:[%s2 + $0x18] sm:$0xff]
  %v726 = vld [vmem:[%s2 + $0x20] sm:$0xff]
  %v727 = vld [vmem:[%s2 + $0x28] sm:$0xff]
  %v728 = vld [vmem:[%s2 + $0x30] sm:$0xff]
  %v729 = vld [vmem:[%s2 + $0x38] sm:$0xff]
  %v730 = vld [vmem:[%s2 + $0x40] sm:$0xff]
  %v731 = vld [vmem:[%s2 + $0x48] sm:$0xff]
  %v732 = vld [vmem:[%s2 + $0x50] sm:$0xff]
  %v733 = vld [vmem:[%s2 + $0x58] sm:$0xff]
  %v734 = vld [vmem:[%s2 + $0x60] sm:$0xff]
  %v735 = vld [vmem:[%s2 + $0x68] sm:$0xff]
  %v736 = vld [vmem:[%s2 + $0x70] sm:$0xff]
  %v737 = vld [vmem:[%s2 + $0x78] sm:$0xff]
  %v738 = vld [vmem:[%s2 + $0x80] sm:$0xff]
  %v739 = vld [vmem:[%s2 + $0x88] sm:$0xff]
  %v740 = vld [vmem:[%s2 + $0x90] sm:$0xff]
  %v741 = vld [vmem:[%s2 + $0x98] sm:$0xff]
  %v742 = vld [vmem:[%s2 + $0xa0] sm:$0xff]
  %v743 = vld [vmem:[%s2 + $0xa8] sm:$0xff]
  %v744 = vld [vmem:[%s2 + $0xb0] sm:$0xff]
  %v745 = vld [vmem:[%s2 + $0xb8] sm:$0xff]
  %v746 = vld [vmem:[%s2 + $0xc0] sm:$0xff]
  %v747 = vld [vmem:[%s2 + $0xc8] sm:$0xff]
  %v748 = vld [vmem:[%s2 + $0xd0] sm:$0xff]
  %v749 = vld [vmem:[%s2 + $0xd8] sm:$0xff]
  %v750 = vld [vmem:[%s2 + $0xe0] sm:$0xff]
  %v751 = vld [vmem:[%s2 + $0xe8] sm:$0xff]
  %v752 = vld [vmem:[%s2 + $0xf0] sm:$0xff]
  %v753 = vld [vmem:[%s2 + $0xf8] sm:$0xff]
  %v754 = vld [vmem:[%s2 + $0x100] sm:$0xff]
  %v755 = vld [vmem:[%s2 + $0x108] sm:$0xff]
  %v756 = vld [vmem:[%s2 + $0x110] sm:$0xff]
  %v757 = vld [vmem:[%s2 + $0x118] sm:$0xff]
  %v758 = vld [vmem:[%s2 + $0x120] sm:$0xff]
  %v759 = vld [vmem:[%s2 + $0x128] sm:$0xff]
  %v760 = vld [vmem:[%s2 + $0x130] sm:$0xff]
  %v761 = vld [vmem:[%s2 + $0x138] sm:$0xff]
  %v762 = vld [vmem:[%s2 + $0x140] sm:$0xff]
  %v763 = vld [vmem:[%s2 + $0x148] sm:$0xff]
  %v764 = vld [vmem:[%s2 + $0x150] sm:$0xff]
  %v765 = vld [vmem:[%s2 + $0x158] sm:$0xff]
  %v766 = vld [vmem:[%s2 + $0x160] sm:$0xff]
  %v767 = vld [vmem:[%s2 + $0x168] sm:$0xff]
  %v768 = vld [vmem:[%s2 + $0x170] sm:$0xff]
  %v769 = vld [vmem:[%s2 + $0x178] sm:$0xff]
  %v770 = vld [vmem:[%s2 + $0x180] sm:$0xff]
  %v771 = vld [vmem:[%s2 + $0x188] sm:$0xff]
  %v772 = vld [vmem:[%s2 + $0x190] sm:$0xff]
  %v773 = vld [vmem:[%s2 + $0x198] sm:$0xff]
  %v774 = vld [vmem:[%s2 + $0x1a0] sm:$0xff]
  %v775 = vld [vmem:[%s2 + $0x1a8] sm:$0xff]
  %v776 = vld [vmem:[%s2 + $0x1b0] sm:$0xff]
  %v777 = vld [vmem:[%s2 + $0x1b8] sm:$0xff]
  %v778 = vld [vmem:[%s2 + $0x1c0] sm:$0xff]
  %v779 = vld [vmem:[%s2 + $0x1c8] sm:$0xff]
  %v780 = vld [vmem:[%s2 + $0x1d0] sm:$0xff]
  %v781 = vld [vmem:[%s2 + $0x1d8] sm:$0xff]
  %v782 = vld [vmem:[%s2 + $0x1e0] sm:$0xff]
  %v783 = vld [vmem:[%s2 + $0x1e8] sm:$0xff]
  %v784 = vld [vmem:[%s2 + $0x1f0] sm:$0xff]
  %v785 = vld [vmem:[%s2 + $0x1f8] sm:$0xff]
  %786 = vmatprep.subr.mxu0 %v723
  %787 = vmatpush1.msra.mxu0 %v722
  %788 = vmatprep.subr.mxu0 %v727
  %789 = vmatpush1.msra.mxu0 %v726
  %790 = vmatprep.subr.mxu0 %v731
  %791 = vmatpush1.msra.mxu0 %v730
  %792 = vmatprep.subr.mxu0 %v735
  %793 = vmatpush1.msra.mxu0 %v734
  %794 = vmatprep.subr.mxu0 %v739
  %795 = vmatpush1.msra.mxu0 %v738
  %796 = vmatprep.subr.mxu0 %v743
  %797 = vmatpush1.msra.mxu0 %v742
  %798 = vmatprep.subr.mxu0 %v747
  %799 = vmatpush1.msra.mxu0 %v746
  %800 = vmatprep.subr.mxu0 %v751
  %801 = vmatpush1.msra.mxu0 %v750
  %802 = vmatprep.subr.mxu0 %v755
  %803 = vmatpush1.msra.mxu0 %v754
  %804 = vmatprep.subr.mxu0 %v759
  %805 = vmatpush1.msra.mxu0 %v758
  %806 = vmatprep.subr.mxu0 %v763
  %807 = vmatpush1.msra.mxu0 %v762
  %808 = vmatprep.subr.mxu0 %v767
  %809 = vmatpush1.msra.mxu0 %v766
  %810 = vmatprep.subr.mxu0 %v771
  %811 = vmatpush1.msra.mxu0 %v770
  %812 = vmatprep.subr.mxu0 %v775
  %813 = vmatpush1.msra.mxu0 %v774
  %814 = vmatprep.subr.mxu0 %v779
  %815 = vmatpush1.msra.mxu0 %v778
  %816 = vmatprep.subr.mxu0 %v783
  %817 = vmatpush1.msra.mxu0 %v782
  %818 = vmatprep.subr.mxu0 0.0
  %819 = vmatpush1.msra.mxu0 0.0
  %820 = vmatprep.subr.mxu0 0.0
  %821 = vmatpush1.msra.mxu0 0.0
  %822 = vmatprep.subr.mxu0 0.0
  %823 = vmatpush1.msra.mxu0 0.0
  %824 = vmatprep.subr.mxu0 0.0
  %825 = vmatpush1.msra.mxu0 0.0
  %826 = vmatprep.subr.mxu0 0.0
  %827 = vmatpush1.msra.mxu0 0.0
  %828 = vmatprep.subr.mxu0 0.0
  %829 = vmatpush1.msra.mxu0 0.0
  %830 = vmatprep.subr.mxu0 0.0
  %831 = vmatpush1.msra.mxu0 0.0
  %832 = vmatprep.subr.mxu0 0.0
  %833 = vmatpush1.msra.mxu0 0.0
  %834 = vmatprep.subr.mxu0 0.0
  %835 = vmatpush1.msra.mxu0 0.0
  %836 = vmatprep.subr.mxu0 0.0
  %837 = vmatpush1.msra.mxu0 0.0
  %838 = vmatprep.subr.mxu0 0.0
  %839 = vmatpush1.msra.mxu0 0.0
  %840 = vmatprep.subr.mxu0 0.0
  %841 = vmatpush1.msra.mxu0 0.0
  %842 = vmatprep.subr.mxu0 0.0
  %843 = vmatpush1.msra.mxu0 0.0
  %844 = vmatprep.subr.mxu0 0.0
  %845 = vmatpush1.msra.mxu0 0.0
  %846 = vmatprep.subr.mxu0 0.0
  %847 = vmatpush1.msra.mxu0 0.0
  %848 = vmatprep.subr.mxu0 0.0
  %849 = vmatpush1.msra.mxu0 0.0
  %850 = vmatprep.mubr.f32.mxu0 0.0
  %851 = vmatmul.mubr.f32.gmra.mrb[0].mxu0 %v584
  %v852 = vpop.f32.mrb[0].mxu0
  %v853 = vadd.f32 0.0, %v852
  %v854 = vpop.f32.mrb[0].mxu0
  %v855 = vadd.f32 0.0, %v854
  %856 = vdwg.mxu0
  %857 = vmatprep.subr.mxu0 %v725
  %858 = vmatpush1.msra.mxu0 %v724
  %859 = vmatprep.subr.mxu0 %v729
  %860 = vmatpush1.msra.mxu0 %v728
  %861 = vmatprep.subr.mxu0 %v733
  %862 = vmatpush1.msra.mxu0 %v732
  %863 = vmatprep.subr.mxu0 %v737
  %864 = vmatpush1.msra.mxu0 %v736
  %865 = vmatprep.subr.mxu0 %v741
  %866 = vmatpush1.msra.mxu0 %v740
  %867 = vmatprep.subr.mxu0 %v745
  %868 = vmatpush1.msra.mxu0 %v744
  %869 = vmatprep.subr.mxu0 %v749
  %870 = vmatpush1.msra.mxu0 %v748
  %871 = vmatprep.subr.mxu0 %v753
  %872 = vmatpush1.msra.mxu0 %v752
  %873 = vmatprep.subr.mxu0 %v757
  %874 = vmatpush1.msra.mxu0 %v756
  %875 = vmatprep.subr.mxu0 %v761
  %876 = vmatpush1.msra.mxu0 %v760
  %877 = vmatprep.subr.mxu0 %v765
  %878 = vmatpush1.msra.mxu0 %v764
  %879 = vmatprep.subr.mxu0 %v769
  %880 = vmatpush1.msra.mxu0 %v768
  %881 = vmatprep.subr.mxu0 %v773
  %882 = vmatpush1.msra.mxu0 %v772
  %883 = vmatprep.subr.mxu0 %v777
  %884 = vmatpush1.msra.mxu0 %v776
  %885 = vmatprep.subr.mxu0 %v781
  %886 = vmatpush1.msra.mxu0 %v780
  %887 = vmatprep.subr.mxu0 %v785
  %888 = vmatpush1.msra.mxu0 %v784
  %889 = vmatprep.subr.mxu0 0.0
  %890 = vmatpush1.msra.mxu0 0.0
  %891 = vmatprep.subr.mxu0 0.0
  %892 = vmatpush1.msra.mxu0 0.0
  %893 = vmatprep.subr.mxu0 0.0
  %894 = vmatpush1.msra.mxu0 0.0
  %895 = vmatprep.subr.mxu0 0.0
  %896 = vmatpush1.msra.mxu0 0.0
  %897 = vmatprep.subr.mxu0 0.0
  %898 = vmatpush1.msra.mxu0 0.0
  %899 = vmatprep.subr.mxu0 0.0
  %900 = vmatpush1.msra.mxu0 0.0
  %901 = vmatprep.subr.mxu0 0.0
  %902 = vmatpush1.msra.mxu0 0.0
  %903 = vmatprep.subr.mxu0 0.0
  %904 = vmatpush1.msra.mxu0 0.0
  %905 = vmatprep.subr.mxu0 0.0
  %906 = vmatpush1.msra.mxu0 0.0
  %907 = vmatprep.subr.mxu0 0.0
  %908 = vmatpush1.msra.mxu0 0.0
  %909 = vmatprep.subr.mxu0 0.0
  %910 = vmatpush1.msra.mxu0 0.0
  %911 = vmatprep.subr.mxu0 0.0
  %912 = vmatpush1.msra.mxu0 0.0
  %913 = vmatprep.subr.mxu0 0.0
  %914 = vmatpush1.msra.mxu0 0.0
  %915 = vmatprep.subr.mxu0 0.0
  %916 = vmatpush1.msra.mxu0 0.0
  %917 = vmatprep.subr.mxu0 0.0
  %918 = vmatpush1.msra.mxu0 0.0
  %919 = vmatprep.subr.mxu0 0.0
  %920 = vmatpush1.msra.mxu0 0.0
  %921 = vmatprep.mubr.f32.mxu0 0.0
  %922 = vmatmul.mubr.f32.gmra.mrb[0].mxu0 %v584
  %v923 = vpop.f32.mrb[0].mxu0
  %v924 = vadd.f32 0.0, %v923
  %v925 = vpop.f32.mrb[0].mxu0
  %v926 = vadd.f32 0.0, %v925
  %927 = vdwg.mxu0
  %v928 = vadd.f32 %v718, %v853
  %v929 = vadd.f32 %v719, %v855
  %v930 = vadd.f32 %v720, %v924
  %v931 = vadd.f32 %v721, %v926
  %v932 = vxor.u32 %v928, 2147483648
  %v933 = vmul.f32 %v932, 1.442695
  %v934 = vpow.pop %v933
  %v935 = vadd.f32 %v934, 1.0
  %v936 = vrcp.pop %v935
  %v937 = vmul.f32 1.0, %v936
  %v938 = vxor.u32 %v929, 2147483648
  %v939 = vmul.f32 %v938, 1.442695
  %v940 = vpow.pop %v939
  %v941 = vadd.f32 %v940, 1.0
  %v942 = vrcp.pop %v941
  %v943 = vmul.f32 1.0, %v942
  %v944 = vtanh.pop %v930
  %v945 = vxor.u32 %v931, 2147483648
  %v946 = vmul.f32 %v945, 1.442695
  %v947 = vpow.pop %v946
  %v948 = vadd.f32 %v947, 1.0
  %v949 = vrcp.pop %v948
  %v950 = vmul.f32 1.0, %v949
  %v951 = vmul.f32 %v943, %v582
  %v952 = vmul.f32 %v937, %v944
  %v953 = vadd.f32 %v951, %v952
  %v954 = vtanh.pop %v953
  %v955 = vmul.f32 %v950, %v954
  %v956 = vld [vmem:[%s4] sm:$0xff]
  %v957 = vld [vmem:[%s4 + $0x8] sm:$0xff]
  %v958 = vld [vmem:[%s4 + $0x10] sm:$0xff]
  %v959 = vld [vmem:[%s4 + $0x18] sm:$0xff]
  %v960 = vld [vmem:[%s4 + $0x20] sm:$0xff]
  %v961 = vld [vmem:[%s4 + $0x28] sm:$0xff]
  %v962 = vld [vmem:[%s4 + $0x30] sm:$0xff]
  %v963 = vld [vmem:[%s4 + $0x38] sm:$0xff]
  %v964 = vld [vmem:[%s4 + $0x40] sm:$0xff]
  %v965 = vld [vmem:[%s4 + $0x48] sm:$0xff]
  %v966 = vld [vmem:[%s4 + $0x50] sm:$0xff]
  %v967 = vld [vmem:[%s4 + $0x58] sm:$0xff]
  %v968 = vld [vmem:[%s4 + $0x60] sm:$0xff]
  %v969 = vld [vmem:[%s4 + $0x68] sm:$0xff]
  %v970 = vld [vmem:[%s4 + $0x70] sm:$0xff]
  %v971 = vld [vmem:[%s4 + $0x78] sm:$0xff]
  %v972 = vld [vmem:[%s6] sm:$0x1]
  %v974 = vlaneseq
  %v975 = vshrl.u32 %v974, 7
  %v976 = vsub.s32 0, %v975
  %v977 = vrot.slane %v972, %v976
  %979 = vmatprep.subr.mxu0 0.0
  %980 = vmatpush1.msra.mxu0 %v956
  %981 = vmatprep.subr.mxu0 0.0
  %982 = vmatpush1.msra.mxu0 %v957
  %983 = vmatprep.subr.mxu0 0.0
  %984 = vmatpush1.msra.mxu0 %v958
  %985 = vmatprep.subr.mxu0 0.0
  %986 = vmatpush1.msra.mxu0 %v959
  %987 = vmatprep.subr.mxu0 0.0
  %988 = vmatpush1.msra.mxu0 %v960
  %989 = vmatprep.subr.mxu0 0.0
  %990 = vmatpush1.msra.mxu0 %v961
  %991 = vmatprep.subr.mxu0 0.0
  %992 = vmatpush1.msra.mxu0 %v962
  %993 = vmatprep.subr.mxu0 0.0
  %994 = vmatpush1.msra.mxu0 %v963
  %995 = vmatprep.subr.mxu0 0.0
  %996 = vmatpush1.msra.mxu0 %v964
  %997 = vmatprep.subr.mxu0 0.0
  %998 = vmatpush1.msra.mxu0 %v965
  %999 = vmatprep.subr.mxu0 0.0
  %1000 = vmatpush1.msra.mxu0 %v966
  %1001 = vmatprep.subr.mxu0 0.0
  %1002 = vmatpush1.msra.mxu0 %v967
  %1003 = vmatprep.subr.mxu0 0.0
  %1004 = vmatpush1.msra.mxu0 %v968
  %1005 = vmatprep.subr.mxu0 0.0
  %1006 = vmatpush1.msra.mxu0 %v969
  %1007 = vmatprep.subr.mxu0 0.0
  %1008 = vmatpush1.msra.mxu0 %v970
  %1009 = vmatprep.subr.mxu0 0.0
  %1010 = vmatpush1.msra.mxu0 %v971
  %1011 = vmatprep.subr.mxu0 0.0
  %1012 = vmatpush1.msra.mxu0 0.0
  %1013 = vmatprep.subr.mxu0 0.0
  %1014 = vmatpush1.msra.mxu0 0.0
  %1015 = vmatprep.subr.mxu0 0.0
  %1016 = vmatpush1.msra.mxu0 0.0
  %1017 = vmatprep.subr.mxu0 0.0
  %1018 = vmatpush1.msra.mxu0 0.0
  %1019 = vmatprep.subr.mxu0 0.0
  %1020 = vmatpush1.msra.mxu0 0.0
  %1021 = vmatprep.subr.mxu0 0.0
  %1022 = vmatpush1.msra.mxu0 0.0
  %1023 = vmatprep.subr.mxu0 0.0
  %1024 = vmatpush1.msra.mxu0 0.0
  %1025 = vmatprep.subr.mxu0 0.0
  %1026 = vmatpush1.msra.mxu0 0.0
  %1027 = vmatprep.subr.mxu0 0.0
  %1028 = vmatpush1.msra.mxu0 0.0
  %1029 = vmatprep.subr.mxu0 0.0
  %1030 = vmatpush1.msra.mxu0 0.0
  %1031 = vmatprep.subr.mxu0 0.0
  %1032 = vmatpush1.msra.mxu0 0.0
  %1033 = vmatprep.subr.mxu0 0.0
  %1034 = vmatpush1.msra.mxu0 0.0
  %1035 = vmatprep.subr.mxu0 0.0
  %1036 = vmatpush1.msra.mxu0 0.0
  %1037 = vmatprep.subr.mxu0 0.0
  %1038 = vmatpush1.msra.mxu0 0.0
  %1039 = vmatprep.subr.mxu0 0.0
  %1040 = vmatpush1.msra.mxu0 0.0
  %1041 = vmatprep.subr.mxu0 0.0
  %1042 = vmatpush1.msra.mxu0 0.0
  %1043 = vmatprep.mubr.f32.mxu0 0.0
  %1044 = vmatmul.mubr.f32.gmra.mrb[0].mxu0 %v955
  %v1045 = vpop.f32.mrb[0].mxu0
  %v1046 = vadd.f32 %v977, %v1045
  %v1047 = vpop.f32.mrb[0].mxu0
  %1048 = vdwg.mxu0
  %v1049 = vld [vmem:[%s5] sm:$0x1]
  %1050 = vset.pattern.permute.xlu0 3
  %1051 = vperm.xlu0 %1050, %v710
  %v1052 = vpop.permute.xlu0 %1051
  %v1055 = vlaneseq
  %v1056 = vshrl.u32 %v1055, 7
  %v1057 = vsub.s32 0, %v1056
  %v1058 = vrot.slane %v1049, %v1057
  %v1060 = vmul.f32 %v1052, %v1058
  %v1061 = vadd.f32 %v1046, %v1060
  %v1062 = vxor.u32 %v1061, 2147483648
  %v1063 = vmul.f32 %v1062, 1.442695
  %v1064 = vpow.pop %v1063
  %v1065 = vadd.f32 %v1064, 1.0
  %v1066 = vrcp.pop %v1065
  %v1067 = vmul.f32 1.0, %v1066
  %v1068 = vtanh.pop %v1061
  %v1069 = vmul.f32 %v1067, %v704
  %1071 = vrot.lane.b32.xlu0 %v1068, 126
  %v1072 = vpop.permute.xlu0 %1071
  %v1074 = vmul.f32 %v1067, %v1072
  %1076 = vrot.lane.b32.xlu0 %v1074, 1
  %v1077 = vpop.permute.xlu0 %1076
  %v1079 = vadd.f32 %v1069, %v1077
  %v1080 = vtanh.pop %v1079
  %1082 = vrot.lane.b32.xlu0 %v1080, 2
  %v1083 = vpop.permute.xlu0 %1082
  %v1085 = vmul.f32 %v1067, %v1083
  %1087 = vrot.lane.b32.xlu0 %v1085, 125
  %v1088 = vpop.permute.xlu0 %1087
  %s1090 = scalar_lea.vmem %s7, 8
  %1091 = vst.msk [vmem:[%s1090] sm:$0xff] %vm715, %v1088
  %s1092 = scalar_lea.vmem [#allocation2], 64
  %v1093 = vld [vmem:[%s1092] sm:$0xff]
  %v1094 = vld [vmem:[%s1092 + $0x8] sm:$0xff]
  %v1095 = vld [vmem:[%s1092 + $0x10] sm:$0xff]
  %v1096 = vld [vmem:[%s1092 + $0x18] sm:$0xff]
  %v1097 = vld [vmem:[%s2] sm:$0xff]
  %v1098 = vld [vmem:[%s2 + $0x8] sm:$0xff]
  %v1099 = vld [vmem:[%s2 + $0x10] sm:$0xff]
  %v1100 = vld [vmem:[%s2 + $0x18] sm:$0xff]
  %v1101 = vld [vmem:[%s2 + $0x20] sm:$0xff]
  %v1102 = vld [vmem:[%s2 + $0x28] sm:$0xff]
  %v1103 = vld [vmem:[%s2 + $0x30] sm:$0xff]
  %v1104 = vld [vmem:[%s2 + $0x38] sm:$0xff]
  %v1105 = vld [vmem:[%s2 + $0x40] sm:$0xff]
  %v1106 = vld [vmem:[%s2 + $0x48] sm:$0xff]
  %v1107 = vld [vmem:[%s2 + $0x50] sm:$0xff]
  %v1108 = vld [vmem:[%s2 + $0x58] sm:$0xff]
  %v1109 = vld [vmem:[%s2 + $0x60] sm:$0xff]
  %v1110 = vld [vmem:[%s2 + $0x68] sm:$0xff]
  %v1111 = vld [vmem:[%s2 + $0x70] sm:$0xff]
  %v1112 = vld [vmem:[%s2 + $0x78] sm:$0xff]
  %v1113 = vld [vmem:[%s2 + $0x80] sm:$0xff]
  %v1114 = vld [vmem:[%s2 + $0x88] sm:$0xff]
  %v1115 = vld [vmem:[%s2 + $0x90] sm:$0xff]
  %v1116 = vld [vmem:[%s2 + $0x98] sm:$0xff]
  %v1117 = vld [vmem:[%s2 + $0xa0] sm:$0xff]
  %v1118 = vld [vmem:[%s2 + $0xa8] sm:$0xff]
  %v1119 = vld [vmem:[%s2 + $0xb0] sm:$0xff]
  %v1120 = vld [vmem:[%s2 + $0xb8] sm:$0xff]
  %v1121 = vld [vmem:[%s2 + $0xc0] sm:$0xff]
  %v1122 = vld [vmem:[%s2 + $0xc8] sm:$0xff]
  %v1123 = vld [vmem:[%s2 + $0xd0] sm:$0xff]
  %v1124 = vld [vmem:[%s2 + $0xd8] sm:$0xff]
  %v1125 = vld [vmem:[%s2 + $0xe0] sm:$0xff]
  %v1126 = vld [vmem:[%s2 + $0xe8] sm:$0xff]
  %v1127 = vld [vmem:[%s2 + $0xf0] sm:$0xff]
  %v1128 = vld [vmem:[%s2 + $0xf8] sm:$0xff]
  %v1129 = vld [vmem:[%s2 + $0x100] sm:$0xff]
  %v1130 = vld [vmem:[%s2 + $0x108] sm:$0xff]
  %v1131 = vld [vmem:[%s2 + $0x110] sm:$0xff]
  %v1132 = vld [vmem:[%s2 + $0x118] sm:$0xff]
  %v1133 = vld [vmem:[%s2 + $0x120] sm:$0xff]
  %v1134 = vld [vmem:[%s2 + $0x128] sm:$0xff]
  %v1135 = vld [vmem:[%s2 + $0x130] sm:$0xff]
  %v1136 = vld [vmem:[%s2 + $0x138] sm:$0xff]
  %v1137 = vld [vmem:[%s2 + $0x140] sm:$0xff]
  %v1138 = vld [vmem:[%s2 + $0x148] sm:$0xff]
  %v1139 = vld [vmem:[%s2 + $0x150] sm:$0xff]
  %v1140 = vld [vmem:[%s2 + $0x158] sm:$0xff]
  %v1141 = vld [vmem:[%s2 + $0x160] sm:$0xff]
  %v1142 = vld [vmem:[%s2 + $0x168] sm:$0xff]
  %v1143 = vld [vmem:[%s2 + $0x170] sm:$0xff]
  %v1144 = vld [vmem:[%s2 + $0x178] sm:$0xff]
  %v1145 = vld [vmem:[%s2 + $0x180] sm:$0xff]
  %v1146 = vld [vmem:[%s2 + $0x188] sm:$0xff]
  %v1147 = vld [vmem:[%s2 + $0x190] sm:$0xff]
  %v1148 = vld [vmem:[%s2 + $0x198] sm:$0xff]
  %v1149 = vld [vmem:[%s2 + $0x1a0] sm:$0xff]
  %v1150 = vld [vmem:[%s2 + $0x1a8] sm:$0xff]
  %v1151 = vld [vmem:[%s2 + $0x1b0] sm:$0xff]
  %v1152 = vld [vmem:[%s2 + $0x1b8] sm:$0xff]
  %v1153 = vld [vmem:[%s2 + $0x1c0] sm:$0xff]
  %v1154 = vld [vmem:[%s2 + $0x1c8] sm:$0xff]
  %v1155 = vld [vmem:[%s2 + $0x1d0] sm:$0xff]
  %v1156 = vld [vmem:[%s2 + $0x1d8] sm:$0xff]
  %v1157 = vld [vmem:[%s2 + $0x1e0] sm:$0xff]
  %v1158 = vld [vmem:[%s2 + $0x1e8] sm:$0xff]
  %v1159 = vld [vmem:[%s2 + $0x1f0] sm:$0xff]
  %v1160 = vld [vmem:[%s2 + $0x1f8] sm:$0xff]
  %1161 = vmatprep.subr.mxu0 %v1098
  %1162 = vmatpush1.msra.mxu0 %v1097
  %1163 = vmatprep.subr.mxu0 %v1102
  %1164 = vmatpush1.msra.mxu0 %v1101
  %1165 = vmatprep.subr.mxu0 %v1106
  %1166 = vmatpush1.msra.mxu0 %v1105
  %1167 = vmatprep.subr.mxu0 %v1110
  %1168 = vmatpush1.msra.mxu0 %v1109
  %1169 = vmatprep.subr.mxu0 %v1114
  %1170 = vmatpush1.msra.mxu0 %v1113
  %1171 = vmatprep.subr.mxu0 %v1118
  %1172 = vmatpush1.msra.mxu0 %v1117
  %1173 = vmatprep.subr.mxu0 %v1122
  %1174 = vmatpush1.msra.mxu0 %v1121
  %1175 = vmatprep.subr.mxu0 %v1126
  %1176 = vmatpush1.msra.mxu0 %v1125
  %1177 = vmatprep.subr.mxu0 %v1130
  %1178 = vmatpush1.msra.mxu0 %v1129
  %1179 = vmatprep.subr.mxu0 %v1134
  %1180 = vmatpush1.msra.mxu0 %v1133
  %1181 = vmatprep.subr.mxu0 %v1138
  %1182 = vmatpush1.msra.mxu0 %v1137
  %1183 = vmatprep.subr.mxu0 %v1142
  %1184 = vmatpush1.msra.mxu0 %v1141
  %1185 = vmatprep.subr.mxu0 %v1146
  %1186 = vmatpush1.msra.mxu0 %v1145
  %1187 = vmatprep.subr.mxu0 %v1150
  %1188 = vmatpush1.msra.mxu0 %v1149
  %1189 = vmatprep.subr.mxu0 %v1154
  %1190 = vmatpush1.msra.mxu0 %v1153
  %1191 = vmatprep.subr.mxu0 %v1158
  %1192 = vmatpush1.msra.mxu0 %v1157
  %1193 = vmatprep.subr.mxu0 0.0
  %1194 = vmatpush1.msra.mxu0 0.0
  %1195 = vmatprep.subr.mxu0 0.0
  %1196 = vmatpush1.msra.mxu0 0.0
  %1197 = vmatprep.subr.mxu0 0.0
  %1198 = vmatpush1.msra.mxu0 0.0
  %1199 = vmatprep.subr.mxu0 0.0
  %1200 = vmatpush1.msra.mxu0 0.0
  %1201 = vmatprep.subr.mxu0 0.0
  %1202 = vmatpush1.msra.mxu0 0.0
  %1203 = vmatprep.subr.mxu0 0.0
  %1204 = vmatpush1.msra.mxu0 0.0
  %1205 = vmatprep.subr.mxu0 0.0
  %1206 = vmatpush1.msra.mxu0 0.0
  %1207 = vmatprep.subr.mxu0 0.0
  %1208 = vmatpush1.msra.mxu0 0.0
  %1209 = vmatprep.subr.mxu0 0.0
  %1210 = vmatpush1.msra.mxu0 0.0
  %1211 = vmatprep.subr.mxu0 0.0
  %1212 = vmatpush1.msra.mxu0 0.0
  %1213 = vmatprep.subr.mxu0 0.0
  %1214 = vmatpush1.msra.mxu0 0.0
  %1215 = vmatprep.subr.mxu0 0.0
  %1216 = vmatpush1.msra.mxu0 0.0
  %1217 = vmatprep.subr.mxu0 0.0
  %1218 = vmatpush1.msra.mxu0 0.0
  %1219 = vmatprep.subr.mxu0 0.0
  %1220 = vmatpush1.msra.mxu0 0.0
  %1221 = vmatprep.subr.mxu0 0.0
  %1222 = vmatpush1.msra.mxu0 0.0
  %1223 = vmatprep.subr.mxu0 0.0
  %1224 = vmatpush1.msra.mxu0 0.0
  %1225 = vmatprep.mubr.f32.mxu0 0.0
  %1226 = vmatmul.mubr.f32.gmra.mrb[0].mxu0 %v955
  %v1227 = vpop.f32.mrb[0].mxu0
  %v1228 = vadd.f32 0.0, %v1227
  %v1229 = vpop.f32.mrb[0].mxu0
  %v1230 = vadd.f32 0.0, %v1229
  %1231 = vdwg.mxu0
  %1232 = vmatprep.subr.mxu0 %v1100
  %1233 = vmatpush1.msra.mxu0 %v1099
  %1234 = vmatprep.subr.mxu0 %v1104
  %1235 = vmatpush1.msra.mxu0 %v1103
  %1236 = vmatprep.subr.mxu0 %v1108
  %1237 = vmatpush1.msra.mxu0 %v1107
  %1238 = vmatprep.subr.mxu0 %v1112
  %1239 = vmatpush1.msra.mxu0 %v1111
  %1240 = vmatprep.subr.mxu0 %v1116
  %1241 = vmatpush1.msra.mxu0 %v1115
  %1242 = vmatprep.subr.mxu0 %v1120
  %1243 = vmatpush1.msra.mxu0 %v1119
  %1244 = vmatprep.subr.mxu0 %v1124
  %1245 = vmatpush1.msra.mxu0 %v1123
  %1246 = vmatprep.subr.mxu0 %v1128
  %1247 = vmatpush1.msra.mxu0 %v1127
  %1248 = vmatprep.subr.mxu0 %v1132
  %1249 = vmatpush1.msra.mxu0 %v1131
  %1250 = vmatprep.subr.mxu0 %v1136
  %1251 = vmatpush1.msra.mxu0 %v1135
  %1252 = vmatprep.subr.mxu0 %v1140
  %1253 = vmatpush1.msra.mxu0 %v1139
  %1254 = vmatprep.subr.mxu0 %v1144
  %1255 = vmatpush1.msra.mxu0 %v1143
  %1256 = vmatprep.subr.mxu0 %v1148
  %1257 = vmatpush1.msra.mxu0 %v1147
  %1258 = vmatprep.subr.mxu0 %v1152
  %1259 = vmatpush1.msra.mxu0 %v1151
  %1260 = vmatprep.subr.mxu0 %v1156
  %1261 = vmatpush1.msra.mxu0 %v1155
  %1262 = vmatprep.subr.mxu0 %v1160
  %1263 = vmatpush1.msra.mxu0 %v1159
  %1264 = vmatprep.subr.mxu0 0.0
  %1265 = vmatpush1.msra.mxu0 0.0
  %1266 = vmatprep.subr.mxu0 0.0
  %1267 = vmatpush1.msra.mxu0 0.0
  %1268 = vmatprep.subr.mxu0 0.0
  %1269 = vmatpush1.msra.mxu0 0.0
  %1270 = vmatprep.subr.mxu0 0.0
  %1271 = vmatpush1.msra.mxu0 0.0
  %1272 = vmatprep.subr.mxu0 0.0
  %1273 = vmatpush1.msra.mxu0 0.0
  %1274 = vmatprep.subr.mxu0 0.0
  %1275 = vmatpush1.msra.mxu0 0.0
  %1276 = vmatprep.subr.mxu0 0.0
  %1277 = vmatpush1.msra.mxu0 0.0
  %1278 = vmatprep.subr.mxu0 0.0
  %1279 = vmatpush1.msra.mxu0 0.0
  %1280 = vmatprep.subr.mxu0 0.0
  %1281 = vmatpush1.msra.mxu0 0.0
  %1282 = vmatprep.subr.mxu0 0.0
  %1283 = vmatpush1.msra.mxu0 0.0
  %1284 = vmatprep.subr.mxu0 0.0
  %1285 = vmatpush1.msra.mxu0 0.0
  %1286 = vmatprep.subr.mxu0 0.0
  %1287 = vmatpush1.msra.mxu0 0.0
  %1288 = vmatprep.subr.mxu0 0.0
  %1289 = vmatpush1.msra.mxu0 0.0
  %1290 = vmatprep.subr.mxu0 0.0
  %1291 = vmatpush1.msra.mxu0 0.0
  %1292 = vmatprep.subr.mxu0 0.0
  %1293 = vmatpush1.msra.mxu0 0.0
  %1294 = vmatprep.subr.mxu0 0.0
  %1295 = vmatpush1.msra.mxu0 0.0
  %1296 = vmatprep.mubr.f32.mxu0 0.0
  %1297 = vmatmul.mubr.f32.gmra.mrb[0].mxu0 %v955
  %v1298 = vpop.f32.mrb[0].mxu0
  %v1299 = vadd.f32 0.0, %v1298
  %v1300 = vpop.f32.mrb[0].mxu0
  %v1301 = vadd.f32 0.0, %v1300
  %1302 = vdwg.mxu0
  %v1303 = vadd.f32 %v1093, %v1228
  %v1304 = vadd.f32 %v1094, %v1230
  %v1305 = vadd.f32 %v1095, %v1299
  %v1306 = vadd.f32 %v1096, %v1301
  %v1307 = vxor.u32 %v1303, 2147483648
  %v1308 = vmul.f32 %v1307, 1.442695
  %v1309 = vpow.pop %v1308
  %v1310 = vadd.f32 %v1309, 1.0
  %v1311 = vrcp.pop %v1310
  %v1312 = vmul.f32 1.0, %v1311
  %v1313 = vxor.u32 %v1304, 2147483648
  %v1314 = vmul.f32 %v1313, 1.442695
  %v1315 = vpow.pop %v1314
  %v1316 = vadd.f32 %v1315, 1.0
  %v1317 = vrcp.pop %v1316
  %v1318 = vmul.f32 1.0, %v1317
  %v1319 = vtanh.pop %v1305
  %v1320 = vxor.u32 %v1306, 2147483648
  %v1321 = vmul.f32 %v1320, 1.442695
  %v1322 = vpow.pop %v1321
  %v1323 = vadd.f32 %v1322, 1.0
  %v1324 = vrcp.pop %v1323
  %v1325 = vmul.f32 1.0, %v1324
  %v1326 = vmul.f32 %v1318, %v953
  %v1327 = vmul.f32 %v1312, %v1319
  %v1328 = vadd.f32 %v1326, %v1327
  %v1329 = vtanh.pop %v1328
  %v1330 = vmul.f32 %v1325, %v1329
  %v1331 = vld [vmem:[%s4] sm:$0xff]
  %v1332 = vld [vmem:[%s4 + $0x8] sm:$0xff]
  %v1333 = vld [vmem:[%s4 + $0x10] sm:$0xff]
  %v1334 = vld [vmem:[%s4 + $0x18] sm:$0xff]
  %v1335 = vld [vmem:[%s4 + $0x20] sm:$0xff]
  %v1336 = vld [vmem:[%s4 + $0x28] sm:$0xff]
  %v1337 = vld [vmem:[%s4 + $0x30] sm:$0xff]
  %v1338 = vld [vmem:[%s4 + $0x38] sm:$0xff]
  %v1339 = vld [vmem:[%s4 + $0x40] sm:$0xff]
  %v1340 = vld [vmem:[%s4 + $0x48] sm:$0xff]
  %v1341 = vld [vmem:[%s4 + $0x50] sm:$0xff]
  %v1342 = vld [vmem:[%s4 + $0x58] sm:$0xff]
  %v1343 = vld [vmem:[%s4 + $0x60] sm:$0xff]
  %v1344 = vld [vmem:[%s4 + $0x68] sm:$0xff]
  %v1345 = vld [vmem:[%s4 + $0x70] sm:$0xff]
  %v1346 = vld [vmem:[%s4 + $0x78] sm:$0xff]
  %v1347 = vld [vmem:[%s6] sm:$0x1]
  %v1349 = vlaneseq
  %v1350 = vshrl.u32 %v1349, 7
  %v1351 = vsub.s32 0, %v1350
  %v1352 = vrot.slane %v1347, %v1351
  %1354 = vmatprep.subr.mxu0 0.0
  %1355 = vmatpush1.msra.mxu0 %v1331
  %1356 = vmatprep.subr.mxu0 0.0
  %1357 = vmatpush1.msra.mxu0 %v1332
  %1358 = vmatprep.subr.mxu0 0.0
  %1359 = vmatpush1.msra.mxu0 %v1333
  %1360 = vmatprep.subr.mxu0 0.0
  %1361 = vmatpush1.msra.mxu0 %v1334
  %1362 = vmatprep.subr.mxu0 0.0
  %1363 = vmatpush1.msra.mxu0 %v1335
  %1364 = vmatprep.subr.mxu0 0.0
  %1365 = vmatpush1.msra.mxu0 %v1336
  %1366 = vmatprep.subr.mxu0 0.0
  %1367 = vmatpush1.msra.mxu0 %v1337
  %1368 = vmatprep.subr.mxu0 0.0
  %1369 = vmatpush1.msra.mxu0 %v1338
  %1370 = vmatprep.subr.mxu0 0.0
  %1371 = vmatpush1.msra.mxu0 %v1339
  %1372 = vmatprep.subr.mxu0 0.0
  %1373 = vmatpush1.msra.mxu0 %v1340
  %1374 = vmatprep.subr.mxu0 0.0
  %1375 = vmatpush1.msra.mxu0 %v1341
  %1376 = vmatprep.subr.mxu0 0.0
  %1377 = vmatpush1.msra.mxu0 %v1342
  %1378 = vmatprep.subr.mxu0 0.0
  %1379 = vmatpush1.msra.mxu0 %v1343
  %1380 = vmatprep.subr.mxu0 0.0
  %1381 = vmatpush1.msra.mxu0 %v1344
  %1382 = vmatprep.subr.mxu0 0.0
  %1383 = vmatpush1.msra.mxu0 %v1345
  %1384 = vmatprep.subr.mxu0 0.0
  %1385 = vmatpush1.msra.mxu0 %v1346
  %1386 = vmatprep.subr.mxu0 0.0
  %1387 = vmatpush1.msra.mxu0 0.0
  %1388 = vmatprep.subr.mxu0 0.0
  %1389 = vmatpush1.msra.mxu0 0.0
  %1390 = vmatprep.subr.mxu0 0.0
  %1391 = vmatpush1.msra.mxu0 0.0
  %1392 = vmatprep.subr.mxu0 0.0
  %1393 = vmatpush1.msra.mxu0 0.0
  %1394 = vmatprep.subr.mxu0 0.0
  %1395 = vmatpush1.msra.mxu0 0.0
  %1396 = vmatprep.subr.mxu0 0.0
  %1397 = vmatpush1.msra.mxu0 0.0
  %1398 = vmatprep.subr.mxu0 0.0
  %1399 = vmatpush1.msra.mxu0 0.0
  %1400 = vmatprep.subr.mxu0 0.0
  %1401 = vmatpush1.msra.mxu0 0.0
  %1402 = vmatprep.subr.mxu0 0.0
  %1403 = vmatpush1.msra.mxu0 0.0
  %1404 = vmatprep.subr.mxu0 0.0
  %1405 = vmatpush1.msra.mxu0 0.0
  %1406 = vmatprep.subr.mxu0 0.0
  %1407 = vmatpush1.msra.mxu0 0.0
  %1408 = vmatprep.subr.mxu0 0.0
  %1409 = vmatpush1.msra.mxu0 0.0
  %1410 = vmatprep.subr.mxu0 0.0
  %1411 = vmatpush1.msra.mxu0 0.0
  %1412 = vmatprep.subr.mxu0 0.0
  %1413 = vmatpush1.msra.mxu0 0.0
  %1414 = vmatprep.subr.mxu0 0.0
  %1415 = vmatpush1.msra.mxu0 0.0
  %1416 = vmatprep.subr.mxu0 0.0
  %1417 = vmatpush1.msra.mxu0 0.0
  %1418 = vmatprep.mubr.f32.mxu0 0.0
  %1419 = vmatmul.mubr.f32.gmra.mrb[0].mxu0 %v1330
  %v1420 = vpop.f32.mrb[0].mxu0
  %v1421 = vadd.f32 %v1352, %v1420
  %v1422 = vpop.f32.mrb[0].mxu0
  %1423 = vdwg.mxu0
  %v1424 = vld [vmem:[%s5] sm:$0x1]
  %1425 = vset.pattern.permute.xlu0 3
  %1426 = vperm.xlu0 %1425, %v1085
  %v1427 = vpop.permute.xlu0 %1426
  %v1430 = vlaneseq
  %v1431 = vshrl.u32 %v1430, 7
  %v1432 = vsub.s32 0, %v1431
  %v1433 = vrot.slane %v1424, %v1432
  %v1435 = vmul.f32 %v1427, %v1433
  %v1436 = vadd.f32 %v1421, %v1435
  %v1437 = vxor.u32 %v1436, 2147483648
  %v1438 = vmul.f32 %v1437, 1.442695
  %v1439 = vpow.pop %v1438
  %v1440 = vadd.f32 %v1439, 1.0
  %v1441 = vrcp.pop %v1440
  %v1442 = vmul.f32 1.0, %v1441
  %v1443 = vtanh.pop %v1436
  %v1444 = vmul.f32 %v1442, %v1079
  %1446 = vrot.lane.b32.xlu0 %v1443, 126
  %v1447 = vpop.permute.xlu0 %1446
  %v1449 = vmul.f32 %v1442, %v1447
  %1451 = vrot.lane.b32.xlu0 %v1449, 1
  %v1452 = vpop.permute.xlu0 %1451
  %v1454 = vadd.f32 %v1444, %v1452
  %v1455 = vtanh.pop %v1454
  %1457 = vrot.lane.b32.xlu0 %v1455, 2
  %v1458 = vpop.permute.xlu0 %1457
  %v1460 = vmul.f32 %v1442, %v1458
  %1462 = vrot.lane.b32.xlu0 %v1460, 125
  %v1463 = vpop.permute.xlu0 %1462
  %s1465 = scalar_lea.vmem %s7, 16
  %1466 = vst.msk [vmem:[%s1465] sm:$0xff] %vm715, %v1463
  %s1467 = scalar_lea.vmem [#allocation2], 96
  %v1468 = vld [vmem:[%s1467] sm:$0xff]
  %v1469 = vld [vmem:[%s1467 + $0x8] sm:$0xff]
  %v1470 = vld [vmem:[%s1467 + $0x10] sm:$0xff]
  %v1471 = vld [vmem:[%s1467 + $0x18] sm:$0xff]
  %v1472 = vld [vmem:[%s2] sm:$0xff]
  %v1473 = vld [vmem:[%s2 + $0x8] sm:$0xff]
  %v1474 = vld [vmem:[%s2 + $0x10] sm:$0xff]
  %v1475 = vld [vmem:[%s2 + $0x18] sm:$0xff]
  %v1476 = vld [vmem:[%s2 + $0x20] sm:$0xff]
  %v1477 = vld [vmem:[%s2 + $0x28] sm:$0xff]
  %v1478 = vld [vmem:[%s2 + $0x30] sm:$0xff]
  %v1479 = vld [vmem:[%s2 + $0x38] sm:$0xff]
  %v1480 = vld [vmem:[%s2 + $0x40] sm:$0xff]
  %v1481 = vld [vmem:[%s2 + $0x48] sm:$0xff]
  %v1482 = vld [vmem:[%s2 + $0x50] sm:$0xff]
  %v1483 = vld [vmem:[%s2 + $0x58] sm:$0xff]
  %v1484 = vld [vmem:[%s2 + $0x60] sm:$0xff]
  %v1485 = vld [vmem:[%s2 + $0x68] sm:$0xff]
  %v1486 = vld [vmem:[%s2 + $0x70] sm:$0xff]
  %v1487 = vld [vmem:[%s2 + $0x78] sm:$0xff]
  %v1488 = vld [vmem:[%s2 + $0x80] sm:$0xff]
  %v1489 = vld [vmem:[%s2 + $0x88] sm:$0xff]
  %v1490 = vld [vmem:[%s2 + $0x90] sm:$0xff]
  %v1491 = vld [vmem:[%s2 + $0x98] sm:$0xff]
  %v1492 = vld [vmem:[%s2 + $0xa0] sm:$0xff]
  %v1493 = vld [vmem:[%s2 + $0xa8] sm:$0xff]
  %v1494 = vld [vmem:[%s2 + $0xb0] sm:$0xff]
  %v1495 = vld [vmem:[%s2 + $0xb8] sm:$0xff]
  %v1496 = vld [vmem:[%s2 + $0xc0] sm:$0xff]
  %v1497 = vld [vmem:[%s2 + $0xc8] sm:$0xff]
  %v1498 = vld [vmem:[%s2 + $0xd0] sm:$0xff]
  %v1499 = vld [vmem:[%s2 + $0xd8] sm:$0xff]
  %v1500 = vld [vmem:[%s2 + $0xe0] sm:$0xff]
  %v1501 = vld [vmem:[%s2 + $0xe8] sm:$0xff]
  %v1502 = vld [vmem:[%s2 + $0xf0] sm:$0xff]
  %v1503 = vld [vmem:[%s2 + $0xf8] sm:$0xff]
  %v1504 = vld [vmem:[%s2 + $0x100] sm:$0xff]
  %v1505 = vld [vmem:[%s2 + $0x108] sm:$0xff]
  %v1506 = vld [vmem:[%s2 + $0x110] sm:$0xff]
  %v1507 = vld [vmem:[%s2 + $0x118] sm:$0xff]
  %v1508 = vld [vmem:[%s2 + $0x120] sm:$0xff]
  %v1509 = vld [vmem:[%s2 + $0x128] sm:$0xff]
  %v1510 = vld [vmem:[%s2 + $0x130] sm:$0xff]
  %v1511 = vld [vmem:[%s2 + $0x138] sm:$0xff]
  %v1512 = vld [vmem:[%s2 + $0x140] sm:$0xff]
  %v1513 = vld [vmem:[%s2 + $0x148] sm:$0xff]
  %v1514 = vld [vmem:[%s2 + $0x150] sm:$0xff]
  %v1515 = vld [vmem:[%s2 + $0x158] sm:$0xff]
  %v1516 = vld [vmem:[%s2 + $0x160] sm:$0xff]
  %v1517 = vld [vmem:[%s2 + $0x168] sm:$0xff]
  %v1518 = vld [vmem:[%s2 + $0x170] sm:$0xff]
  %v1519 = vld [vmem:[%s2 + $0x178] sm:$0xff]
  %v1520 = vld [vmem:[%s2 + $0x180] sm:$0xff]
  %v1521 = vld [vmem:[%s2 + $0x188] sm:$0xff]
  %v1522 = vld [vmem:[%s2 + $0x190] sm:$0xff]
  %v1523 = vld [vmem:[%s2 + $0x198] sm:$0xff]
  %v1524 = vld [vmem:[%s2 + $0x1a0] sm:$0xff]
  %v1525 = vld [vmem:[%s2 + $0x1a8] sm:$0xff]
  %v1526 = vld [vmem:[%s2 + $0x1b0] sm:$0xff]
  %v1527 = vld [vmem:[%s2 + $0x1b8] sm:$0xff]
  %v1528 = vld [vmem:[%s2 + $0x1c0] sm:$0xff]
  %v1529 = vld [vmem:[%s2 + $0x1c8] sm:$0xff]
  %v1530 = vld [vmem:[%s2 + $0x1d0] sm:$0xff]
  %v1531 = vld [vmem:[%s2 + $0x1d8] sm:$0xff]
  %v1532 = vld [vmem:[%s2 + $0x1e0] sm:$0xff]
  %v1533 = vld [vmem:[%s2 + $0x1e8] sm:$0xff]
  %v1534 = vld [vmem:[%s2 + $0x1f0] sm:$0xff]
  %v1535 = vld [vmem:[%s2 + $0x1f8] sm:$0xff]
  %1536 = vmatprep.subr.mxu0 %v1473
  %1537 = vmatpush1.msra.mxu0 %v1472
  %1538 = vmatprep.subr.mxu0 %v1477
  %1539 = vmatpush1.msra.mxu0 %v1476
  %1540 = vmatprep.subr.mxu0 %v1481
  %1541 = vmatpush1.msra.mxu0 %v1480
  %1542 = vmatprep.subr.mxu0 %v1485
  %1543 = vmatpush1.msra.mxu0 %v1484
  %1544 = vmatprep.subr.mxu0 %v1489
  %1545 = vmatpush1.msra.mxu0 %v1488
  %1546 = vmatprep.subr.mxu0 %v1493
  %1547 = vmatpush1.msra.mxu0 %v1492
  %1548 = vmatprep.subr.mxu0 %v1497
  %1549 = vmatpush1.msra.mxu0 %v1496
  %1550 = vmatprep.subr.mxu0 %v1501
  %1551 = vmatpush1.msra.mxu0 %v1500
  %1552 = vmatprep.subr.mxu0 %v1505
  %1553 = vmatpush1.msra.mxu0 %v1504
  %1554 = vmatprep.subr.mxu0 %v1509
  %1555 = vmatpush1.msra.mxu0 %v1508
  %1556 = vmatprep.subr.mxu0 %v1513
  %1557 = vmatpush1.msra.mxu0 %v1512
  %1558 = vmatprep.subr.mxu0 %v1517
  %1559 = vmatpush1.msra.mxu0 %v1516
  %1560 = vmatprep.subr.mxu0 %v1521
  %1561 = vmatpush1.msra.mxu0 %v1520
  %1562 = vmatprep.subr.mxu0 %v1525
  %1563 = vmatpush1.msra.mxu0 %v1524
  %1564 = vmatprep.subr.mxu0 %v1529
  %1565 = vmatpush1.msra.mxu0 %v1528
  %1566 = vmatprep.subr.mxu0 %v1533
  %1567 = vmatpush1.msra.mxu0 %v1532
  %1568 = vmatprep.subr.mxu0 0.0
  %1569 = vmatpush1.msra.mxu0 0.0
  %1570 = vmatprep.subr.mxu0 0.0
  %1571 = vmatpush1.msra.mxu0 0.0
  %1572 = vmatprep.subr.mxu0 0.0
  %1573 = vmatpush1.msra.mxu0 0.0
  %1574 = vmatprep.subr.mxu0 0.0
  %1575 = vmatpush1.msra.mxu0 0.0
  %1576 = vmatprep.subr.mxu0 0.0
  %1577 = vmatpush1.msra.mxu0 0.0
  %1578 = vmatprep.subr.mxu0 0.0
  %1579 = vmatpush1.msra.mxu0 0.0
  %1580 = vmatprep.subr.mxu0 0.0
  %1581 = vmatpush1.msra.mxu0 0.0
  %1582 = vmatprep.subr.mxu0 0.0
  %1583 = vmatpush1.msra.mxu0 0.0
  %1584 = vmatprep.subr.mxu0 0.0
  %1585 = vmatpush1.msra.mxu0 0.0
  %1586 = vmatprep.subr.mxu0 0.0
  %1587 = vmatpush1.msra.mxu0 0.0
  %1588 = vmatprep.subr.mxu0 0.0
  %1589 = vmatpush1.msra.mxu0 0.0
  %1590 = vmatprep.subr.mxu0 0.0
  %1591 = vmatpush1.msra.mxu0 0.0
  %1592 = vmatprep.subr.mxu0 0.0
  %1593 = vmatpush1.msra.mxu0 0.0
  %1594 = vmatprep.subr.mxu0 0.0
  %1595 = vmatpush1.msra.mxu0 0.0
  %1596 = vmatprep.subr.mxu0 0.0
  %1597 = vmatpush1.msra.mxu0 0.0
  %1598 = vmatprep.subr.mxu0 0.0
  %1599 = vmatpush1.msra.mxu0 0.0
  %1600 = vmatprep.mubr.f32.mxu0 0.0
  %1601 = vmatmul.mubr.f32.gmra.mrb[0].mxu0 %v1330
  %v1602 = vpop.f32.mrb[0].mxu0
  %v1603 = vadd.f32 0.0, %v1602
  %v1604 = vpop.f32.mrb[0].mxu0
  %v1605 = vadd.f32 0.0, %v1604
  %1606 = vdwg.mxu0
  %1607 = vmatprep.subr.mxu0 %v1475
  %1608 = vmatpush1.msra.mxu0 %v1474
  %1609 = vmatprep.subr.mxu0 %v1479
  %1610 = vmatpush1.msra.mxu0 %v1478
  %1611 = vmatprep.subr.mxu0 %v1483
  %1612 = vmatpush1.msra.mxu0 %v1482
  %1613 = vmatprep.subr.mxu0 %v1487
  %1614 = vmatpush1.msra.mxu0 %v1486
  %1615 = vmatprep.subr.mxu0 %v1491
  %1616 = vmatpush1.msra.mxu0 %v1490
  %1617 = vmatprep.subr.mxu0 %v1495
  %1618 = vmatpush1.msra.mxu0 %v1494
  %1619 = vmatprep.subr.mxu0 %v1499
  %1620 = vmatpush1.msra.mxu0 %v1498
  %1621 = vmatprep.subr.mxu0 %v1503
  %1622 = vmatpush1.msra.mxu0 %v1502
  %1623 = vmatprep.subr.mxu0 %v1507
  %1624 = vmatpush1.msra.mxu0 %v1506
  %1625 = vmatprep.subr.mxu0 %v1511
  %1626 = vmatpush1.msra.mxu0 %v1510
  %1627 = vmatprep.subr.mxu0 %v1515
  %1628 = vmatpush1.msra.mxu0 %v1514
  %1629 = vmatprep.subr.mxu0 %v1519
  %1630 = vmatpush1.msra.mxu0 %v1518
  %1631 = vmatprep.subr.mxu0 %v1523
  %1632 = vmatpush1.msra.mxu0 %v1522
  %1633 = vmatprep.subr.mxu0 %v1527
  %1634 = vmatpush1.msra.mxu0 %v1526
  %1635 = vmatprep.subr.mxu0 %v1531
  %1636 = vmatpush1.msra.mxu0 %v1530
  %1637 = vmatprep.subr.mxu0 %v1535
  %1638 = vmatpush1.msra.mxu0 %v1534
  %1639 = vmatprep.subr.mxu0 0.0
  %1640 = vmatpush1.msra.mxu0 0.0
  %1641 = vmatprep.subr.mxu0 0.0
  %1642 = vmatpush1.msra.mxu0 0.0
  %1643 = vmatprep.subr.mxu0 0.0
  %1644 = vmatpush1.msra.mxu0 0.0
  %1645 = vmatprep.subr.mxu0 0.0
  %1646 = vmatpush1.msra.mxu0 0.0
  %1647 = vmatprep.subr.mxu0 0.0
  %1648 = vmatpush1.msra.mxu0 0.0
  %1649 = vmatprep.subr.mxu0 0.0
  %1650 = vmatpush1.msra.mxu0 0.0
  %1651 = vmatprep.subr.mxu0 0.0
  %1652 = vmatpush1.msra.mxu0 0.0
  %1653 = vmatprep.subr.mxu0 0.0
  %1654 = vmatpush1.msra.mxu0 0.0
  %1655 = vmatprep.subr.mxu0 0.0
  %1656 = vmatpush1.msra.mxu0 0.0
  %1657 = vmatprep.subr.mxu0 0.0
  %1658 = vmatpush1.msra.mxu0 0.0
  %1659 = vmatprep.subr.mxu0 0.0
  %1660 = vmatpush1.msra.mxu0 0.0
  %1661 = vmatprep.subr.mxu0 0.0
  %1662 = vmatpush1.msra.mxu0 0.0
  %1663 = vmatprep.subr.mxu0 0.0
  %1664 = vmatpush1.msra.mxu0 0.0
  %1665 = vmatprep.subr.mxu0 0.0
  %1666 = vmatpush1.msra.mxu0 0.0
  %1667 = vmatprep.subr.mxu0 0.0
  %1668 = vmatpush1.msra.mxu0 0.0
  %1669 = vmatprep.subr.mxu0 0.0
  %1670 = vmatpush1.msra.mxu0 0.0
  %1671 = vmatprep.mubr.f32.mxu0 0.0
  %1672 = vmatmul.mubr.f32.gmra.mrb[0].mxu0 %v1330
  %v1673 = vpop.f32.mrb[0].mxu0
  %v1674 = vadd.f32 0.0, %v1673
  %v1675 = vpop.f32.mrb[0].mxu0
  %v1676 = vadd.f32 0.0, %v1675
  %1677 = vdwg.mxu0
  %v1678 = vadd.f32 %v1468, %v1603
  %v1679 = vadd.f32 %v1469, %v1605
  %v1680 = vadd.f32 %v1470, %v1674
  %v1681 = vadd.f32 %v1471, %v1676
  %v1682 = vxor.u32 %v1678, 2147483648
  %v1683 = vmul.f32 %v1682, 1.442695
  %v1684 = vpow.pop %v1683
  %v1685 = vadd.f32 %v1684, 1.0
  %v1686 = vrcp.pop %v1685
  %v1687 = vmul.f32 1.0, %v1686
  %v1688 = vxor.u32 %v1679, 2147483648
  %v1689 = vmul.f32 %v1688, 1.442695
  %v1690 = vpow.pop %v1689
  %v1691 = vadd.f32 %v1690, 1.0
  %v1692 = vrcp.pop %v1691
  %v1693 = vmul.f32 1.0, %v1692
  %v1694 = vtanh.pop %v1680
  %v1695 = vxor.u32 %v1681, 2147483648
  %v1696 = vmul.f32 %v1695, 1.442695
  %v1697 = vpow.pop %v1696
  %v1698 = vadd.f32 %v1697, 1.0
  %v1699 = vrcp.pop %v1698
  %v1700 = vmul.f32 1.0, %v1699
  %v1701 = vmul.f32 %v1693, %v1328
  %v1702 = vmul.f32 %v1687, %v1694
  %v1703 = vadd.f32 %v1701, %v1702
  %v1704 = vtanh.pop %v1703
  %v1705 = vmul.f32 %v1700, %v1704
  %v1706 = vld [vmem:[%s4] sm:$0xff]
  %v1707 = vld [vmem:[%s4 + $0x8] sm:$0xff]
  %v1708 = vld [vmem:[%s4 + $0x10] sm:$0xff]
  %v1709 = vld [vmem:[%s4 + $0x18] sm:$0xff]
  %v1710 = vld [vmem:[%s4 + $0x20] sm:$0xff]
  %v1711 = vld [vmem:[%s4 + $0x28] sm:$0xff]
  %v1712 = vld [vmem:[%s4 + $0x30] sm:$0xff]
  %v1713 = vld [vmem:[%s4 + $0x38] sm:$0xff]
  %v1714 = vld [vmem:[%s4 + $0x40] sm:$0xff]
  %v1715 = vld [vmem:[%s4 + $0x48] sm:$0xff]
  %v1716 = vld [vmem:[%s4 + $0x50] sm:$0xff]
  %v1717 = vld [vmem:[%s4 + $0x58] sm:$0xff]
  %v1718 = vld [vmem:[%s4 + $0x60] sm:$0xff]
  %v1719 = vld [vmem:[%s4 + $0x68] sm:$0xff]
  %v1720 = vld [vmem:[%s4 + $0x70] sm:$0xff]
  %v1721 = vld [vmem:[%s4 + $0x78] sm:$0xff]
  %v1722 = vld [vmem:[%s6] sm:$0x1]
  %v1724 = vlaneseq
  %v1725 = vshrl.u32 %v1724, 7
  %v1726 = vsub.s32 0, %v1725
  %v1727 = vrot.slane %v1722, %v1726
  %1729 = vmatprep.subr.mxu0 0.0
  %1730 = vmatpush1.msra.mxu0 %v1706
  %1731 = vmatprep.subr.mxu0 0.0
  %1732 = vmatpush1.msra.mxu0 %v1707
  %1733 = vmatprep.subr.mxu0 0.0
  %1734 = vmatpush1.msra.mxu0 %v1708
  %1735 = vmatprep.subr.mxu0 0.0
  %1736 = vmatpush1.msra.mxu0 %v1709
  %1737 = vmatprep.subr.mxu0 0.0
  %1738 = vmatpush1.msra.mxu0 %v1710
  %1739 = vmatprep.subr.mxu0 0.0
  %1740 = vmatpush1.msra.mxu0 %v1711
  %1741 = vmatprep.subr.mxu0 0.0
  %1742 = vmatpush1.msra.mxu0 %v1712
  %1743 = vmatprep.subr.mxu0 0.0
  %1744 = vmatpush1.msra.mxu0 %v1713
  %1745 = vmatprep.subr.mxu0 0.0
  %1746 = vmatpush1.msra.mxu0 %v1714
  %1747 = vmatprep.subr.mxu0 0.0
  %1748 = vmatpush1.msra.mxu0 %v1715
  %1749 = vmatprep.subr.mxu0 0.0
  %1750 = vmatpush1.msra.mxu0 %v1716
  %1751 = vmatprep.subr.mxu0 0.0
  %1752 = vmatpush1.msra.mxu0 %v1717
  %1753 = vmatprep.subr.mxu0 0.0
  %1754 = vmatpush1.msra.mxu0 %v1718
  %1755 = vmatprep.subr.mxu0 0.0
  %1756 = vmatpush1.msra.mxu0 %v1719
  %1757 = vmatprep.subr.mxu0 0.0
  %1758 = vmatpush1.msra.mxu0 %v1720
  %1759 = vmatprep.subr.mxu0 0.0
  %1760 = vmatpush1.msra.mxu0 %v1721
  %1761 = vmatprep.subr.mxu0 0.0
  %1762 = vmatpush1.msra.mxu0 0.0
  %1763 = vmatprep.subr.mxu0 0.0
  %1764 = vmatpush1.msra.mxu0 0.0
  %1765 = vmatprep.subr.mxu0 0.0
  %1766 = vmatpush1.msra.mxu0 0.0
  %1767 = vmatprep.subr.mxu0 0.0
  %1768 = vmatpush1.msra.mxu0 0.0
  %1769 = vmatprep.subr.mxu0 0.0
  %1770 = vmatpush1.msra.mxu0 0.0
  %1771 = vmatprep.subr.mxu0 0.0
  %1772 = vmatpush1.msra.mxu0 0.0
  %1773 = vmatprep.subr.mxu0 0.0
  %1774 = vmatpush1.msra.mxu0 0.0
  %1775 = vmatprep.subr.mxu0 0.0
  %1776 = vmatpush1.msra.mxu0 0.0
  %1777 = vmatprep.subr.mxu0 0.0
  %1778 = vmatpush1.msra.mxu0 0.0
  %1779 = vmatprep.subr.mxu0 0.0
  %1780 = vmatpush1.msra.mxu0 0.0
  %1781 = vmatprep.subr.mxu0 0.0
  %1782 = vmatpush1.msra.mxu0 0.0
  %1783 = vmatprep.subr.mxu0 0.0
  %1784 = vmatpush1.msra.mxu0 0.0
  %1785 = vmatprep.subr.mxu0 0.0
  %1786 = vmatpush1.msra.mxu0 0.0
  %1787 = vmatprep.subr.mxu0 0.0
  %1788 = vmatpush1.msra.mxu0 0.0
  %1789 = vmatprep.subr.mxu0 0.0
  %1790 = vmatpush1.msra.mxu0 0.0
  %1791 = vmatprep.subr.mxu0 0.0
  %1792 = vmatpush1.msra.mxu0 0.0
  %1793 = vmatprep.mubr.f32.mxu0 0.0
  %1794 = vmatmul.mubr.f32.gmra.mrb[0].mxu0 %v1705
  %v1795 = vpop.f32.mrb[0].mxu0
  %v1796 = vadd.f32 %v1727, %v1795
  %v1797 = vpop.f32.mrb[0].mxu0
  %1798 = vdwg.mxu0
  %v1799 = vld [vmem:[%s5] sm:$0x1]
  %1800 = vset.pattern.permute.xlu0 3
  %1801 = vperm.xlu0 %1800, %v1460
  %v1802 = vpop.permute.xlu0 %1801
  %v1805 = vlaneseq
  %v1806 = vshrl.u32 %v1805, 7
  %v1807 = vsub.s32 0, %v1806
  %v1808 = vrot.slane %v1799, %v1807
  %v1810 = vmul.f32 %v1802, %v1808
  %v1811 = vadd.f32 %v1796, %v1810
  %v1812 = vxor.u32 %v1811, 2147483648
  %v1813 = vmul.f32 %v1812, 1.442695
  %v1814 = vpow.pop %v1813
  %v1815 = vadd.f32 %v1814, 1.0
  %v1816 = vrcp.pop %v1815
  %v1817 = vmul.f32 1.0, %v1816
  %v1818 = vtanh.pop %v1811
  %v1819 = vmul.f32 %v1817, %v1454
  %1821 = vrot.lane.b32.xlu0 %v1818, 126
  %v1822 = vpop.permute.xlu0 %1821
  %v1824 = vmul.f32 %v1817, %v1822
  %1826 = vrot.lane.b32.xlu0 %v1824, 1
  %v1827 = vpop.permute.xlu0 %1826
  %v1829 = vadd.f32 %v1819, %v1827
  %v1830 = vtanh.pop %v1829
  %1832 = vrot.lane.b32.xlu0 %v1830, 2
  %v1833 = vpop.permute.xlu0 %1832
  %v1835 = vmul.f32 %v1817, %v1833
  %1837 = vrot.lane.b32.xlu0 %v1835, 125
  %v1838 = vpop.permute.xlu0 %1837
  %s1840 = scalar_lea.vmem %s7, 24
  %1841 = vst.msk [vmem:[%s1840] sm:$0xff] %vm715, %v1838
  %s1842 = scalar_lea.vmem [#allocation2], 128
  %v1843 = vld [vmem:[%s1842] sm:$0xff]
  %v1844 = vld [vmem:[%s1842 + $0x8] sm:$0xff]
  %v1845 = vld [vmem:[%s1842 + $0x10] sm:$0xff]
  %v1846 = vld [vmem:[%s1842 + $0x18] sm:$0xff]
  %v1847 = vld [vmem:[%s2] sm:$0xff]
  %v1848 = vld [vmem:[%s2 + $0x8] sm:$0xff]
  %v1849 = vld [vmem:[%s2 + $0x10] sm:$0xff]
  %v1850 = vld [vmem:[%s2 + $0x18] sm:$0xff]
  %v1851 = vld [vmem:[%s2 + $0x20] sm:$0xff]
  %v1852 = vld [vmem:[%s2 + $0x28] sm:$0xff]
  %v1853 = vld [vmem:[%s2 + $0x30] sm:$0xff]
  %v1854 = vld [vmem:[%s2 + $0x38] sm:$0xff]
  %v1855 = vld [vmem:[%s2 + $0x40] sm:$0xff]
  %v1856 = vld [vmem:[%s2 + $0x48] sm:$0xff]
  %v1857 = vld [vmem:[%s2 + $0x50] sm:$0xff]
  %v1858 = vld [vmem:[%s2 + $0x58] sm:$0xff]
  %v1859 = vld [vmem:[%s2 + $0x60] sm:$0xff]
  %v1860 = vld [vmem:[%s2 + $0x68] sm:$0xff]
  %v1861 = vld [vmem:[%s2 + $0x70] sm:$0xff]
  %v1862 = vld [vmem:[%s2 + $0x78] sm:$0xff]
  %v1863 = vld [vmem:[%s2 + $0x80] sm:$0xff]
  %v1864 = vld [vmem:[%s2 + $0x88] sm:$0xff]
  %v1865 = vld [vmem:[%s2 + $0x90] sm:$0xff]
  %v1866 = vld [vmem:[%s2 + $0x98] sm:$0xff]
  %v1867 = vld [vmem:[%s2 + $0xa0] sm:$0xff]
  %v1868 = vld [vmem:[%s2 + $0xa8] sm:$0xff]
  %v1869 = vld [vmem:[%s2 + $0xb0] sm:$0xff]
  %v1870 = vld [vmem:[%s2 + $0xb8] sm:$0xff]
  %v1871 = vld [vmem:[%s2 + $0xc0] sm:$0xff]
  %v1872 = vld [vmem:[%s2 + $0xc8] sm:$0xff]
  %v1873 = vld [vmem:[%s2 + $0xd0] sm:$0xff]
  %v1874 = vld [vmem:[%s2 + $0xd8] sm:$0xff]
  %v1875 = vld [vmem:[%s2 + $0xe0] sm:$0xff]
  %v1876 = vld [vmem:[%s2 + $0xe8] sm:$0xff]
  %v1877 = vld [vmem:[%s2 + $0xf0] sm:$0xff]
  %v1878 = vld [vmem:[%s2 + $0xf8] sm:$0xff]
  %v1879 = vld [vmem:[%s2 + $0x100] sm:$0xff]
  %v1880 = vld [vmem:[%s2 + $0x108] sm:$0xff]
  %v1881 = vld [vmem:[%s2 + $0x110] sm:$0xff]
  %v1882 = vld [vmem:[%s2 + $0x118] sm:$0xff]
  %v1883 = vld [vmem:[%s2 + $0x120] sm:$0xff]
  %v1884 = vld [vmem:[%s2 + $0x128] sm:$0xff]
  %v1885 = vld [vmem:[%s2 + $0x130] sm:$0xff]
  %v1886 = vld [vmem:[%s2 + $0x138] sm:$0xff]
  %v1887 = vld [vmem:[%s2 + $0x140] sm:$0xff]
  %v1888 = vld [vmem:[%s2 + $0x148] sm:$0xff]
  %v1889 = vld [vmem:[%s2 + $0x150] sm:$0xff]
  %v1890 = vld [vmem:[%s2 + $0x158] sm:$0xff]
  %v1891 = vld [vmem:[%s2 + $0x160] sm:$0xff]
  %v1892 = vld [vmem:[%s2 + $0x168] sm:$0xff]
  %v1893 = vld [vmem:[%s2 + $0x170] sm:$0xff]
  %v1894 = vld [vmem:[%s2 + $0x178] sm:$0xff]
  %v1895 = vld [vmem:[%s2 + $0x180] sm:$0xff]
  %v1896 = vld [vmem:[%s2 + $0x188] sm:$0xff]
  %v1897 = vld [vmem:[%s2 + $0x190] sm:$0xff]
  %v1898 = vld [vmem:[%s2 + $0x198] sm:$0xff]
  %v1899 = vld [vmem:[%s2 + $0x1a0] sm:$0xff]
  %v1900 = vld [vmem:[%s2 + $0x1a8] sm:$0xff]
  %v1901 = vld [vmem:[%s2 + $0x1b0] sm:$0xff]
  %v1902 = vld [vmem:[%s2 + $0x1b8] sm:$0xff]
  %v1903 = vld [vmem:[%s2 + $0x1c0] sm:$0xff]
  %v1904 = vld [vmem:[%s2 + $0x1c8] sm:$0xff]
  %v1905 = vld [vmem:[%s2 + $0x1d0] sm:$0xff]
  %v1906 = vld [vmem:[%s2 + $0x1d8] sm:$0xff]
  %v1907 = vld [vmem:[%s2 + $0x1e0] sm:$0xff]
  %v1908 = vld [vmem:[%s2 + $0x1e8] sm:$0xff]
  %v1909 = vld [vmem:[%s2 + $0x1f0] sm:$0xff]
  %v1910 = vld [vmem:[%s2 + $0x1f8] sm:$0xff]
  %1911 = vmatprep.subr.mxu0 %v1848
  %1912 = vmatpush1.msra.mxu0 %v1847
  %1913 = vmatprep.subr.mxu0 %v1852
  %1914 = vmatpush1.msra.mxu0 %v1851
  %1915 = vmatprep.subr.mxu0 %v1856
  %1916 = vmatpush1.msra.mxu0 %v1855
  %1917 = vmatprep.subr.mxu0 %v1860
  %1918 = vmatpush1.msra.mxu0 %v1859
  %1919 = vmatprep.subr.mxu0 %v1864
  %1920 = vmatpush1.msra.mxu0 %v1863
  %1921 = vmatprep.subr.mxu0 %v1868
  %1922 = vmatpush1.msra.mxu0 %v1867
  %1923 = vmatprep.subr.mxu0 %v1872
  %1924 = vmatpush1.msra.mxu0 %v1871
  %1925 = vmatprep.subr.mxu0 %v1876
  %1926 = vmatpush1.msra.mxu0 %v1875
  %1927 = vmatprep.subr.mxu0 %v1880
  %1928 = vmatpush1.msra.mxu0 %v1879
  %1929 = vmatprep.subr.mxu0 %v1884
  %1930 = vmatpush1.msra.mxu0 %v1883
  %1931 = vmatprep.subr.mxu0 %v1888
  %1932 = vmatpush1.msra.mxu0 %v1887
  %1933 = vmatprep.subr.mxu0 %v1892
  %1934 = vmatpush1.msra.mxu0 %v1891
  %1935 = vmatprep.subr.mxu0 %v1896
  %1936 = vmatpush1.msra.mxu0 %v1895
  %1937 = vmatprep.subr.mxu0 %v1900
  %1938 = vmatpush1.msra.mxu0 %v1899
  %1939 = vmatprep.subr.mxu0 %v1904
  %1940 = vmatpush1.msra.mxu0 %v1903
  %1941 = vmatprep.subr.mxu0 %v1908
  %1942 = vmatpush1.msra.mxu0 %v1907
  %1943 = vmatprep.subr.mxu0 0.0
  %1944 = vmatpush1.msra.mxu0 0.0
  %1945 = vmatprep.subr.mxu0 0.0
  %1946 = vmatpush1.msra.mxu0 0.0
  %1947 = vmatprep.subr.mxu0 0.0
  %1948 = vmatpush1.msra.mxu0 0.0
  %1949 = vmatprep.subr.mxu0 0.0
  %1950 = vmatpush1.msra.mxu0 0.0
  %1951 = vmatprep.subr.mxu0 0.0
  %1952 = vmatpush1.msra.mxu0 0.0
  %1953 = vmatprep.subr.mxu0 0.0
  %1954 = vmatpush1.msra.mxu0 0.0
  %1955 = vmatprep.subr.mxu0 0.0
  %1956 = vmatpush1.msra.mxu0 0.0
  %1957 = vmatprep.subr.mxu0 0.0
  %1958 = vmatpush1.msra.mxu0 0.0
  %1959 = vmatprep.subr.mxu0 0.0
  %1960 = vmatpush1.msra.mxu0 0.0
  %1961 = vmatprep.subr.mxu0 0.0
  %1962 = vmatpush1.msra.mxu0 0.0
  %1963 = vmatprep.subr.mxu0 0.0
  %1964 = vmatpush1.msra.mxu0 0.0
  %1965 = vmatprep.subr.mxu0 0.0
  %1966 = vmatpush1.msra.mxu0 0.0
  %1967 = vmatprep.subr.mxu0 0.0
  %1968 = vmatpush1.msra.mxu0 0.0
  %1969 = vmatprep.subr.mxu0 0.0
  %1970 = vmatpush1.msra.mxu0 0.0
  %1971 = vmatprep.subr.mxu0 0.0
  %1972 = vmatpush1.msra.mxu0 0.0
  %1973 = vmatprep.subr.mxu0 0.0
  %1974 = vmatpush1.msra.mxu0 0.0
  %1975 = vmatprep.mubr.f32.mxu0 0.0
  %1976 = vmatmul.mubr.f32.gmra.mrb[0].mxu0 %v1705
  %v1977 = vpop.f32.mrb[0].mxu0
  %v1978 = vadd.f32 0.0, %v1977
  %v1979 = vpop.f32.mrb[0].mxu0
  %v1980 = vadd.f32 0.0, %v1979
  %1981 = vdwg.mxu0
  %1982 = vmatprep.subr.mxu0 %v1850
  %1983 = vmatpush1.msra.mxu0 %v1849
  %1984 = vmatprep.subr.mxu0 %v1854
  %1985 = vmatpush1.msra.mxu0 %v1853
  %1986 = vmatprep.subr.mxu0 %v1858
  %1987 = vmatpush1.msra.mxu0 %v1857
  %1988 = vmatprep.subr.mxu0 %v1862
  %1989 = vmatpush1.msra.mxu0 %v1861
  %1990 = vmatprep.subr.mxu0 %v1866
  %1991 = vmatpush1.msra.mxu0 %v1865
  %1992 = vmatprep.subr.mxu0 %v1870
  %1993 = vmatpush1.msra.mxu0 %v1869
  %1994 = vmatprep.subr.mxu0 %v1874
  %1995 = vmatpush1.msra.mxu0 %v1873
  %1996 = vmatprep.subr.mxu0 %v1878
  %1997 = vmatpush1.msra.mxu0 %v1877
  %1998 = vmatprep.subr.mxu0 %v1882
  %1999 = vmatpush1.msra.mxu0 %v1881
  %2000 = vmatprep.subr.mxu0 %v1886
  %2001 = vmatpush1.msra.mxu0 %v1885
  %2002 = vmatprep.subr.mxu0 %v1890
  %2003 = vmatpush1.msra.mxu0 %v1889
  %2004 = vmatprep.subr.mxu0 %v1894
  %2005 = vmatpush1.msra.mxu0 %v1893
  %2006 = vmatprep.subr.mxu0 %v1898
  %2007 = vmatpush1.msra.mxu0 %v1897
  %2008 = vmatprep.subr.mxu0 %v1902
  %2009 = vmatpush1.msra.mxu0 %v1901
  %2010 = vmatprep.subr.mxu0 %v1906
  %2011 = vmatpush1.msra.mxu0 %v1905
  %2012 = vmatprep.subr.mxu0 %v1910
  %2013 = vmatpush1.msra.mxu0 %v1909
  %2014 = vmatprep.subr.mxu0 0.0
  %2015 = vmatpush1.msra.mxu0 0.0
  %2016 = vmatprep.subr.mxu0 0.0
  %2017 = vmatpush1.msra.mxu0 0.0
  %2018 = vmatprep.subr.mxu0 0.0
  %2019 = vmatpush1.msra.mxu0 0.0
  %2020 = vmatprep.subr.mxu0 0.0
  %2021 = vmatpush1.msra.mxu0 0.0
  %2022 = vmatprep.subr.mxu0 0.0
  %2023 = vmatpush1.msra.mxu0 0.0
  %2024 = vmatprep.subr.mxu0 0.0
  %2025 = vmatpush1.msra.mxu0 0.0
  %2026 = vmatprep.subr.mxu0 0.0
  %2027 = vmatpush1.msra.mxu0 0.0
  %2028 = vmatprep.subr.mxu0 0.0
  %2029 = vmatpush1.msra.mxu0 0.0
  %2030 = vmatprep.subr.mxu0 0.0
  %2031 = vmatpush1.msra.mxu0 0.0
  %2032 = vmatprep.subr.mxu0 0.0
  %2033 = vmatpush1.msra.mxu0 0.0
  %2034 = vmatprep.subr.mxu0 0.0
  %2035 = vmatpush1.msra.mxu0 0.0
  %2036 = vmatprep.subr.mxu0 0.0
  %2037 = vmatpush1.msra.mxu0 0.0
  %2038 = vmatprep.subr.mxu0 0.0
  %2039 = vmatpush1.msra.mxu0 0.0
  %2040 = vmatprep.subr.mxu0 0.0
  %2041 = vmatpush1.msra.mxu0 0.0
  %2042 = vmatprep.subr.mxu0 0.0
  %2043 = vmatpush1.msra.mxu0 0.0
  %2044 = vmatprep.subr.mxu0 0.0
  %2045 = vmatpush1.msra.mxu0 0.0
  %2046 = vmatprep.mubr.f32.mxu0 0.0
  %2047 = vmatmul.mubr.f32.gmra.mrb[0].mxu0 %v1705
  %v2048 = vpop.f32.mrb[0].mxu0
  %v2049 = vadd.f32 0.0, %v2048
  %v2050 = vpop.f32.mrb[0].mxu0
  %v2051 = vadd.f32 0.0, %v2050
  %2052 = vdwg.mxu0
  %v2053 = vadd.f32 %v1843, %v1978
  %v2054 = vadd.f32 %v1844, %v1980
  %v2055 = vadd.f32 %v1845, %v2049
  %v2056 = vadd.f32 %v1846, %v2051
  %v2057 = vxor.u32 %v2053, 2147483648
  %v2058 = vmul.f32 %v2057, 1.442695
  %v2059 = vpow.pop %v2058
  %v2060 = vadd.f32 %v2059, 1.0
  %v2061 = vrcp.pop %v2060
  %v2062 = vmul.f32 1.0, %v2061
  %v2063 = vxor.u32 %v2054, 2147483648
  %v2064 = vmul.f32 %v2063, 1.442695
  %v2065 = vpow.pop %v2064
  %v2066 = vadd.f32 %v2065, 1.0
  %v2067 = vrcp.pop %v2066
  %v2068 = vmul.f32 1.0, %v2067
  %v2069 = vtanh.pop %v2055
  %v2070 = vxor.u32 %v2056, 2147483648
  %v2071 = vmul.f32 %v2070, 1.442695
  %v2072 = vpow.pop %v2071
  %v2073 = vadd.f32 %v2072, 1.0
  %v2074 = vrcp.pop %v2073
  %v2075 = vmul.f32 1.0, %v2074
  %v2076 = vmul.f32 %v2068, %v1703
  %v2077 = vmul.f32 %v2062, %v2069
  %v2078 = vadd.f32 %v2076, %v2077
  %v2079 = vtanh.pop %v2078
  %v2080 = vmul.f32 %v2075, %v2079
  %v2081 = vld [vmem:[%s4] sm:$0xff]
  %v2082 = vld [vmem:[%s4 + $0x8] sm:$0xff]
  %v2083 = vld [vmem:[%s4 + $0x10] sm:$0xff]
  %v2084 = vld [vmem:[%s4 + $0x18] sm:$0xff]
  %v2085 = vld [vmem:[%s4 + $0x20] sm:$0xff]
  %v2086 = vld [vmem:[%s4 + $0x28] sm:$0xff]
  %v2087 = vld [vmem:[%s4 + $0x30] sm:$0xff]
  %v2088 = vld [vmem:[%s4 + $0x38] sm:$0xff]
  %v2089 = vld [vmem:[%s4 + $0x40] sm:$0xff]
  %v2090 = vld [vmem:[%s4 + $0x48] sm:$0xff]
  %v2091 = vld [vmem:[%s4 + $0x50] sm:$0xff]
  %v2092 = vld [vmem:[%s4 + $0x58] sm:$0xff]
  %v2093 = vld [vmem:[%s4 + $0x60] sm:$0xff]
  %v2094 = vld [vmem:[%s4 + $0x68] sm:$0xff]
  %v2095 = vld [vmem:[%s4 + $0x70] sm:$0xff]
  %v2096 = vld [vmem:[%s4 + $0x78] sm:$0xff]
  %v2097 = vld [vmem:[%s6] sm:$0x1]
  %v2099 = vlaneseq
  %v2100 = vshrl.u32 %v2099, 7
  %v2101 = vsub.s32 0, %v2100
  %v2102 = vrot.slane %v2097, %v2101
  %2104 = vmatprep.subr.mxu0 0.0
  %2105 = vmatpush1.msra.mxu0 %v2081
  %2106 = vmatprep.subr.mxu0 0.0
  %2107 = vmatpush1.msra.mxu0 %v2082
  %2108 = vmatprep.subr.mxu0 0.0
  %2109 = vmatpush1.msra.mxu0 %v2083
  %2110 = vmatprep.subr.mxu0 0.0
  %2111 = vmatpush1.msra.mxu0 %v2084
  %2112 = vmatprep.subr.mxu0 0.0
  %2113 = vmatpush1.msra.mxu0 %v2085
  %2114 = vmatprep.subr.mxu0 0.0
  %2115 = vmatpush1.msra.mxu0 %v2086
  %2116 = vmatprep.subr.mxu0 0.0
  %2117 = vmatpush1.msra.mxu0 %v2087
  %2118 = vmatprep.subr.mxu0 0.0
  %2119 = vmatpush1.msra.mxu0 %v2088
  %2120 = vmatprep.subr.mxu0 0.0
  %2121 = vmatpush1.msra.mxu0 %v2089
  %2122 = vmatprep.subr.mxu0 0.0
  %2123 = vmatpush1.msra.mxu0 %v2090
  %2124 = vmatprep.subr.mxu0 0.0
  %2125 = vmatpush1.msra.mxu0 %v2091
  %2126 = vmatprep.subr.mxu0 0.0
  %2127 = vmatpush1.msra.mxu0 %v2092
  %2128 = vmatprep.subr.mxu0 0.0
  %2129 = vmatpush1.msra.mxu0 %v2093
  %2130 = vmatprep.subr.mxu0 0.0
  %2131 = vmatpush1.msra.mxu0 %v2094
  %2132 = vmatprep.subr.mxu0 0.0
  %2133 = vmatpush1.msra.mxu0 %v2095
  %2134 = vmatprep.subr.mxu0 0.0
  %2135 = vmatpush1.msra.mxu0 %v2096
  %2136 = vmatprep.subr.mxu0 0.0
  %2137 = vmatpush1.msra.mxu0 0.0
  %2138 = vmatprep.subr.mxu0 0.0
  %2139 = vmatpush1.msra.mxu0 0.0
  %2140 = vmatprep.subr.mxu0 0.0
  %2141 = vmatpush1.msra.mxu0 0.0
  %2142 = vmatprep.subr.mxu0 0.0
  %2143 = vmatpush1.msra.mxu0 0.0
  %2144 = vmatprep.subr.mxu0 0.0
  %2145 = vmatpush1.msra.mxu0 0.0
  %2146 = vmatprep.subr.mxu0 0.0
  %2147 = vmatpush1.msra.mxu0 0.0
  %2148 = vmatprep.subr.mxu0 0.0
  %2149 = vmatpush1.msra.mxu0 0.0
  %2150 = vmatprep.subr.mxu0 0.0
  %2151 = vmatpush1.msra.mxu0 0.0
  %2152 = vmatprep.subr.mxu0 0.0
  %2153 = vmatpush1.msra.mxu0 0.0
  %2154 = vmatprep.subr.mxu0 0.0
  %2155 = vmatpush1.msra.mxu0 0.0
  %2156 = vmatprep.subr.mxu0 0.0
  %2157 = vmatpush1.msra.mxu0 0.0
  %2158 = vmatprep.subr.mxu0 0.0
  %2159 = vmatpush1.msra.mxu0 0.0
  %2160 = vmatprep.subr.mxu0 0.0
  %2161 = vmatpush1.msra.mxu0 0.0
  %2162 = vmatprep.subr.mxu0 0.0
  %2163 = vmatpush1.msra.mxu0 0.0
  %2164 = vmatprep.subr.mxu0 0.0
  %2165 = vmatpush1.msra.mxu0 0.0
  %2166 = vmatprep.subr.mxu0 0.0
  %2167 = vmatpush1.msra.mxu0 0.0
  %2168 = vmatprep.mubr.f32.mxu0 0.0
  %2169 = vmatmul.mubr.f32.gmra.mrb[0].mxu0 %v2080
  %v2170 = vpop.f32.mrb[0].mxu0
  %v2171 = vadd.f32 %v2102, %v2170
  %v2172 = vpop.f32.mrb[0].mxu0
  %2173 = vdwg.mxu0
  %v2174 = vld [vmem:[%s5] sm:$0x1]
  %2175 = vset.pattern.permute.xlu0 3
  %2176 = vperm.xlu0 %2175, %v1835
  %v2177 = vpop.permute.xlu0 %2176
  %v2180 = vlaneseq
  %v2181 = vshrl.u32 %v2180, 7
  %v2182 = vsub.s32 0, %v2181
  %v2183 = vrot.slane %v2174, %v2182
  %v2185 = vmul.f32 %v2177, %v2183
  %v2186 = vadd.f32 %v2171, %v2185
  %v2187 = vxor.u32 %v2186, 2147483648
  %v2188 = vmul.f32 %v2187, 1.442695
  %v2189 = vpow.pop %v2188
  %v2190 = vadd.f32 %v2189, 1.0
  %v2191 = vrcp.pop %v2190
  %v2192 = vmul.f32 1.0, %v2191
  %v2193 = vtanh.pop %v2186
  %v2194 = vmul.f32 %v2192, %v1829
  %2196 = vrot.lane.b32.xlu0 %v2193, 126
  %v2197 = vpop.permute.xlu0 %2196
  %v2199 = vmul.f32 %v2192, %v2197
  %2201 = vrot.lane.b32.xlu0 %v2199, 1
  %v2202 = vpop.permute.xlu0 %2201
  %v2204 = vadd.f32 %v2194, %v2202
  %v2205 = vtanh.pop %v2204
  %2207 = vrot.lane.b32.xlu0 %v2205, 2
  %v2208 = vpop.permute.xlu0 %2207
  %v2210 = vmul.f32 %v2192, %v2208
  %2212 = vrot.lane.b32.xlu0 %v2210, 125
  %v2213 = vpop.permute.xlu0 %2212
  %s2215 = scalar_lea.vmem %s7, 32
  %2216 = vst.msk [vmem:[%s2215] sm:$0xff] %vm715, %v2213
  %s2217 = scalar_lea.vmem [#allocation2], 160
  %v2218 = vld [vmem:[%s2217] sm:$0xff]
  %v2219 = vld [vmem:[%s2217 + $0x8] sm:$0xff]
  %v2220 = vld [vmem:[%s2217 + $0x10] sm:$0xff]
  %v2221 = vld [vmem:[%s2217 + $0x18] sm:$0xff]
  %v2222 = vld [vmem:[%s2] sm:$0xff]
  %v2223 = vld [vmem:[%s2 + $0x8] sm:$0xff]
  %v2224 = vld [vmem:[%s2 + $0x10] sm:$0xff]
  %v2225 = vld [vmem:[%s2 + $0x18] sm:$0xff]
  %v2226 = vld [vmem:[%s2 + $0x20] sm:$0xff]
  %v2227 = vld [vmem:[%s2 + $0x28] sm:$0xff]
  %v2228 = vld [vmem:[%s2 + $0x30] sm:$0xff]
  %v2229 = vld [vmem:[%s2 + $0x38] sm:$0xff]
  %v2230 = vld [vmem:[%s2 + $0x40] sm:$0xff]
  %v2231 = vld [vmem:[%s2 + $0x48] sm:$0xff]
  %v2232 = vld [vmem:[%s2 + $0x50] sm:$0xff]
  %v2233 = vld [vmem:[%s2 + $0x58] sm:$0xff]
  %v2234 = vld [vmem:[%s2 + $0x60] sm:$0xff]
  %v2235 = vld [vmem:[%s2 + $0x68] sm:$0xff]
  %v2236 = vld [vmem:[%s2 + $0x70] sm:$0xff]
  %v2237 = vld [vmem:[%s2 + $0x78] sm:$0xff]
  %v2238 = vld [vmem:[%s2 + $0x80] sm:$0xff]
  %v2239 = vld [vmem:[%s2 + $0x88] sm:$0xff]
  %v2240 = vld [vmem:[%s2 + $0x90] sm:$0xff]
  %v2241 = vld [vmem:[%s2 + $0x98] sm:$0xff]
  %v2242 = vld [vmem:[%s2 + $0xa0] sm:$0xff]
  %v2243 = vld [vmem:[%s2 + $0xa8] sm:$0xff]
  %v2244 = vld [vmem:[%s2 + $0xb0] sm:$0xff]
  %v2245 = vld [vmem:[%s2 + $0xb8] sm:$0xff]
  %v2246 = vld [vmem:[%s2 + $0xc0] sm:$0xff]
  %v2247 = vld [vmem:[%s2 + $0xc8] sm:$0xff]
  %v2248 = vld [vmem:[%s2 + $0xd0] sm:$0xff]
  %v2249 = vld [vmem:[%s2 + $0xd8] sm:$0xff]
  %v2250 = vld [vmem:[%s2 + $0xe0] sm:$0xff]
  %v2251 = vld [vmem:[%s2 + $0xe8] sm:$0xff]
  %v2252 = vld [vmem:[%s2 + $0xf0] sm:$0xff]
  %v2253 = vld [vmem:[%s2 + $0xf8] sm:$0xff]
  %v2254 = vld [vmem:[%s2 + $0x100] sm:$0xff]
  %v2255 = vld [vmem:[%s2 + $0x108] sm:$0xff]
  %v2256 = vld [vmem:[%s2 + $0x110] sm:$0xff]
  %v2257 = vld [vmem:[%s2 + $0x118] sm:$0xff]
  %v2258 = vld [vmem:[%s2 + $0x120] sm:$0xff]
  %v2259 = vld [vmem:[%s2 + $0x128] sm:$0xff]
  %v2260 = vld [vmem:[%s2 + $0x130] sm:$0xff]
  %v2261 = vld [vmem:[%s2 + $0x138] sm:$0xff]
  %v2262 = vld [vmem:[%s2 + $0x140] sm:$0xff]
  %v2263 = vld [vmem:[%s2 + $0x148] sm:$0xff]
  %v2264 = vld [vmem:[%s2 + $0x150] sm:$0xff]
  %v2265 = vld [vmem:[%s2 + $0x158] sm:$0xff]
  %v2266 = vld [vmem:[%s2 + $0x160] sm:$0xff]
  %v2267 = vld [vmem:[%s2 + $0x168] sm:$0xff]
  %v2268 = vld [vmem:[%s2 + $0x170] sm:$0xff]
  %v2269 = vld [vmem:[%s2 + $0x178] sm:$0xff]
  %v2270 = vld [vmem:[%s2 + $0x180] sm:$0xff]
  %v2271 = vld [vmem:[%s2 + $0x188] sm:$0xff]
  %v2272 = vld [vmem:[%s2 + $0x190] sm:$0xff]
  %v2273 = vld [vmem:[%s2 + $0x198] sm:$0xff]
  %v2274 = vld [vmem:[%s2 + $0x1a0] sm:$0xff]
  %v2275 = vld [vmem:[%s2 + $0x1a8] sm:$0xff]
  %v2276 = vld [vmem:[%s2 + $0x1b0] sm:$0xff]
  %v2277 = vld [vmem:[%s2 + $0x1b8] sm:$0xff]
  %v2278 = vld [vmem:[%s2 + $0x1c0] sm:$0xff]
  %v2279 = vld [vmem:[%s2 + $0x1c8] sm:$0xff]
  %v2280 = vld [vmem:[%s2 + $0x1d0] sm:$0xff]
  %v2281 = vld [vmem:[%s2 + $0x1d8] sm:$0xff]
  %v2282 = vld [vmem:[%s2 + $0x1e0] sm:$0xff]
  %v2283 = vld [vmem:[%s2 + $0x1e8] sm:$0xff]
  %v2284 = vld [vmem:[%s2 + $0x1f0] sm:$0xff]
  %v2285 = vld [vmem:[%s2 + $0x1f8] sm:$0xff]
  %2286 = vmatprep.subr.mxu0 %v2223
  %2287 = vmatpush1.msra.mxu0 %v2222
  %2288 = vmatprep.subr.mxu0 %v2227
  %2289 = vmatpush1.msra.mxu0 %v2226
  %2290 = vmatprep.subr.mxu0 %v2231
  %2291 = vmatpush1.msra.mxu0 %v2230
  %2292 = vmatprep.subr.mxu0 %v2235
  %2293 = vmatpush1.msra.mxu0 %v2234
  %2294 = vmatprep.subr.mxu0 %v2239
  %2295 = vmatpush1.msra.mxu0 %v2238
  %2296 = vmatprep.subr.mxu0 %v2243
  %2297 = vmatpush1.msra.mxu0 %v2242
  %2298 = vmatprep.subr.mxu0 %v2247
  %2299 = vmatpush1.msra.mxu0 %v2246
  %2300 = vmatprep.subr.mxu0 %v2251
  %2301 = vmatpush1.msra.mxu0 %v2250
  %2302 = vmatprep.subr.mxu0 %v2255
  %2303 = vmatpush1.msra.mxu0 %v2254
  %2304 = vmatprep.subr.mxu0 %v2259
  %2305 = vmatpush1.msra.mxu0 %v2258
  %2306 = vmatprep.subr.mxu0 %v2263
  %2307 = vmatpush1.msra.mxu0 %v2262
  %2308 = vmatprep.subr.mxu0 %v2267
  %2309 = vmatpush1.msra.mxu0 %v2266
  %2310 = vmatprep.subr.mxu0 %v2271
  %2311 = vmatpush1.msra.mxu0 %v2270
  %2312 = vmatprep.subr.mxu0 %v2275
  %2313 = vmatpush1.msra.mxu0 %v2274
  %2314 = vmatprep.subr.mxu0 %v2279
  %2315 = vmatpush1.msra.mxu0 %v2278
  %2316 = vmatprep.subr.mxu0 %v2283
  %2317 = vmatpush1.msra.mxu0 %v2282
  %2318 = vmatprep.subr.mxu0 0.0
  %2319 = vmatpush1.msra.mxu0 0.0
  %2320 = vmatprep.subr.mxu0 0.0
  %2321 = vmatpush1.msra.mxu0 0.0
  %2322 = vmatprep.subr.mxu0 0.0
  %2323 = vmatpush1.msra.mxu0 0.0
  %2324 = vmatprep.subr.mxu0 0.0
  %2325 = vmatpush1.msra.mxu0 0.0
  %2326 = vmatprep.subr.mxu0 0.0
  %2327 = vmatpush1.msra.mxu0 0.0
  %2328 = vmatprep.subr.mxu0 0.0
  %2329 = vmatpush1.msra.mxu0 0.0
  %2330 = vmatprep.subr.mxu0 0.0
  %2331 = vmatpush1.msra.mxu0 0.0
  %2332 = vmatprep.subr.mxu0 0.0
  %2333 = vmatpush1.msra.mxu0 0.0
  %2334 = vmatprep.subr.mxu0 0.0
  %2335 = vmatpush1.msra.mxu0 0.0
  %2336 = vmatprep.subr.mxu0 0.0
  %2337 = vmatpush1.msra.mxu0 0.0
  %2338 = vmatprep.subr.mxu0 0.0
  %2339 = vmatpush1.msra.mxu0 0.0
  %2340 = vmatprep.subr.mxu0 0.0
  %2341 = vmatpush1.msra.mxu0 0.0
  %2342 = vmatprep.subr.mxu0 0.0
  %2343 = vmatpush1.msra.mxu0 0.0
  %2344 = vmatprep.subr.mxu0 0.0
  %2345 = vmatpush1.msra.mxu0 0.0
  %2346 = vmatprep.subr.mxu0 0.0
  %2347 = vmatpush1.msra.mxu0 0.0
  %2348 = vmatprep.subr.mxu0 0.0
  %2349 = vmatpush1.msra.mxu0 0.0
  %2350 = vmatprep.mubr.f32.mxu0 0.0
  %2351 = vmatmul.mubr.f32.gmra.mrb[0].mxu0 %v2080
  %v2352 = vpop.f32.mrb[0].mxu0
  %v2353 = vadd.f32 0.0, %v2352
  %v2354 = vpop.f32.mrb[0].mxu0
  %v2355 = vadd.f32 0.0, %v2354
  %2356 = vdwg.mxu0
  %2357 = vmatprep.subr.mxu0 %v2225
  %2358 = vmatpush1.msra.mxu0 %v2224
  %2359 = vmatprep.subr.mxu0 %v2229
  %2360 = vmatpush1.msra.mxu0 %v2228
  %2361 = vmatprep.subr.mxu0 %v2233
  %2362 = vmatpush1.msra.mxu0 %v2232
  %2363 = vmatprep.subr.mxu0 %v2237
  %2364 = vmatpush1.msra.mxu0 %v2236
  %2365 = vmatprep.subr.mxu0 %v2241
  %2366 = vmatpush1.msra.mxu0 %v2240
  %2367 = vmatprep.subr.mxu0 %v2245
  %2368 = vmatpush1.msra.mxu0 %v2244
  %2369 = vmatprep.subr.mxu0 %v2249
  %2370 = vmatpush1.msra.mxu0 %v2248
  %2371 = vmatprep.subr.mxu0 %v2253
  %2372 = vmatpush1.msra.mxu0 %v2252
  %2373 = vmatprep.subr.mxu0 %v2257
  %2374 = vmatpush1.msra.mxu0 %v2256
  %2375 = vmatprep.subr.mxu0 %v2261
  %2376 = vmatpush1.msra.mxu0 %v2260
  %2377 = vmatprep.subr.mxu0 %v2265
  %2378 = vmatpush1.msra.mxu0 %v2264
  %2379 = vmatprep.subr.mxu0 %v2269
  %2380 = vmatpush1.msra.mxu0 %v2268
  %2381 = vmatprep.subr.mxu0 %v2273
  %2382 = vmatpush1.msra.mxu0 %v2272
  %2383 = vmatprep.subr.mxu0 %v2277
  %2384 = vmatpush1.msra.mxu0 %v2276
  %2385 = vmatprep.subr.mxu0 %v2281
  %2386 = vmatpush1.msra.mxu0 %v2280
  %2387 = vmatprep.subr.mxu0 %v2285
  %2388 = vmatpush1.msra.mxu0 %v2284
  %2389 = vmatprep.subr.mxu0 0.0
  %2390 = vmatpush1.msra.mxu0 0.0
  %2391 = vmatprep.subr.mxu0 0.0
  %2392 = vmatpush1.msra.mxu0 0.0
  %2393 = vmatprep.subr.mxu0 0.0
  %2394 = vmatpush1.msra.mxu0 0.0
  %2395 = vmatprep.subr.mxu0 0.0
  %2396 = vmatpush1.msra.mxu0 0.0
  %2397 = vmatprep.subr.mxu0 0.0
  %2398 = vmatpush1.msra.mxu0 0.0
  %2399 = vmatprep.subr.mxu0 0.0
  %2400 = vmatpush1.msra.mxu0 0.0
  %2401 = vmatprep.subr.mxu0 0.0
  %2402 = vmatpush1.msra.mxu0 0.0
  %2403 = vmatprep.subr.mxu0 0.0
  %2404 = vmatpush1.msra.mxu0 0.0
  %2405 = vmatprep.subr.mxu0 0.0
  %2406 = vmatpush1.msra.mxu0 0.0
  %2407 = vmatprep.subr.mxu0 0.0
  %2408 = vmatpush1.msra.mxu0 0.0
  %2409 = vmatprep.subr.mxu0 0.0
  %2410 = vmatpush1.msra.mxu0 0.0
  %2411 = vmatprep.subr.mxu0 0.0
  %2412 = vmatpush1.msra.mxu0 0.0
  %2413 = vmatprep.subr.mxu0 0.0
  %2414 = vmatpush1.msra.mxu0 0.0
  %2415 = vmatprep.subr.mxu0 0.0
  %2416 = vmatpush1.msra.mxu0 0.0
  %2417 = vmatprep.subr.mxu0 0.0
  %2418 = vmatpush1.msra.mxu0 0.0
  %2419 = vmatprep.subr.mxu0 0.0
  %2420 = vmatpush1.msra.mxu0 0.0
  %2421 = vmatprep.mubr.f32.mxu0 0.0
  %2422 = vmatmul.mubr.f32.gmra.mrb[0].mxu0 %v2080
  %v2423 = vpop.f32.mrb[0].mxu0
  %v2424 = vadd.f32 0.0, %v2423
  %v2425 = vpop.f32.mrb[0].mxu0
  %v2426 = vadd.f32 0.0, %v2425
  %2427 = vdwg.mxu0
  %v2428 = vadd.f32 %v2218, %v2353
  %v2429 = vadd.f32 %v2219, %v2355
  %v2430 = vadd.f32 %v2220, %v2424
  %v2431 = vadd.f32 %v2221, %v2426
  %v2432 = vxor.u32 %v2428, 2147483648
  %v2433 = vmul.f32 %v2432, 1.442695
  %v2434 = vpow.pop %v2433
  %v2435 = vadd.f32 %v2434, 1.0
  %v2436 = vrcp.pop %v2435
  %v2437 = vmul.f32 1.0, %v2436
  %v2438 = vxor.u32 %v2429, 2147483648
  %v2439 = vmul.f32 %v2438, 1.442695
  %v2440 = vpow.pop %v2439
  %v2441 = vadd.f32 %v2440, 1.0
  %v2442 = vrcp.pop %v2441
  %v2443 = vmul.f32 1.0, %v2442
  %v2444 = vtanh.pop %v2430
  %v2445 = vxor.u32 %v2431, 2147483648
  %v2446 = vmul.f32 %v2445, 1.442695
  %v2447 = vpow.pop %v2446
  %v2448 = vadd.f32 %v2447, 1.0
  %v2449 = vrcp.pop %v2448
  %v2450 = vmul.f32 1.0, %v2449
  %v2451 = vmul.f32 %v2443, %v2078
  %v2452 = vmul.f32 %v2437, %v2444
  %v2453 = vadd.f32 %v2451, %v2452
  %v2454 = vtanh.pop %v2453
  %v2455 = vmul.f32 %v2450, %v2454
  %v2456 = vld [vmem:[%s4] sm:$0xff]
  %v2457 = vld [vmem:[%s4 + $0x8] sm:$0xff]
  %v2458 = vld [vmem:[%s4 + $0x10] sm:$0xff]
  %v2459 = vld [vmem:[%s4 + $0x18] sm:$0xff]
  %v2460 = vld [vmem:[%s4 + $0x20] sm:$0xff]
  %v2461 = vld [vmem:[%s4 + $0x28] sm:$0xff]
  %v2462 = vld [vmem:[%s4 + $0x30] sm:$0xff]
  %v2463 = vld [vmem:[%s4 + $0x38] sm:$0xff]
  %v2464 = vld [vmem:[%s4 + $0x40] sm:$0xff]
  %v2465 = vld [vmem:[%s4 + $0x48] sm:$0xff]
  %v2466 = vld [vmem:[%s4 + $0x50] sm:$0xff]
  %v2467 = vld [vmem:[%s4 + $0x58] sm:$0xff]
  %v2468 = vld [vmem:[%s4 + $0x60] sm:$0xff]
  %v2469 = vld [vmem:[%s4 + $0x68] sm:$0xff]
  %v2470 = vld [vmem:[%s4 + $0x70] sm:$0xff]
  %v2471 = vld [vmem:[%s4 + $0x78] sm:$0xff]
  %v2472 = vld [vmem:[%s6] sm:$0x1]
  %v2474 = vlaneseq
  %v2475 = vshrl.u32 %v2474, 7
  %v2476 = vsub.s32 0, %v2475
  %v2477 = vrot.slane %v2472, %v2476
  %2479 = vmatprep.subr.mxu0 0.0
  %2480 = vmatpush1.msra.mxu0 %v2456
  %2481 = vmatprep.subr.mxu0 0.0
  %2482 = vmatpush1.msra.mxu0 %v2457
  %2483 = vmatprep.subr.mxu0 0.0
  %2484 = vmatpush1.msra.mxu0 %v2458
  %2485 = vmatprep.subr.mxu0 0.0
  %2486 = vmatpush1.msra.mxu0 %v2459
  %2487 = vmatprep.subr.mxu0 0.0
  %2488 = vmatpush1.msra.mxu0 %v2460
  %2489 = vmatprep.subr.mxu0 0.0
  %2490 = vmatpush1.msra.mxu0 %v2461
  %2491 = vmatprep.subr.mxu0 0.0
  %2492 = vmatpush1.msra.mxu0 %v2462
  %2493 = vmatprep.subr.mxu0 0.0
  %2494 = vmatpush1.msra.mxu0 %v2463
  %2495 = vmatprep.subr.mxu0 0.0
  %2496 = vmatpush1.msra.mxu0 %v2464
  %2497 = vmatprep.subr.mxu0 0.0
  %2498 = vmatpush1.msra.mxu0 %v2465
  %2499 = vmatprep.subr.mxu0 0.0
  %2500 = vmatpush1.msra.mxu0 %v2466
  %2501 = vmatprep.subr.mxu0 0.0
  %2502 = vmatpush1.msra.mxu0 %v2467
  %2503 = vmatprep.subr.mxu0 0.0
  %2504 = vmatpush1.msra.mxu0 %v2468
  %2505 = vmatprep.subr.mxu0 0.0
  %2506 = vmatpush1.msra.mxu0 %v2469
  %2507 = vmatprep.subr.mxu0 0.0
  %2508 = vmatpush1.msra.mxu0 %v2470
  %2509 = vmatprep.subr.mxu0 0.0
  %2510 = vmatpush1.msra.mxu0 %v2471
  %2511 = vmatprep.subr.mxu0 0.0
  %2512 = vmatpush1.msra.mxu0 0.0
  %2513 = vmatprep.subr.mxu0 0.0
  %2514 = vmatpush1.msra.mxu0 0.0
  %2515 = vmatprep.subr.mxu0 0.0
  %2516 = vmatpush1.msra.mxu0 0.0
  %2517 = vmatprep.subr.mxu0 0.0
  %2518 = vmatpush1.msra.mxu0 0.0
  %2519 = vmatprep.subr.mxu0 0.0
  %2520 = vmatpush1.msra.mxu0 0.0
  %2521 = vmatprep.subr.mxu0 0.0
  %2522 = vmatpush1.msra.mxu0 0.0
  %2523 = vmatprep.subr.mxu0 0.0
  %2524 = vmatpush1.msra.mxu0 0.0
  %2525 = vmatprep.subr.mxu0 0.0
  %2526 = vmatpush1.msra.mxu0 0.0
  %2527 = vmatprep.subr.mxu0 0.0
  %2528 = vmatpush1.msra.mxu0 0.0
  %2529 = vmatprep.subr.mxu0 0.0
  %2530 = vmatpush1.msra.mxu0 0.0
  %2531 = vmatprep.subr.mxu0 0.0
  %2532 = vmatpush1.msra.mxu0 0.0
  %2533 = vmatprep.subr.mxu0 0.0
  %2534 = vmatpush1.msra.mxu0 0.0
  %2535 = vmatprep.subr.mxu0 0.0
  %2536 = vmatpush1.msra.mxu0 0.0
  %2537 = vmatprep.subr.mxu0 0.0
  %2538 = vmatpush1.msra.mxu0 0.0
  %2539 = vmatprep.subr.mxu0 0.0
  %2540 = vmatpush1.msra.mxu0 0.0
  %2541 = vmatprep.subr.mxu0 0.0
  %2542 = vmatpush1.msra.mxu0 0.0
  %2543 = vmatprep.mubr.f32.mxu0 0.0
  %2544 = vmatmul.mubr.f32.gmra.mrb[0].mxu0 %v2455
  %v2545 = vpop.f32.mrb[0].mxu0
  %v2546 = vadd.f32 %v2477, %v2545
  %v2547 = vpop.f32.mrb[0].mxu0
  %2548 = vdwg.mxu0
  %v2549 = vld [vmem:[%s5] sm:$0x1]
  %2550 = vset.pattern.permute.xlu0 3
  %2551 = vperm.xlu0 %2550, %v2210
  %v2552 = vpop.permute.xlu0 %2551
  %v2555 = vlaneseq
  %v2556 = vshrl.u32 %v2555, 7
  %v2557 = vsub.s32 0, %v2556
  %v2558 = vrot.slane %v2549, %v2557
  %v2560 = vmul.f32 %v2552, %v2558
  %v2561 = vadd.f32 %v2546, %v2560
  %v2562 = vxor.u32 %v2561, 2147483648
  %v2563 = vmul.f32 %v2562, 1.442695
  %v2564 = vpow.pop %v2563
  %v2565 = vadd.f32 %v2564, 1.0
  %v2566 = vrcp.pop %v2565
  %v2567 = vmul.f32 1.0, %v2566
  %v2568 = vtanh.pop %v2561
  %v2569 = vmul.f32 %v2567, %v2204
  %2571 = vrot.lane.b32.xlu0 %v2568, 126
  %v2572 = vpop.permute.xlu0 %2571
  %v2574 = vmul.f32 %v2567, %v2572
  %2576 = vrot.lane.b32.xlu0 %v2574, 1
  %v2577 = vpop.permute.xlu0 %2576
  %v2579 = vadd.f32 %v2569, %v2577
  %v2580 = vtanh.pop %v2579
  %2582 = vrot.lane.b32.xlu0 %v2580, 2
  %v2583 = vpop.permute.xlu0 %2582
  %v2585 = vmul.f32 %v2567, %v2583
  %2587 = vrot.lane.b32.xlu0 %v2585, 125
  %v2588 = vpop.permute.xlu0 %2587
  %s2590 = scalar_lea.vmem %s7, 40
  %2591 = vst.msk [vmem:[%s2590] sm:$0xff] %vm715, %v2588
  %s2592 = scalar_lea.vmem [#allocation2], 192
  %v2593 = vld [vmem:[%s2592] sm:$0xff]
  %v2594 = vld [vmem:[%s2592 + $0x8] sm:$0xff]
  %v2595 = vld [vmem:[%s2592 + $0x10] sm:$0xff]
  %v2596 = vld [vmem:[%s2592 + $0x18] sm:$0xff]
  %v2597 = vld [vmem:[%s2] sm:$0xff]
  %v2598 = vld [vmem:[%s2 + $0x8] sm:$0xff]
  %v2599 = vld [vmem:[%s2 + $0x10] sm:$0xff]
  %v2600 = vld [vmem:[%s2 + $0x18] sm:$0xff]
  %v2601 = vld [vmem:[%s2 + $0x20] sm:$0xff]
  %v2602 = vld [vmem:[%s2 + $0x28] sm:$0xff]
  %v2603 = vld [vmem:[%s2 + $0x30] sm:$0xff]
  %v2604 = vld [vmem:[%s2 + $0x38] sm:$0xff]
  %v2605 = vld [vmem:[%s2 + $0x40] sm:$0xff]
  %v2606 = vld [vmem:[%s2 + $0x48] sm:$0xff]
  %v2607 = vld [vmem:[%s2 + $0x50] sm:$0xff]
  %v2608 = vld [vmem:[%s2 + $0x58] sm:$0xff]
  %v2609 = vld [vmem:[%s2 + $0x60] sm:$0xff]
  %v2610 = vld [vmem:[%s2 + $0x68] sm:$0xff]
  %v2611 = vld [vmem:[%s2 + $0x70] sm:$0xff]
  %v2612 = vld [vmem:[%s2 + $0x78] sm:$0xff]
  %v2613 = vld [vmem:[%s2 + $0x80] sm:$0xff]
  %v2614 = vld [vmem:[%s2 + $0x88] sm:$0xff]
  %v2615 = vld [vmem:[%s2 + $0x90] sm:$0xff]
  %v2616 = vld [vmem:[%s2 + $0x98] sm:$0xff]
  %v2617 = vld [vmem:[%s2 + $0xa0] sm:$0xff]
  %v2618 = vld [vmem:[%s2 + $0xa8] sm:$0xff]
  %v2619 = vld [vmem:[%s2 + $0xb0] sm:$0xff]
  %v2620 = vld [vmem:[%s2 + $0xb8] sm:$0xff]
  %v2621 = vld [vmem:[%s2 + $0xc0] sm:$0xff]
  %v2622 = vld [vmem:[%s2 + $0xc8] sm:$0xff]
  %v2623 = vld [vmem:[%s2 + $0xd0] sm:$0xff]
  %v2624 = vld [vmem:[%s2 + $0xd8] sm:$0xff]
  %v2625 = vld [vmem:[%s2 + $0xe0] sm:$0xff]
  %v2626 = vld [vmem:[%s2 + $0xe8] sm:$0xff]
  %v2627 = vld [vmem:[%s2 + $0xf0] sm:$0xff]
  %v2628 = vld [vmem:[%s2 + $0xf8] sm:$0xff]
  %v2629 = vld [vmem:[%s2 + $0x100] sm:$0xff]
  %v2630 = vld [vmem:[%s2 + $0x108] sm:$0xff]
  %v2631 = vld [vmem:[%s2 + $0x110] sm:$0xff]
  %v2632 = vld [vmem:[%s2 + $0x118] sm:$0xff]
  %v2633 = vld [vmem:[%s2 + $0x120] sm:$0xff]
  %v2634 = vld [vmem:[%s2 + $0x128] sm:$0xff]
  %v2635 = vld [vmem:[%s2 + $0x130] sm:$0xff]
  %v2636 = vld [vmem:[%s2 + $0x138] sm:$0xff]
  %v2637 = vld [vmem:[%s2 + $0x140] sm:$0xff]
  %v2638 = vld [vmem:[%s2 + $0x148] sm:$0xff]
  %v2639 = vld [vmem:[%s2 + $0x150] sm:$0xff]
  %v2640 = vld [vmem:[%s2 + $0x158] sm:$0xff]
  %v2641 = vld [vmem:[%s2 + $0x160] sm:$0xff]
  %v2642 = vld [vmem:[%s2 + $0x168] sm:$0xff]
  %v2643 = vld [vmem:[%s2 + $0x170] sm:$0xff]
  %v2644 = vld [vmem:[%s2 + $0x178] sm:$0xff]
  %v2645 = vld [vmem:[%s2 + $0x180] sm:$0xff]
  %v2646 = vld [vmem:[%s2 + $0x188] sm:$0xff]
  %v2647 = vld [vmem:[%s2 + $0x190] sm:$0xff]
  %v2648 = vld [vmem:[%s2 + $0x198] sm:$0xff]
  %v2649 = vld [vmem:[%s2 + $0x1a0] sm:$0xff]
  %v2650 = vld [vmem:[%s2 + $0x1a8] sm:$0xff]
  %v2651 = vld [vmem:[%s2 + $0x1b0] sm:$0xff]
  %v2652 = vld [vmem:[%s2 + $0x1b8] sm:$0xff]
  %v2653 = vld [vmem:[%s2 + $0x1c0] sm:$0xff]
  %v2654 = vld [vmem:[%s2 + $0x1c8] sm:$0xff]
  %v2655 = vld [vmem:[%s2 + $0x1d0] sm:$0xff]
  %v2656 = vld [vmem:[%s2 + $0x1d8] sm:$0xff]
  %v2657 = vld [vmem:[%s2 + $0x1e0] sm:$0xff]
  %v2658 = vld [vmem:[%s2 + $0x1e8] sm:$0xff]
  %v2659 = vld [vmem:[%s2 + $0x1f0] sm:$0xff]
  %v2660 = vld [vmem:[%s2 + $0x1f8] sm:$0xff]
  %2661 = vmatprep.subr.mxu0 %v2598
  %2662 = vmatpush1.msra.mxu0 %v2597
  %2663 = vmatprep.subr.mxu0 %v2602
  %2664 = vmatpush1.msra.mxu0 %v2601
  %2665 = vmatprep.subr.mxu0 %v2606
  %2666 = vmatpush1.msra.mxu0 %v2605
  %2667 = vmatprep.subr.mxu0 %v2610
  %2668 = vmatpush1.msra.mxu0 %v2609
  %2669 = vmatprep.subr.mxu0 %v2614
  %2670 = vmatpush1.msra.mxu0 %v2613
  %2671 = vmatprep.subr.mxu0 %v2618
  %2672 = vmatpush1.msra.mxu0 %v2617
  %2673 = vmatprep.subr.mxu0 %v2622
  %2674 = vmatpush1.msra.mxu0 %v2621
  %2675 = vmatprep.subr.mxu0 %v2626
  %2676 = vmatpush1.msra.mxu0 %v2625
  %2677 = vmatprep.subr.mxu0 %v2630
  %2678 = vmatpush1.msra.mxu0 %v2629
  %2679 = vmatprep.subr.mxu0 %v2634
  %2680 = vmatpush1.msra.mxu0 %v2633
  %2681 = vmatprep.subr.mxu0 %v2638
  %2682 = vmatpush1.msra.mxu0 %v2637
  %2683 = vmatprep.subr.mxu0 %v2642
  %2684 = vmatpush1.msra.mxu0 %v2641
  %2685 = vmatprep.subr.mxu0 %v2646
  %2686 = vmatpush1.msra.mxu0 %v2645
  %2687 = vmatprep.subr.mxu0 %v2650
  %2688 = vmatpush1.msra.mxu0 %v2649
  %2689 = vmatprep.subr.mxu0 %v2654
  %2690 = vmatpush1.msra.mxu0 %v2653
  %2691 = vmatprep.subr.mxu0 %v2658
  %2692 = vmatpush1.msra.mxu0 %v2657
  %2693 = vmatprep.subr.mxu0 0.0
  %2694 = vmatpush1.msra.mxu0 0.0
  %2695 = vmatprep.subr.mxu0 0.0
  %2696 = vmatpush1.msra.mxu0 0.0
  %2697 = vmatprep.subr.mxu0 0.0
  %2698 = vmatpush1.msra.mxu0 0.0
  %2699 = vmatprep.subr.mxu0 0.0
  %2700 = vmatpush1.msra.mxu0 0.0
  %2701 = vmatprep.subr.mxu0 0.0
  %2702 = vmatpush1.msra.mxu0 0.0
  %2703 = vmatprep.subr.mxu0 0.0
  %2704 = vmatpush1.msra.mxu0 0.0
  %2705 = vmatprep.subr.mxu0 0.0
  %2706 = vmatpush1.msra.mxu0 0.0
  %2707 = vmatprep.subr.mxu0 0.0
  %2708 = vmatpush1.msra.mxu0 0.0
  %2709 = vmatprep.subr.mxu0 0.0
  %2710 = vmatpush1.msra.mxu0 0.0
  %2711 = vmatprep.subr.mxu0 0.0
  %2712 = vmatpush1.msra.mxu0 0.0
  %2713 = vmatprep.subr.mxu0 0.0
  %2714 = vmatpush1.msra.mxu0 0.0
  %2715 = vmatprep.subr.mxu0 0.0
  %2716 = vmatpush1.msra.mxu0 0.0
  %2717 = vmatprep.subr.mxu0 0.0
  %2718 = vmatpush1.msra.mxu0 0.0
  %2719 = vmatprep.subr.mxu0 0.0
  %2720 = vmatpush1.msra.mxu0 0.0
  %2721 = vmatprep.subr.mxu0 0.0
  %2722 = vmatpush1.msra.mxu0 0.0
  %2723 = vmatprep.subr.mxu0 0.0
  %2724 = vmatpush1.msra.mxu0 0.0
  %2725 = vmatprep.mubr.f32.mxu0 0.0
  %2726 = vmatmul.mubr.f32.gmra.mrb[0].mxu0 %v2455
  %v2727 = vpop.f32.mrb[0].mxu0
  %v2728 = vadd.f32 0.0, %v2727
  %v2729 = vpop.f32.mrb[0].mxu0
  %v2730 = vadd.f32 0.0, %v2729
  %2731 = vdwg.mxu0
  %2732 = vmatprep.subr.mxu0 %v2600
  %2733 = vmatpush1.msra.mxu0 %v2599
  %2734 = vmatprep.subr.mxu0 %v2604
  %2735 = vmatpush1.msra.mxu0 %v2603
  %2736 = vmatprep.subr.mxu0 %v2608
  %2737 = vmatpush1.msra.mxu0 %v2607
  %2738 = vmatprep.subr.mxu0 %v2612
  %2739 = vmatpush1.msra.mxu0 %v2611
  %2740 = vmatprep.subr.mxu0 %v2616
  %2741 = vmatpush1.msra.mxu0 %v2615
  %2742 = vmatprep.subr.mxu0 %v2620
  %2743 = vmatpush1.msra.mxu0 %v2619
  %2744 = vmatprep.subr.mxu0 %v2624
  %2745 = vmatpush1.msra.mxu0 %v2623
  %2746 = vmatprep.subr.mxu0 %v2628
  %2747 = vmatpush1.msra.mxu0 %v2627
  %2748 = vmatprep.subr.mxu0 %v2632
  %2749 = vmatpush1.msra.mxu0 %v2631
  %2750 = vmatprep.subr.mxu0 %v2636
  %2751 = vmatpush1.msra.mxu0 %v2635
  %2752 = vmatprep.subr.mxu0 %v2640
  %2753 = vmatpush1.msra.mxu0 %v2639
  %2754 = vmatprep.subr.mxu0 %v2644
  %2755 = vmatpush1.msra.mxu0 %v2643
  %2756 = vmatprep.subr.mxu0 %v2648
  %2757 = vmatpush1.msra.mxu0 %v2647
  %2758 = vmatprep.subr.mxu0 %v2652
  %2759 = vmatpush1.msra.mxu0 %v2651
  %2760 = vmatprep.subr.mxu0 %v2656
  %2761 = vmatpush1.msra.mxu0 %v2655
  %2762 = vmatprep.subr.mxu0 %v2660
  %2763 = vmatpush1.msra.mxu0 %v2659
  %2764 = vmatprep.subr.mxu0 0.0
  %2765 = vmatpush1.msra.mxu0 0.0
  %2766 = vmatprep.subr.mxu0 0.0
  %2767 = vmatpush1.msra.mxu0 0.0
  %2768 = vmatprep.subr.mxu0 0.0
  %2769 = vmatpush1.msra.mxu0 0.0
  %2770 = vmatprep.subr.mxu0 0.0
  %2771 = vmatpush1.msra.mxu0 0.0
  %2772 = vmatprep.subr.mxu0 0.0
  %2773 = vmatpush1.msra.mxu0 0.0
  %2774 = vmatprep.subr.mxu0 0.0
  %2775 = vmatpush1.msra.mxu0 0.0
  %2776 = vmatprep.subr.mxu0 0.0
  %2777 = vmatpush1.msra.mxu0 0.0
  %2778 = vmatprep.subr.mxu0 0.0
  %2779 = vmatpush1.msra.mxu0 0.0
  %2780 = vmatprep.subr.mxu0 0.0
  %2781 = vmatpush1.msra.mxu0 0.0
  %2782 = vmatprep.subr.mxu0 0.0
  %2783 = vmatpush1.msra.mxu0 0.0
  %2784 = vmatprep.subr.mxu0 0.0
  %2785 = vmatpush1.msra.mxu0 0.0
  %2786 = vmatprep.subr.mxu0 0.0
  %2787 = vmatpush1.msra.mxu0 0.0
  %2788 = vmatprep.subr.mxu0 0.0
  %2789 = vmatpush1.msra.mxu0 0.0
  %2790 = vmatprep.subr.mxu0 0.0
  %2791 = vmatpush1.msra.mxu0 0.0
  %2792 = vmatprep.subr.mxu0 0.0
  %2793 = vmatpush1.msra.mxu0 0.0
  %2794 = vmatprep.subr.mxu0 0.0
  %2795 = vmatpush1.msra.mxu0 0.0
  %2796 = vmatprep.mubr.f32.mxu0 0.0
  %2797 = vmatmul.mubr.f32.gmra.mrb[0].mxu0 %v2455
  %v2798 = vpop.f32.mrb[0].mxu0
  %v2799 = vadd.f32 0.0, %v2798
  %v2800 = vpop.f32.mrb[0].mxu0
  %v2801 = vadd.f32 0.0, %v2800
  %2802 = vdwg.mxu0
  %v2803 = vadd.f32 %v2593, %v2728
  %v2804 = vadd.f32 %v2594, %v2730
  %v2805 = vadd.f32 %v2595, %v2799
  %v2806 = vadd.f32 %v2596, %v2801
  %v2807 = vxor.u32 %v2803, 2147483648
  %v2808 = vmul.f32 %v2807, 1.442695
  %v2809 = vpow.pop %v2808
  %v2810 = vadd.f32 %v2809, 1.0
  %v2811 = vrcp.pop %v2810
  %v2812 = vmul.f32 1.0, %v2811
  %v2813 = vxor.u32 %v2804, 2147483648
  %v2814 = vmul.f32 %v2813, 1.442695
  %v2815 = vpow.pop %v2814
  %v2816 = vadd.f32 %v2815, 1.0
  %v2817 = vrcp.pop %v2816
  %v2818 = vmul.f32 1.0, %v2817
  %v2819 = vtanh.pop %v2805
  %v2820 = vxor.u32 %v2806, 2147483648
  %v2821 = vmul.f32 %v2820, 1.442695
  %v2822 = vpow.pop %v2821
  %v2823 = vadd.f32 %v2822, 1.0
  %v2824 = vrcp.pop %v2823
  %v2825 = vmul.f32 1.0, %v2824
  %v2826 = vmul.f32 %v2818, %v2453
  %v2827 = vmul.f32 %v2812, %v2819
  %v2828 = vadd.f32 %v2826, %v2827
  %v2829 = vtanh.pop %v2828
  %v2830 = vmul.f32 %v2825, %v2829
  %v2831 = vld [vmem:[%s4] sm:$0xff]
  %v2832 = vld [vmem:[%s4 + $0x8] sm:$0xff]
  %v2833 = vld [vmem:[%s4 + $0x10] sm:$0xff]
  %v2834 = vld [vmem:[%s4 + $0x18] sm:$0xff]
  %v2835 = vld [vmem:[%s4 + $0x20] sm:$0xff]
  %v2836 = vld [vmem:[%s4 + $0x28] sm:$0xff]
  %v2837 = vld [vmem:[%s4 + $0x30] sm:$0xff]
  %v2838 = vld [vmem:[%s4 + $0x38] sm:$0xff]
  %v2839 = vld [vmem:[%s4 + $0x40] sm:$0xff]
  %v2840 = vld [vmem:[%s4 + $0x48] sm:$0xff]
  %v2841 = vld [vmem:[%s4 + $0x50] sm:$0xff]
  %v2842 = vld [vmem:[%s4 + $0x58] sm:$0xff]
  %v2843 = vld [vmem:[%s4 + $0x60] sm:$0xff]
  %v2844 = vld [vmem:[%s4 + $0x68] sm:$0xff]
  %v2845 = vld [vmem:[%s4 + $0x70] sm:$0xff]
  %v2846 = vld [vmem:[%s4 + $0x78] sm:$0xff]
  %v2847 = vld [vmem:[%s6] sm:$0x1]
  %v2849 = vlaneseq
  %v2850 = vshrl.u32 %v2849, 7
  %v2851 = vsub.s32 0, %v2850
  %v2852 = vrot.slane %v2847, %v2851
  %2854 = vmatprep.subr.mxu0 0.0
  %2855 = vmatpush1.msra.mxu0 %v2831
  %2856 = vmatprep.subr.mxu0 0.0
  %2857 = vmatpush1.msra.mxu0 %v2832
  %2858 = vmatprep.subr.mxu0 0.0
  %2859 = vmatpush1.msra.mxu0 %v2833
  %2860 = vmatprep.subr.mxu0 0.0
  %2861 = vmatpush1.msra.mxu0 %v2834
  %2862 = vmatprep.subr.mxu0 0.0
  %2863 = vmatpush1.msra.mxu0 %v2835
  %2864 = vmatprep.subr.mxu0 0.0
  %2865 = vmatpush1.msra.mxu0 %v2836
  %2866 = vmatprep.subr.mxu0 0.0
  %2867 = vmatpush1.msra.mxu0 %v2837
  %2868 = vmatprep.subr.mxu0 0.0
  %2869 = vmatpush1.msra.mxu0 %v2838
  %2870 = vmatprep.subr.mxu0 0.0
  %2871 = vmatpush1.msra.mxu0 %v2839
  %2872 = vmatprep.subr.mxu0 0.0
  %2873 = vmatpush1.msra.mxu0 %v2840
  %2874 = vmatprep.subr.mxu0 0.0
  %2875 = vmatpush1.msra.mxu0 %v2841
  %2876 = vmatprep.subr.mxu0 0.0
  %2877 = vmatpush1.msra.mxu0 %v2842
  %2878 = vmatprep.subr.mxu0 0.0
  %2879 = vmatpush1.msra.mxu0 %v2843
  %2880 = vmatprep.subr.mxu0 0.0
  %2881 = vmatpush1.msra.mxu0 %v2844
  %2882 = vmatprep.subr.mxu0 0.0
  %2883 = vmatpush1.msra.mxu0 %v2845
  %2884 = vmatprep.subr.mxu0 0.0
  %2885 = vmatpush1.msra.mxu0 %v2846
  %2886 = vmatprep.subr.mxu0 0.0
  %2887 = vmatpush1.msra.mxu0 0.0
  %2888 = vmatprep.subr.mxu0 0.0
  %2889 = vmatpush1.msra.mxu0 0.0
  %2890 = vmatprep.subr.mxu0 0.0
  %2891 = vmatpush1.msra.mxu0 0.0
  %2892 = vmatprep.subr.mxu0 0.0
  %2893 = vmatpush1.msra.mxu0 0.0
  %2894 = vmatprep.subr.mxu0 0.0
  %2895 = vmatpush1.msra.mxu0 0.0
  %2896 = vmatprep.subr.mxu0 0.0
  %2897 = vmatpush1.msra.mxu0 0.0
  %2898 = vmatprep.subr.mxu0 0.0
  %2899 = vmatpush1.msra.mxu0 0.0
  %2900 = vmatprep.subr.mxu0 0.0
  %2901 = vmatpush1.msra.mxu0 0.0
  %2902 = vmatprep.subr.mxu0 0.0
  %2903 = vmatpush1.msra.mxu0 0.0
  %2904 = vmatprep.subr.mxu0 0.0
  %2905 = vmatpush1.msra.mxu0 0.0
  %2906 = vmatprep.subr.mxu0 0.0
  %2907 = vmatpush1.msra.mxu0 0.0
  %2908 = vmatprep.subr.mxu0 0.0
  %2909 = vmatpush1.msra.mxu0 0.0
  %2910 = vmatprep.subr.mxu0 0.0
  %2911 = vmatpush1.msra.mxu0 0.0
  %2912 = vmatprep.subr.mxu0 0.0
  %2913 = vmatpush1.msra.mxu0 0.0
  %2914 = vmatprep.subr.mxu0 0.0
  %2915 = vmatpush1.msra.mxu0 0.0
  %2916 = vmatprep.subr.mxu0 0.0
  %2917 = vmatpush1.msra.mxu0 0.0
  %2918 = vmatprep.mubr.f32.mxu0 0.0
  %2919 = vmatmul.mubr.f32.gmra.mrb[0].mxu0 %v2830
  %v2920 = vpop.f32.mrb[0].mxu0
  %v2921 = vadd.f32 %v2852, %v2920
  %v2922 = vpop.f32.mrb[0].mxu0
  %2923 = vdwg.mxu0
  %v2924 = vld [vmem:[%s5] sm:$0x1]
  %2925 = vset.pattern.permute.xlu0 3
  %2926 = vperm.xlu0 %2925, %v2585
  %v2927 = vpop.permute.xlu0 %2926
  %v2930 = vlaneseq
  %v2931 = vshrl.u32 %v2930, 7
  %v2932 = vsub.s32 0, %v2931
  %v2933 = vrot.slane %v2924, %v2932
  %v2935 = vmul.f32 %v2927, %v2933
  %v2936 = vadd.f32 %v2921, %v2935
  %v2937 = vxor.u32 %v2936, 2147483648
  %v2938 = vmul.f32 %v2937, 1.442695
  %v2939 = vpow.pop %v2938
  %v2940 = vadd.f32 %v2939, 1.0
  %v2941 = vrcp.pop %v2940
  %v2942 = vmul.f32 1.0, %v2941
  %v2943 = vtanh.pop %v2936
  %v2944 = vmul.f32 %v2942, %v2579
  %2946 = vrot.lane.b32.xlu0 %v2943, 126
  %v2947 = vpop.permute.xlu0 %2946
  %v2949 = vmul.f32 %v2942, %v2947
  %2951 = vrot.lane.b32.xlu0 %v2949, 1
  %v2952 = vpop.permute.xlu0 %2951
  %v2954 = vadd.f32 %v2944, %v2952
  %v2955 = vtanh.pop %v2954
  %2957 = vrot.lane.b32.xlu0 %v2955, 2
  %v2958 = vpop.permute.xlu0 %2957
  %v2960 = vmul.f32 %v2942, %v2958
  %2962 = vrot.lane.b32.xlu0 %v2960, 125
  %v2963 = vpop.permute.xlu0 %2962
  %s2965 = scalar_lea.vmem %s7, 48
  %2966 = vst.msk [vmem:[%s2965] sm:$0xff] %vm715, %v2963
  %s2967 = scalar_lea.vmem [#allocation2], 224
  %v2968 = vld [vmem:[%s2967] sm:$0xff]
  %v2969 = vld [vmem:[%s2967 + $0x8] sm:$0xff]
  %v2970 = vld [vmem:[%s2967 + $0x10] sm:$0xff]
  %v2971 = vld [vmem:[%s2967 + $0x18] sm:$0xff]
  %v2972 = vld [vmem:[%s2] sm:$0xff]
  %v2973 = vld [vmem:[%s2 + $0x8] sm:$0xff]
  %v2974 = vld [vmem:[%s2 + $0x10] sm:$0xff]
  %v2975 = vld [vmem:[%s2 + $0x18] sm:$0xff]
  %v2976 = vld [vmem:[%s2 + $0x20] sm:$0xff]
  %v2977 = vld [vmem:[%s2 + $0x28] sm:$0xff]
  %v2978 = vld [vmem:[%s2 + $0x30] sm:$0xff]
  %v2979 = vld [vmem:[%s2 + $0x38] sm:$0xff]
  %v2980 = vld [vmem:[%s2 + $0x40] sm:$0xff]
  %v2981 = vld [vmem:[%s2 + $0x48] sm:$0xff]
  %v2982 = vld [vmem:[%s2 + $0x50] sm:$0xff]
  %v2983 = vld [vmem:[%s2 + $0x58] sm:$0xff]
  %v2984 = vld [vmem:[%s2 + $0x60] sm:$0xff]
  %v2985 = vld [vmem:[%s2 + $0x68] sm:$0xff]
  %v2986 = vld [vmem:[%s2 + $0x70] sm:$0xff]
  %v2987 = vld [vmem:[%s2 + $0x78] sm:$0xff]
  %v2988 = vld [vmem:[%s2 + $0x80] sm:$0xff]
  %v2989 = vld [vmem:[%s2 + $0x88] sm:$0xff]
  %v2990 = vld [vmem:[%s2 + $0x90] sm:$0xff]
  %v2991 = vld [vmem:[%s2 + $0x98] sm:$0xff]
  %v2992 = vld [vmem:[%s2 + $0xa0] sm:$0xff]
  %v2993 = vld [vmem:[%s2 + $0xa8] sm:$0xff]
  %v2994 = vld [vmem:[%s2 + $0xb0] sm:$0xff]
  %v2995 = vld [vmem:[%s2 + $0xb8] sm:$0xff]
  %v2996 = vld [vmem:[%s2 + $0xc0] sm:$0xff]
  %v2997 = vld [vmem:[%s2 + $0xc8] sm:$0xff]
  %v2998 = vld [vmem:[%s2 + $0xd0] sm:$0xff]
  %v2999 = vld [vmem:[%s2 + $0xd8] sm:$0xff]
  %v3000 = vld [vmem:[%s2 + $0xe0] sm:$0xff]
  %v3001 = vld [vmem:[%s2 + $0xe8] sm:$0xff]
  %v3002 = vld [vmem:[%s2 + $0xf0] sm:$0xff]
  %v3003 = vld [vmem:[%s2 + $0xf8] sm:$0xff]
  %v3004 = vld [vmem:[%s2 + $0x100] sm:$0xff]
  %v3005 = vld [vmem:[%s2 + $0x108] sm:$0xff]
  %v3006 = vld [vmem:[%s2 + $0x110] sm:$0xff]
  %v3007 = vld [vmem:[%s2 + $0x118] sm:$0xff]
  %v3008 = vld [vmem:[%s2 + $0x120] sm:$0xff]
  %v3009 = vld [vmem:[%s2 + $0x128] sm:$0xff]
  %v3010 = vld [vmem:[%s2 + $0x130] sm:$0xff]
  %v3011 = vld [vmem:[%s2 + $0x138] sm:$0xff]
  %v3012 = vld [vmem:[%s2 + $0x140] sm:$0xff]
  %v3013 = vld [vmem:[%s2 + $0x148] sm:$0xff]
  %v3014 = vld [vmem:[%s2 + $0x150] sm:$0xff]
  %v3015 = vld [vmem:[%s2 + $0x158] sm:$0xff]
  %v3016 = vld [vmem:[%s2 + $0x160] sm:$0xff]
  %v3017 = vld [vmem:[%s2 + $0x168] sm:$0xff]
  %v3018 = vld [vmem:[%s2 + $0x170] sm:$0xff]
  %v3019 = vld [vmem:[%s2 + $0x178] sm:$0xff]
  %v3020 = vld [vmem:[%s2 + $0x180] sm:$0xff]
  %v3021 = vld [vmem:[%s2 + $0x188] sm:$0xff]
  %v3022 = vld [vmem:[%s2 + $0x190] sm:$0xff]
  %v3023 = vld [vmem:[%s2 + $0x198] sm:$0xff]
  %v3024 = vld [vmem:[%s2 + $0x1a0] sm:$0xff]
  %v3025 = vld [vmem:[%s2 + $0x1a8] sm:$0xff]
  %v3026 = vld [vmem:[%s2 + $0x1b0] sm:$0xff]
  %v3027 = vld [vmem:[%s2 + $0x1b8] sm:$0xff]
  %v3028 = vld [vmem:[%s2 + $0x1c0] sm:$0xff]
  %v3029 = vld [vmem:[%s2 + $0x1c8] sm:$0xff]
  %v3030 = vld [vmem:[%s2 + $0x1d0] sm:$0xff]
  %v3031 = vld [vmem:[%s2 + $0x1d8] sm:$0xff]
  %v3032 = vld [vmem:[%s2 + $0x1e0] sm:$0xff]
  %v3033 = vld [vmem:[%s2 + $0x1e8] sm:$0xff]
  %v3034 = vld [vmem:[%s2 + $0x1f0] sm:$0xff]
  %v3035 = vld [vmem:[%s2 + $0x1f8] sm:$0xff]
  %3036 = vmatprep.subr.mxu0 %v2973
  %3037 = vmatpush1.msra.mxu0 %v2972
  %3038 = vmatprep.subr.mxu0 %v2977
  %3039 = vmatpush1.msra.mxu0 %v2976
  %3040 = vmatprep.subr.mxu0 %v2981
  %3041 = vmatpush1.msra.mxu0 %v2980
  %3042 = vmatprep.subr.mxu0 %v2985
  %3043 = vmatpush1.msra.mxu0 %v2984
  %3044 = vmatprep.subr.mxu0 %v2989
  %3045 = vmatpush1.msra.mxu0 %v2988
  %3046 = vmatprep.subr.mxu0 %v2993
  %3047 = vmatpush1.msra.mxu0 %v2992
  %3048 = vmatprep.subr.mxu0 %v2997
  %3049 = vmatpush1.msra.mxu0 %v2996
  %3050 = vmatprep.subr.mxu0 %v3001
  %3051 = vmatpush1.msra.mxu0 %v3000
  %3052 = vmatprep.subr.mxu0 %v3005
  %3053 = vmatpush1.msra.mxu0 %v3004
  %3054 = vmatprep.subr.mxu0 %v3009
  %3055 = vmatpush1.msra.mxu0 %v3008
  %3056 = vmatprep.subr.mxu0 %v3013
  %3057 = vmatpush1.msra.mxu0 %v3012
  %3058 = vmatprep.subr.mxu0 %v3017
  %3059 = vmatpush1.msra.mxu0 %v3016
  %3060 = vmatprep.subr.mxu0 %v3021
  %3061 = vmatpush1.msra.mxu0 %v3020
  %3062 = vmatprep.subr.mxu0 %v3025
  %3063 = vmatpush1.msra.mxu0 %v3024
  %3064 = vmatprep.subr.mxu0 %v3029
  %3065 = vmatpush1.msra.mxu0 %v3028
  %3066 = vmatprep.subr.mxu0 %v3033
  %3067 = vmatpush1.msra.mxu0 %v3032
  %3068 = vmatprep.subr.mxu0 0.0
  %3069 = vmatpush1.msra.mxu0 0.0
  %3070 = vmatprep.subr.mxu0 0.0
  %3071 = vmatpush1.msra.mxu0 0.0
  %3072 = vmatprep.subr.mxu0 0.0
  %3073 = vmatpush1.msra.mxu0 0.0
  %3074 = vmatprep.subr.mxu0 0.0
  %3075 = vmatpush1.msra.mxu0 0.0
  %3076 = vmatprep.subr.mxu0 0.0
  %3077 = vmatpush1.msra.mxu0 0.0
  %3078 = vmatprep.subr.mxu0 0.0
  %3079 = vmatpush1.msra.mxu0 0.0
  %3080 = vmatprep.subr.mxu0 0.0
  %3081 = vmatpush1.msra.mxu0 0.0
  %3082 = vmatprep.subr.mxu0 0.0
  %3083 = vmatpush1.msra.mxu0 0.0
  %3084 = vmatprep.subr.mxu0 0.0
  %3085 = vmatpush1.msra.mxu0 0.0
  %3086 = vmatprep.subr.mxu0 0.0
  %3087 = vmatpush1.msra.mxu0 0.0
  %3088 = vmatprep.subr.mxu0 0.0
  %3089 = vmatpush1.msra.mxu0 0.0
  %3090 = vmatprep.subr.mxu0 0.0
  %3091 = vmatpush1.msra.mxu0 0.0
  %3092 = vmatprep.subr.mxu0 0.0
  %3093 = vmatpush1.msra.mxu0 0.0
  %3094 = vmatprep.subr.mxu0 0.0
  %3095 = vmatpush1.msra.mxu0 0.0
  %3096 = vmatprep.subr.mxu0 0.0
  %3097 = vmatpush1.msra.mxu0 0.0
  %3098 = vmatprep.subr.mxu0 0.0
  %3099 = vmatpush1.msra.mxu0 0.0
  %3100 = vmatprep.mubr.f32.mxu0 0.0
  %3101 = vmatmul.mubr.f32.gmra.mrb[0].mxu0 %v2830
  %v3102 = vpop.f32.mrb[0].mxu0
  %v3103 = vadd.f32 0.0, %v3102
  %v3104 = vpop.f32.mrb[0].mxu0
  %v3105 = vadd.f32 0.0, %v3104
  %3106 = vdwg.mxu0
  %3107 = vmatprep.subr.mxu0 %v2975
  %3108 = vmatpush1.msra.mxu0 %v2974
  %3109 = vmatprep.subr.mxu0 %v2979
  %3110 = vmatpush1.msra.mxu0 %v2978
  %3111 = vmatprep.subr.mxu0 %v2983
  %3112 = vmatpush1.msra.mxu0 %v2982
  %3113 = vmatprep.subr.mxu0 %v2987
  %3114 = vmatpush1.msra.mxu0 %v2986
  %3115 = vmatprep.subr.mxu0 %v2991
  %3116 = vmatpush1.msra.mxu0 %v2990
  %3117 = vmatprep.subr.mxu0 %v2995
  %3118 = vmatpush1.msra.mxu0 %v2994
  %3119 = vmatprep.subr.mxu0 %v2999
  %3120 = vmatpush1.msra.mxu0 %v2998
  %3121 = vmatprep.subr.mxu0 %v3003
  %3122 = vmatpush1.msra.mxu0 %v3002
  %3123 = vmatprep.subr.mxu0 %v3007
  %3124 = vmatpush1.msra.mxu0 %v3006
  %3125 = vmatprep.subr.mxu0 %v3011
  %3126 = vmatpush1.msra.mxu0 %v3010
  %3127 = vmatprep.subr.mxu0 %v3015
  %3128 = vmatpush1.msra.mxu0 %v3014
  %3129 = vmatprep.subr.mxu0 %v3019
  %3130 = vmatpush1.msra.mxu0 %v3018
  %3131 = vmatprep.subr.mxu0 %v3023
  %3132 = vmatpush1.msra.mxu0 %v3022
  %3133 = vmatprep.subr.mxu0 %v3027
  %3134 = vmatpush1.msra.mxu0 %v3026
  %3135 = vmatprep.subr.mxu0 %v3031
  %3136 = vmatpush1.msra.mxu0 %v3030
  %3137 = vmatprep.subr.mxu0 %v3035
  %3138 = vmatpush1.msra.mxu0 %v3034
  %3139 = vmatprep.subr.mxu0 0.0
  %3140 = vmatpush1.msra.mxu0 0.0
  %3141 = vmatprep.subr.mxu0 0.0
  %3142 = vmatpush1.msra.mxu0 0.0
  %3143 = vmatprep.subr.mxu0 0.0
  %3144 = vmatpush1.msra.mxu0 0.0
  %3145 = vmatprep.subr.mxu0 0.0
  %3146 = vmatpush1.msra.mxu0 0.0
  %3147 = vmatprep.subr.mxu0 0.0
  %3148 = vmatpush1.msra.mxu0 0.0
  %3149 = vmatprep.subr.mxu0 0.0
  %3150 = vmatpush1.msra.mxu0 0.0
  %3151 = vmatprep.subr.mxu0 0.0
  %3152 = vmatpush1.msra.mxu0 0.0
  %3153 = vmatprep.subr.mxu0 0.0
  %3154 = vmatpush1.msra.mxu0 0.0
  %3155 = vmatprep.subr.mxu0 0.0
  %3156 = vmatpush1.msra.mxu0 0.0
  %3157 = vmatprep.subr.mxu0 0.0
  %3158 = vmatpush1.msra.mxu0 0.0
  %3159 = vmatprep.subr.mxu0 0.0
  %3160 = vmatpush1.msra.mxu0 0.0
  %3161 = vmatprep.subr.mxu0 0.0
  %3162 = vmatpush1.msra.mxu0 0.0
  %3163 = vmatprep.subr.mxu0 0.0
  %3164 = vmatpush1.msra.mxu0 0.0
  %3165 = vmatprep.subr.mxu0 0.0
  %3166 = vmatpush1.msra.mxu0 0.0
  %3167 = vmatprep.subr.mxu0 0.0
  %3168 = vmatpush1.msra.mxu0 0.0
  %3169 = vmatprep.subr.mxu0 0.0
  %3170 = vmatpush1.msra.mxu0 0.0
  %3171 = vmatprep.mubr.f32.mxu0 0.0
  %3172 = vmatmul.mubr.f32.gmra.mrb[0].mxu0 %v2830
  %v3173 = vpop.f32.mrb[0].mxu0
  %v3174 = vadd.f32 0.0, %v3173
  %v3175 = vpop.f32.mrb[0].mxu0
  %v3176 = vadd.f32 0.0, %v3175
  %3177 = vdwg.mxu0
  %v3178 = vadd.f32 %v2968, %v3103
  %v3179 = vadd.f32 %v2969, %v3105
  %v3180 = vadd.f32 %v2970, %v3174
  %v3181 = vadd.f32 %v2971, %v3176
  %v3182 = vxor.u32 %v3178, 2147483648
  %v3183 = vmul.f32 %v3182, 1.442695
  %v3184 = vpow.pop %v3183
  %v3185 = vadd.f32 %v3184, 1.0
  %v3186 = vrcp.pop %v3185
  %v3187 = vmul.f32 1.0, %v3186
  %v3188 = vxor.u32 %v3179, 2147483648
  %v3189 = vmul.f32 %v3188, 1.442695
  %v3190 = vpow.pop %v3189
  %v3191 = vadd.f32 %v3190, 1.0
  %v3192 = vrcp.pop %v3191
  %v3193 = vmul.f32 1.0, %v3192
  %v3194 = vtanh.pop %v3180
  %v3195 = vxor.u32 %v3181, 2147483648
  %v3196 = vmul.f32 %v3195, 1.442695
  %v3197 = vpow.pop %v3196
  %v3198 = vadd.f32 %v3197, 1.0
  %v3199 = vrcp.pop %v3198
  %v3200 = vmul.f32 1.0, %v3199
  %v3201 = vmul.f32 %v3193, %v2828
  %v3202 = vmul.f32 %v3187, %v3194
  %v3203 = vadd.f32 %v3201, %v3202
  %v3204 = vtanh.pop %v3203
  %v3205 = vmul.f32 %v3200, %v3204
  %v3206 = vld [vmem:[%s4] sm:$0xff]
  %v3207 = vld [vmem:[%s4 + $0x8] sm:$0xff]
  %v3208 = vld [vmem:[%s4 + $0x10] sm:$0xff]
  %v3209 = vld [vmem:[%s4 + $0x18] sm:$0xff]
  %v3210 = vld [vmem:[%s4 + $0x20] sm:$0xff]
  %v3211 = vld [vmem:[%s4 + $0x28] sm:$0xff]
  %v3212 = vld [vmem:[%s4 + $0x30] sm:$0xff]
  %v3213 = vld [vmem:[%s4 + $0x38] sm:$0xff]
  %v3214 = vld [vmem:[%s4 + $0x40] sm:$0xff]
  %v3215 = vld [vmem:[%s4 + $0x48] sm:$0xff]
  %v3216 = vld [vmem:[%s4 + $0x50] sm:$0xff]
  %v3217 = vld [vmem:[%s4 + $0x58] sm:$0xff]
  %v3218 = vld [vmem:[%s4 + $0x60] sm:$0xff]
  %v3219 = vld [vmem:[%s4 + $0x68] sm:$0xff]
  %v3220 = vld [vmem:[%s4 + $0x70] sm:$0xff]
  %v3221 = vld [vmem:[%s4 + $0x78] sm:$0xff]
  %v3222 = vld [vmem:[%s6] sm:$0x1]
  %v3224 = vlaneseq
  %v3225 = vshrl.u32 %v3224, 7
  %v3226 = vsub.s32 0, %v3225
  %v3227 = vrot.slane %v3222, %v3226
  %3229 = vmatprep.subr.mxu0 0.0
  %3230 = vmatpush1.msra.mxu0 %v3206
  %3231 = vmatprep.subr.mxu0 0.0
  %3232 = vmatpush1.msra.mxu0 %v3207
  %3233 = vmatprep.subr.mxu0 0.0
  %3234 = vmatpush1.msra.mxu0 %v3208
  %3235 = vmatprep.subr.mxu0 0.0
  %3236 = vmatpush1.msra.mxu0 %v3209
  %3237 = vmatprep.subr.mxu0 0.0
  %3238 = vmatpush1.msra.mxu0 %v3210
  %3239 = vmatprep.subr.mxu0 0.0
  %3240 = vmatpush1.msra.mxu0 %v3211
  %3241 = vmatprep.subr.mxu0 0.0
  %3242 = vmatpush1.msra.mxu0 %v3212
  %3243 = vmatprep.subr.mxu0 0.0
  %3244 = vmatpush1.msra.mxu0 %v3213
  %3245 = vmatprep.subr.mxu0 0.0
  %3246 = vmatpush1.msra.mxu0 %v3214
  %3247 = vmatprep.subr.mxu0 0.0
  %3248 = vmatpush1.msra.mxu0 %v3215
  %3249 = vmatprep.subr.mxu0 0.0
  %3250 = vmatpush1.msra.mxu0 %v3216
  %3251 = vmatprep.subr.mxu0 0.0
  %3252 = vmatpush1.msra.mxu0 %v3217
  %3253 = vmatprep.subr.mxu0 0.0
  %3254 = vmatpush1.msra.mxu0 %v3218
  %3255 = vmatprep.subr.mxu0 0.0
  %3256 = vmatpush1.msra.mxu0 %v3219
  %3257 = vmatprep.subr.mxu0 0.0
  %3258 = vmatpush1.msra.mxu0 %v3220
  %3259 = vmatprep.subr.mxu0 0.0
  %3260 = vmatpush1.msra.mxu0 %v3221
  %3261 = vmatprep.subr.mxu0 0.0
  %3262 = vmatpush1.msra.mxu0 0.0
  %3263 = vmatprep.subr.mxu0 0.0
  %3264 = vmatpush1.msra.mxu0 0.0
  %3265 = vmatprep.subr.mxu0 0.0
  %3266 = vmatpush1.msra.mxu0 0.0
  %3267 = vmatprep.subr.mxu0 0.0
  %3268 = vmatpush1.msra.mxu0 0.0
  %3269 = vmatprep.subr.mxu0 0.0
  %3270 = vmatpush1.msra.mxu0 0.0
  %3271 = vmatprep.subr.mxu0 0.0
  %3272 = vmatpush1.msra.mxu0 0.0
  %3273 = vmatprep.subr.mxu0 0.0
  %3274 = vmatpush1.msra.mxu0 0.0
  %3275 = vmatprep.subr.mxu0 0.0
  %3276 = vmatpush1.msra.mxu0 0.0
  %3277 = vmatprep.subr.mxu0 0.0
  %3278 = vmatpush1.msra.mxu0 0.0
  %3279 = vmatprep.subr.mxu0 0.0
  %3280 = vmatpush1.msra.mxu0 0.0
  %3281 = vmatprep.subr.mxu0 0.0
  %3282 = vmatpush1.msra.mxu0 0.0
  %3283 = vmatprep.subr.mxu0 0.0
  %3284 = vmatpush1.msra.mxu0 0.0
  %3285 = vmatprep.subr.mxu0 0.0
  %3286 = vmatpush1.msra.mxu0 0.0
  %3287 = vmatprep.subr.mxu0 0.0
  %3288 = vmatpush1.msra.mxu0 0.0
  %3289 = vmatprep.subr.mxu0 0.0
  %3290 = vmatpush1.msra.mxu0 0.0
  %3291 = vmatprep.subr.mxu0 0.0
  %3292 = vmatpush1.msra.mxu0 0.0
  %3293 = vmatprep.mubr.f32.mxu0 0.0
  %3294 = vmatmul.mubr.f32.gmra.mrb[0].mxu0 %v3205
  %v3295 = vpop.f32.mrb[0].mxu0
  %v3296 = vadd.f32 %v3227, %v3295
  %v3297 = vpop.f32.mrb[0].mxu0
  %3298 = vdwg.mxu0
  %v3299 = vld [vmem:[%s5] sm:$0x1]
  %3300 = vset.pattern.permute.xlu0 3
  %3301 = vperm.xlu0 %3300, %v2960
  %v3302 = vpop.permute.xlu0 %3301
  %v3305 = vlaneseq
  %v3306 = vshrl.u32 %v3305, 7
  %v3307 = vsub.s32 0, %v3306
  %v3308 = vrot.slane %v3299, %v3307
  %v3310 = vmul.f32 %v3302, %v3308
  %v3311 = vadd.f32 %v3296, %v3310
  %v3312 = vxor.u32 %v3311, 2147483648
  %v3313 = vmul.f32 %v3312, 1.442695
  %v3314 = vpow.pop %v3313
  %v3315 = vadd.f32 %v3314, 1.0
  %v3316 = vrcp.pop %v3315
  %v3317 = vmul.f32 1.0, %v3316
  %v3318 = vtanh.pop %v3311
  %v3319 = vmul.f32 %v3317, %v2954
  %3321 = vrot.lane.b32.xlu0 %v3318, 126
  %v3322 = vpop.permute.xlu0 %3321
  %v3324 = vmul.f32 %v3317, %v3322
  %3326 = vrot.lane.b32.xlu0 %v3324, 1
  %v3327 = vpop.permute.xlu0 %3326
  %v3329 = vadd.f32 %v3319, %v3327
  %v3330 = vtanh.pop %v3329
  %3332 = vrot.lane.b32.xlu0 %v3330, 2
  %v3333 = vpop.permute.xlu0 %3332
  %v3335 = vmul.f32 %v3317, %v3333
  %3337 = vrot.lane.b32.xlu0 %v3335, 125
  %v3338 = vpop.permute.xlu0 %3337
  %s3340 = scalar_lea.vmem %s7, 56
  %3341 = vst.msk [vmem:[%s3340] sm:$0xff] %vm715, %v3338
  // Predicated region
  $region30: #{decoder_forward.1} parent=0 // pred_check
    _
  $region31: #{decoder_forward.1} parent=0 // pred_check_branch
    %3343 = sbr.rel (0) target = $region33
  $region32: #{decoder_forward.1} parent=0 // pred_region
    _
  $region33: #{decoder_forward.1} parent=0 // pred_fallthru
    _
  // Predicated region
  $region34: #{decoder_forward.1} parent=0 // pred_check
    _
  $region35: #{decoder_forward.1} parent=0 // pred_check_branch
    %3345 = sbr.rel (0) target = $region37
  $region36: #{decoder_forward.1} parent=0 // pred_region
    _
  $region37: #{decoder_forward.1} parent=0 // pred_fallthru
    _

</llo_original>
